<compile_context>
chip_gen: v5e
topology: v5e:2x2
jax: 0.10.0
libtpu: 0.0.40
codegen_flags: <defaults>
</compile_context>

<pallas_src>
import functools

import jax
import jax.numpy as jnp
from jax.experimental import pallas as pl
from jax.experimental.pallas import tpu as pltpu

LANE = 128  # lane width: channels are padded to multiples of 128


# ----------------------------------------------------------------------------
# Pallas kernel bodies
# ----------------------------------------------------------------------------
def _matmul_kernel(x_ref, w_ref, o_ref):
    # partial branch: x @ (scale-folded) w, no bias / relu
    x = x_ref[...].astype(jnp.bfloat16)
    o_ref[...] = jnp.dot(x, w_ref[...],
                         preferred_element_type=jnp.float32).astype(o_ref.dtype)


def _matmul_add_bias_relu_kernel(x_ref, p_ref, w_ref, b_ref, o_ref):
    # relu( x @ w + partial + bias )   (BN scale already folded into w)
    x = x_ref[...].astype(jnp.bfloat16)
    acc = jnp.dot(x, w_ref[...], preferred_element_type=jnp.float32)
    y = acc + p_ref[...] + b_ref[...]
    o_ref[...] = jnp.maximum(y, 0.0).astype(o_ref.dtype)


def _matmul2_bias_relu_kernel(x1_ref, x2_ref, w1_ref, w2_ref, b_ref, o_ref):
    # relu( cat([x1,x2]) @ cat([w1;w2]) + bias ) == relu(x1@w1 + x2@w2 + bias)
    a1 = x1_ref[...].astype(jnp.bfloat16)
    a2 = x2_ref[...].astype(jnp.bfloat16)
    acc = jnp.dot(a1, w1_ref[...], preferred_element_type=jnp.float32)
    acc = acc + jnp.dot(a2, w2_ref[...], preferred_element_type=jnp.float32)
    y = acc + b_ref[...]
    o_ref[...] = jnp.maximum(y, 0.0).astype(o_ref.dtype)


def _down3x3_kernel(xe0_ref, xo0_ref, xe1_ref, xo1_ref, xe2_ref, xo2_ref,
                    w_ref, b_ref, o_ref):
    # 3x3 stride-2 pad-1 conv, one output row per grid step.
    # xe*/xo* are the even/odd padded-column phases of padded rows 2i+kh,
    # each of shape (1, 1, wo+1, Cp).  Taps:
    #   kw=0 -> even phase cols [0:wo], kw=1 -> odd [0:wo], kw=2 -> even [1:wo+1]
    wo = o_ref.shape[2]
    cop = o_ref.shape[3]
    e_refs = (xe0_ref, xe1_ref, xe2_ref)
    od_refs = (xo0_ref, xo1_ref, xo2_ref)
    acc = jnp.zeros((wo, cop), jnp.float32)
    for kh in range(3):
        t0 = e_refs[kh][0, 0, 0:wo, :].astype(jnp.bfloat16)
        t1 = od_refs[kh][0, 0, 0:wo, :].astype(jnp.bfloat16)
        t2 = e_refs[kh][0, 0, 1:wo + 1, :].astype(jnp.bfloat16)
        acc = acc + jnp.dot(t0, w_ref[3 * kh + 0], preferred_element_type=jnp.float32)
        acc = acc + jnp.dot(t1, w_ref[3 * kh + 1], preferred_element_type=jnp.float32)
        acc = acc + jnp.dot(t2, w_ref[3 * kh + 2], preferred_element_type=jnp.float32)
    y = acc + b_ref[...]
    o_ref[0, 0] = jnp.maximum(y, 0.0).astype(o_ref.dtype)


# ----------------------------------------------------------------------------
# pallas_call wrappers
# ----------------------------------------------------------------------------
def _round_up(n, m):
    return ((n + m - 1) // m) * m


def _pick_tile(p):
    # largest tile dividing the slab, preferring >= 2 grid steps (v7x 2-TC)
    for t in (512, 256, 128, 64, 32, 16, 8):
        if p % t == 0 and p // t >= 2:
            return t
    for t in (512, 256, 128, 64, 32, 16, 8):
        if p % t == 0:
            return t
    return 128  # fallback: pad pixels to a multiple of 128


def _tiled_call(kernel, row_args, const_args, out_cols):
    """Run `kernel` over (P, C) slabs tiled along rows; const_args use full blocks."""
    p = row_args[0].shape[0]
    tile = _pick_tile(p)
    pad = (-p) % tile
    if pad:
        row_args = [jnp.pad(a, ((0, pad), (0, 0))) for a in row_args]
    pp = p + pad

    in_specs = (
        [pl.BlockSpec((tile, a.shape[1]), lambda i: (i, 0)) for a in row_args]
        + [pl.BlockSpec(c.shape, lambda i, r=c.ndim: (0,) * r) for c in const_args]
    )
    out = pl.pallas_call(
        kernel,
        out_shape=jax.ShapeDtypeStruct((pp, out_cols), jnp.float32),
        grid_spec=pltpu.PrefetchScalarGridSpec(
            num_scalar_prefetch=0,
            grid=(pp // tile,),
            in_specs=in_specs,
            out_specs=pl.BlockSpec((tile, out_cols), lambda i: (i, 0)),
        ),
        compiler_params=pltpu.CompilerParams(dimension_semantics=("parallel",)),
    )(*row_args, *const_args)
    return out[:p] if pad else out


def _down_conv3x3_s2(x_img, w9, bias):
    """3x3 stride-2 pad-1 conv + bias + relu.  x_img: (N,H,W,Cp) f32 lane-padded,
    w9: (9,Cp,Cop) bf16 (BN scale folded), bias: (1,Cop) f32."""
    n, h, w, cp = x_img.shape
    cop = w9.shape[2]
    ho = (h + 1) // 2
    wo = (w + 1) // 2
    hp = 2 * ho + 2
    wp = 2 * wo + 2
    xp = jnp.pad(x_img, ((0, 0), (1, hp - h - 1), (1, wp - w - 1), (0, 0)))
    xe = xp[:, :, 0::2, :]  # even padded columns, width wo+1
    xo = xp[:, :, 1::2, :]  # odd  padded columns, width wo+1
    wcols = wo + 1

    def row_spec(kh):
        return pl.BlockSpec((1, 1, wcols, cp),
                            lambda b, i, kh=kh: (b, 2 * i + kh, 0, 0))

    return pl.pallas_call(
        _down3x3_kernel,
        out_shape=jax.ShapeDtypeStruct((n, ho, wo, cop), jnp.float32),
        grid_spec=pltpu.PrefetchScalarGridSpec(
            num_scalar_prefetch=0,
            grid=(n, ho),
            in_specs=[row_spec(0), row_spec(0),
                      row_spec(1), row_spec(1),
                      row_spec(2), row_spec(2),
                      pl.BlockSpec((9, cp, cop), lambda b, i: (0, 0, 0)),
                      pl.BlockSpec((1, cop), lambda b, i: (0, 0))],
            out_specs=pl.BlockSpec((1, 1, wo, cop), lambda b, i: (b, i, 0, 0)),
        ),
        compiler_params=pltpu.CompilerParams(
            dimension_semantics=("parallel", "parallel")),
    )(xe, xo, xe, xo, xe, xo, w9, bias)


# ----------------------------------------------------------------------------
# JAX glue: lane padding, nearest upsample, weight preparation
# ----------------------------------------------------------------------------
def _pad_lanes(x):
    pad = (-x.shape[-1]) % LANE
    if pad == 0:
        return x
    return jnp.pad(x, ((0, 0),) * (x.ndim - 1) + ((0, pad),))


def _nearest_upsample(x, out_h, out_w):
    # F.interpolate(mode='nearest'): src = floor(dst * in / out).  Integer
    # ratios reduce to pixel replication -> broadcast + reshape (no gather).
    n, h, w, c = x.shape
    if out_h % h == 0 and out_w % w == 0:
        fh, fw = out_h // h, out_w // w
        y = jnp.broadcast_to(x[:, :, None, :, None, :], (n, h, fh, w, fw, c))
        return y.reshape(n, out_h, out_w, c)
    # TODO(synk): non-integer nearest ratio falls back to an XLA gather.
    rows = (jnp.arange(out_h) * h) // out_h
    cols = (jnp.arange(out_w) * w) // out_w
    return x[:, rows][:, :, cols]


def _prep_w1x1_split(w, scale, c_first, cpad_first, cpad_second, cop):
    # w: (Co, Cin, 1, 1) PyTorch layout.  Fold BN scale, split along the concat
    # boundary, zero-pad to lane multiples, cast bf16 for the MXU.
    w2d = (w[:, :, 0, 0] * scale[:, None]).T        # (Cin, Co)
    co = w2d.shape[1]
    wa = w2d[:c_first]
    wb = w2d[c_first:]
    wa = jnp.pad(wa, ((0, cpad_first - wa.shape[0]), (0, cop - co)))
    wb = jnp.pad(wb, ((0, cpad_second - wb.shape[0]), (0, cop - co)))
    return wa.astype(jnp.bfloat16), wb.astype(jnp.bfloat16)


def _prep_w3x3(w, scale, cin_pad, cop):
    # (Co, Ci, 3, 3) -> (9, Cp, Cop) bf16 with BN scale folded, (kh,kw) major.
    co, ci = w.shape[0], w.shape[1]
    wf = w * scale[:, None, None, None]
    wf = jnp.transpose(wf, (2, 3, 1, 0)).reshape(9, ci, co)
    wf = jnp.pad(wf, ((0, 0), (0, cin_pad - ci), (0, cop - co)))
    return wf.astype(jnp.bfloat16)


def _prep_bias(bias, cop):
    return jnp.pad(bias, (0, cop - bias.shape[0])).reshape(1, cop)


# ----------------------------------------------------------------------------
# Parameter initialization (deterministic, synthetic)
# ----------------------------------------------------------------------------
def init_params(key, lchan, mchan, hchan, out_chan):
    def conv_w(k, cin, cout, ks):
        # kaiming_normal_(a=1): gain=1, std = 1/sqrt(fan_in)
        fan_in = cin * ks * ks
        return jax.random.normal(k, (cout, cin, ks, ks), jnp.float32) / jnp.sqrt(float(fan_in))

    def bn(k, c):
        # TODO(synk): BatchNorm folded as inference-mode affine (running stats);
        # training-mode batch statistics are not modeled.
        k1, k2 = jax.random.split(k)
        gamma = 1.0 + 0.1 * jax.random.normal(k1, (c,), jnp.float32)
        beta = 0.1 * jax.random.normal(k2, (c,), jnp.float32)
        mean = jnp.zeros((c,), jnp.float32)
        var = jnp.ones((c,), jnp.float32)
        eps = 1e-5
        scale = gamma / jnp.sqrt(var + eps)
        bias = beta - mean * scale
        return scale, bias

    ks = jax.random.split(key, 12)
    return {
        "conv_mid0": dict(w=conv_w(ks[0], hchan + mchan, out_chan, 1), bn=bn(ks[1], out_chan)),
        "conv_low": dict(w=conv_w(ks[2], lchan + out_chan, out_chan, 1), bn=bn(ks[3], out_chan)),
        "conv_mid": dict(w=conv_w(ks[4], out_chan * 2, out_chan, 1), bn=bn(ks[5], out_chan)),
        "conv_high": dict(w=conv_w(ks[6], out_chan * 2, out_chan, 1), bn=bn(ks[7], out_chan)),
        "down_low": dict(w=conv_w(ks[8], out_chan, out_chan, 3), bn=bn(ks[9], out_chan)),
        "down_mid": dict(w=conv_w(ks[10], out_chan, out_chan, 3), bn=bn(ks[11], out_chan)),
    }


# ----------------------------------------------------------------------------
# Forward pass (mirrors BiPropagateModule.forward)
# ----------------------------------------------------------------------------
def bi_propagate_forward(params, low, mid, high):
    # NCHW -> NHWC once at entry; NHWC -> NCHW once at exit.
    low = jnp.transpose(low, (0, 2, 3, 1))
    mid = jnp.transpose(mid, (0, 2, 3, 1))
    high = jnp.transpose(high, (0, 2, 3, 1))

    n, hm, wm, mchan = mid.shape
    hl, wl, lchan = low.shape[1], low.shape[2], low.shape[3]
    hh, wh, hchan = high.shape[1], high.shape[2], high.shape[3]
    out_chan = params["conv_mid0"]["w"].shape[0]
    cop = _round_up(out_chan, LANE)

    # lane-pad activations ONCE; everything downstream stays 128-lane padded.
    low_p = _pad_lanes(low)
    mid_p = _pad_lanes(mid)
    high_p = _pad_lanes(high)
    clp, cmp_, chp = low_p.shape[-1], mid_p.shape[-1], high_p.shape[-1]

    high_slab = high_p.reshape(-1, chp)
    mid_slab = mid_p.reshape(-1, cmp_)
    low_slab = low_p.reshape(-1, clp)

    # ---- conv_mid0: relu( cat([up(high), mid]) @ W + b )
    #      == relu( up(high @ W_h) + mid @ W_m + b )   (1x1 commutes with nearest up)
    s, b = params["conv_mid0"]["bn"]
    w_m0_h, w_m0_m = _prep_w1x1_split(params["conv_mid0"]["w"], s, hchan, chp, cmp_, cop)
    b_m0 = _prep_bias(b, cop)
    part_h = _tiled_call(_matmul_kernel, [high_slab], [w_m0_h], cop)
    part_h = _nearest_upsample(part_h.reshape(n, hh, wh, cop), hm, wm).reshape(-1, cop)
    feat_mid0 = _tiled_call(_matmul_add_bias_relu_kernel,
                            [mid_slab, part_h], [w_m0_m, b_m0], cop)
    feat_mid0_img = feat_mid0.reshape(n, hm, wm, cop)

    # ---- conv_low: relu( cat([up(feat_mid0), low]) @ W + b )
    s, b = params["conv_low"]["bn"]
    w_cl_fm, w_cl_low = _prep_w1x1_split(params["conv_low"]["w"], s, out_chan, cop, clp, cop)
    b_cl = _prep_bias(b, cop)
    part_m = _tiled_call(_matmul_kernel, [feat_mid0], [w_cl_fm], cop)
    part_m = _nearest_upsample(part_m.reshape(n, hm, wm, cop), hl, wl).reshape(-1, cop)
    feat_low = _tiled_call(_matmul_add_bias_relu_kernel,
                           [low_slab, part_m], [w_cl_low, b_cl], cop)
    feat_low_img = feat_low.reshape(n, hl, wl, cop)

    # ---- down_low: 3x3 stride-2 conv + BN + relu (taps accumulated in-kernel)
    s, b = params["down_low"]["bn"]
    feat_low_down = _down_conv3x3_s2(feat_low_img,
                                     _prep_w3x3(params["down_low"]["w"], s, cop, cop),
                                     _prep_bias(b, cop))
    assert feat_low_down.shape[1] == hm and feat_low_down.shape[2] == wm

    # ---- conv_mid: relu( cat([feat_mid0, feat_low_down]) @ W + b )
    s, b = params["conv_mid"]["bn"]
    w_cm_a, w_cm_b = _prep_w1x1_split(params["conv_mid"]["w"], s, out_chan, cop, cop, cop)
    b_cm = _prep_bias(b, cop)
    feat_mid = _tiled_call(_matmul2_bias_relu_kernel,
                           [feat_mid0, feat_low_down.reshape(-1, cop)],
                           [w_cm_a, w_cm_b, b_cm], cop)
    feat_mid_img = feat_mid.reshape(n, hm, wm, cop)

    # ---- down_mid: 3x3 stride-2 conv + BN + relu
    s, b = params["down_mid"]["bn"]
    feat_mid_down = _down_conv3x3_s2(feat_mid_img,
                                     _prep_w3x3(params["down_mid"]["w"], s, cop, cop),
                                     _prep_bias(b, cop))
    assert feat_mid_down.shape[1] == hh and feat_mid_down.shape[2] == wh

    # ---- conv_high: relu( cat([feat_mid_down, high]) @ W + b )
    #      (as in the PyTorch module, this requires hchan == out_chan)
    s, b = params["conv_high"]["bn"]
    w_ch_a, w_ch_b = _prep_w1x1_split(params["conv_high"]["w"], s, out_chan, cop, chp, cop)
    b_ch = _prep_bias(b, cop)
    feat_high = _tiled_call(_matmul2_bias_relu_kernel,
                            [feat_mid_down.reshape(-1, cop), high_slab],
                            [w_ch_a, w_ch_b, b_ch], cop)

    # back to NCHW, valid channels only
    def out_nchw(slab, h_, w_):
        return jnp.transpose(slab.reshape(n, h_, w_, cop)[..., :out_chan], (0, 3, 1, 2))

    return (out_nchw(feat_low, hl, wl),
            out_nchw(feat_mid, hm, wm),
            out_nchw(feat_high, hh, wh))


# ----------------------------------------------------------------------------
if __name__ == "__main__":
    key = jax.random.PRNGKey(0)
    k_low, k_mid, k_high, k_params = jax.random.split(key, 4)

    # hchan must equal out_chan (conv_high expects out_chan*2 input channels)
    N, lchan, mchan, hchan, out_chan = 2, 4, 6, 8, 8
    low = jax.random.normal(k_low, (N, lchan, 16, 16), jnp.float32)
    mid = jax.random.normal(k_mid, (N, mchan, 8, 8), jnp.float32)
    high = jax.random.normal(k_high, (N, hchan, 4, 4), jnp.float32)

    params = init_params(k_params, lchan, mchan, hchan, out_chan)

    fwd = jax.jit(functools.partial(bi_propagate_forward, params))
    feat_low, feat_mid, feat_high = fwd(low, mid, high)
    jax.block_until_ready((feat_low, feat_mid, feat_high))

    assert feat_low.shape == (N, out_chan, 16, 16)
    assert feat_mid.shape == (N, out_chan, 8, 8)
    assert feat_high.shape == (N, out_chan, 4, 4)
    print("KERNEL_OK")
</pallas_src>

<mosaic_0001>
module attributes {stable_mosaic.version = 11 : i64} {
  func.func @_matmul_kernel(%arg0: i32, %arg1: memref<16x128xf32, #tpu.memory_space<vmem>>, %arg2: memref<128x128xbf16, #tpu.memory_space<vmem>>, %arg3: memref<16x128xf32, #tpu.memory_space<vmem>>) attributes {dimension_semantics = [#tpu.dimension_semantics<parallel>], iteration_bounds = array<i64: 2>, scalar_prefetch = 0 : i64, scratch_operands = 0 : i64, tpu.core_type = #tpu.core_type<tc>, window_params = [{transform_indices = @transform_0, window_bounds = array<i64: 16, 128>}, {pipeline_mode = #tpu.pipeline_mode<synchronous>, transform_indices = @transform_1, window_bounds = array<i64: 128, 128>}, {transform_indices = @transform_2, window_bounds = array<i64: 16, 128>}]} {
    %c0 = arith.constant 0 : index
    %c0_0 = arith.constant 0 : index
    %0 = vector.load %arg1[%c0, %c0_0] : memref<16x128xf32, #tpu.memory_space<vmem>>, vector<16x128xf32>
    %1 = arith.truncf %0 : vector<16x128xf32> to vector<16x128xbf16>
    %c0_1 = arith.constant 0 : index
    %c0_2 = arith.constant 0 : index
    %2 = vector.load %arg2[%c0_1, %c0_2] : memref<128x128xbf16, #tpu.memory_space<vmem>>, vector<128x128xbf16>
    %cst = arith.constant dense<0.000000e+00> : vector<16x128xf32>
    %3 = tpu.matmul %1, %2, %cst {dimension_numbers = #tpu.dot_dimension_numbers<[1], [0], [0], [1], [0, 0, 1, 1], [], []>} : vector<16x128xbf16>, vector<128x128xbf16>, vector<16x128xf32> -> vector<16x128xf32>
    %c0_3 = arith.constant 0 : index
    %c0_4 = arith.constant 0 : index
    %4 = vector.load %arg3[%c0_3, %c0_4] : memref<16x128xf32, #tpu.memory_space<vmem>>, vector<16x128xf32>
    tpu.vector_store %arg3[%c0_3, %c0_4], %3 {strides = array<i32>} : memref<16x128xf32, #tpu.memory_space<vmem>>, vector<16x128xf32>,
    return
  }
  func.func @transform_0(%arg0: i32) -> (i32, i32) {
    %c0_i32 = arith.constant 0 : i32
    %c0_i32_0 = arith.constant 0 : i32
    return %arg0, %c0_i32 : i32, i32
  }
  func.func @transform_1(%arg0: i32) -> (i32, i32) {
    %c0_i32 = arith.constant 0 : i32
    %c0_i32_0 = arith.constant 0 : i32
    %c0_i32_1 = arith.constant 0 : i32
    return %c0_i32, %c0_i32_0 : i32, i32
  }
  func.func @transform_2(%arg0: i32) -> (i32, i32) {
    %c0_i32 = arith.constant 0 : i32
    %c0_i32_0 = arith.constant 0 : i32
    return %arg0, %c0_i32 : i32, i32
  }
}

module attributes {stable_mosaic.version = 11 : i64} {
  func.func @_matmul_add_bias_relu_kernel(%arg0: i32, %arg1: memref<64x128xf32, #tpu.memory_space<vmem>>, %arg2: memref<64x128xf32, #tpu.memory_space<vmem>>, %arg3: memref<128x128xbf16, #tpu.memory_space<vmem>>, %arg4: memref<1x128xf32, #tpu.memory_space<vmem>>, %arg5: memref<64x128xf32, #tpu.memory_space<vmem>>) attributes {dimension_semantics = [#tpu.dimension_semantics<parallel>], iteration_bounds = array<i64: 2>, scalar_prefetch = 0 : i64, scratch_operands = 0 : i64, tpu.core_type = #tpu.core_type<tc>, window_params = [{transform_indices = @transform_0, window_bounds = array<i64: 64, 128>}, {transform_indices = @transform_1, window_bounds = array<i64: 64, 128>}, {pipeline_mode = #tpu.pipeline_mode<synchronous>, transform_indices = @transform_2, window_bounds = array<i64: 128, 128>}, {pipeline_mode = #tpu.pipeline_mode<synchronous>, transform_indices = @transform_3, window_bounds = array<i64: 1, 128>}, {transform_indices = @transform_4, window_bounds = array<i64: 64, 128>}]} {
    %c0 = arith.constant 0 : index
    %c0_0 = arith.constant 0 : index
    %0 = vector.load %arg1[%c0, %c0_0] : memref<64x128xf32, #tpu.memory_space<vmem>>, vector<64x128xf32>
    %1 = arith.truncf %0 : vector<64x128xf32> to vector<64x128xbf16>
    %c0_1 = arith.constant 0 : index
    %c0_2 = arith.constant 0 : index
    %2 = vector.load %arg3[%c0_1, %c0_2] : memref<128x128xbf16, #tpu.memory_space<vmem>>, vector<128x128xbf16>
    %cst = arith.constant dense<0.000000e+00> : vector<64x128xf32>
    %3 = tpu.matmul %1, %2, %cst {dimension_numbers = #tpu.dot_dimension_numbers<[1], [0], [0], [1], [0, 0, 1, 1], [], []>} : vector<64x128xbf16>, vector<128x128xbf16>, vector<64x128xf32> -> vector<64x128xf32>
    %c0_3 = arith.constant 0 : index
    %c0_4 = arith.constant 0 : index
    %4 = vector.load %arg2[%c0_3, %c0_4] : memref<64x128xf32, #tpu.memory_space<vmem>>, vector<64x128xf32>
    %5 = arith.addf %3, %4 : vector<64x128xf32>
    %c0_5 = arith.constant 0 : index
    %c0_6 = arith.constant 0 : index
    %6 = vector.load %arg4[%c0_5, %c0_6] : memref<1x128xf32, #tpu.memory_space<vmem>>, vector<1x128xf32>
    %7 = vector.broadcast %6 : vector<1x128xf32> to vector<64x128xf32>
    %8 = arith.addf %5, %7 : vector<64x128xf32>
    %cst_7 = arith.constant 0.000000e+00 : f32
    %9 = vector.broadcast %cst_7 : f32 to vector<64x128xf32>
    %10 = arith.maximumf %8, %9 : vector<64x128xf32>
    %c0_8 = arith.constant 0 : index
    %c0_9 = arith.constant 0 : index
    %11 = vector.load %arg5[%c0_8, %c0_9] : memref<64x128xf32, #tpu.memory_space<vmem>>, vector<64x128xf32>
    tpu.vector_store %arg5[%c0_8, %c0_9], %10 {strides = array<i32>} : memref<64x128xf32, #tpu.memory_space<vmem>>, vector<64x128xf32>,
    return
  }
  func.func @transform_0(%arg0: i32) -> (i32, i32) {
    %c0_i32 = arith.constant 0 : i32
    %c0_i32_0 = arith.constant 0 : i32
    return %arg0, %c0_i32 : i32, i32
  }
  func.func @transform_1(%arg0: i32) -> (i32, i32) {
    %c0_i32 = arith.constant 0 : i32
    %c0_i32_0 = arith.constant 0 : i32
    return %arg0, %c0_i32 : i32, i32
  }
  func.func @transform_2(%arg0: i32) -> (i32, i32) {
    %c0_i32 = arith.constant 0 : i32
    %c0_i32_0 = arith.constant 0 : i32
    %c0_i32_1 = arith.constant 0 : i32
    return %c0_i32, %c0_i32_0 : i32, i32
  }
  func.func @transform_3(%arg0: i32) -> (i32, i32) {
    %c0_i32 = arith.constant 0 : i32
    %c0_i32_0 = arith.constant 0 : i32
    %c0_i32_1 = arith.constant 0 : i32
    return %c0_i32, %c0_i32_0 : i32, i32
  }
  func.func @transform_4(%arg0: i32) -> (i32, i32) {
    %c0_i32 = arith.constant 0 : i32
    %c0_i32_0 = arith.constant 0 : i32
    return %arg0, %c0_i32 : i32, i32
  }
}

module attributes {stable_mosaic.version = 11 : i64} {
  func.func @_matmul_kernel(%arg0: i32, %arg1: memref<64x128xf32, #tpu.memory_space<vmem>>, %arg2: memref<128x128xbf16, #tpu.memory_space<vmem>>, %arg3: memref<64x128xf32, #tpu.memory_space<vmem>>) attributes {dimension_semantics = [#tpu.dimension_semantics<parallel>], iteration_bounds = array<i64: 2>, scalar_prefetch = 0 : i64, scratch_operands = 0 : i64, tpu.core_type = #tpu.core_type<tc>, window_params = [{transform_indices = @transform_0, window_bounds = array<i64: 64, 128>}, {pipeline_mode = #tpu.pipeline_mode<synchronous>, transform_indices = @transform_1, window_bounds = array<i64: 128, 128>}, {transform_indices = @transform_2, window_bounds = array<i64: 64, 128>}]} {
    %c0 = arith.constant 0 : index
    %c0_0 = arith.constant 0 : index
    %0 = vector.load %arg1[%c0, %c0_0] : memref<64x128xf32, #tpu.memory_space<vmem>>, vector<64x128xf32>
    %1 = arith.truncf %0 : vector<64x128xf32> to vector<64x128xbf16>
    %c0_1 = arith.constant 0 : index
    %c0_2 = arith.constant 0 : index
    %2 = vector.load %arg2[%c0_1, %c0_2] : memref<128x128xbf16, #tpu.memory_space<vmem>>, vector<128x128xbf16>
    %cst = arith.constant dense<0.000000e+00> : vector<64x128xf32>
    %3 = tpu.matmul %1, %2, %cst {dimension_numbers = #tpu.dot_dimension_numbers<[1], [0], [0], [1], [0, 0, 1, 1], [], []>} : vector<64x128xbf16>, vector<128x128xbf16>, vector<64x128xf32> -> vector<64x128xf32>
    %c0_3 = arith.constant 0 : index
    %c0_4 = arith.constant 0 : index
    %4 = vector.load %arg3[%c0_3, %c0_4] : memref<64x128xf32, #tpu.memory_space<vmem>>, vector<64x128xf32>
    tpu.vector_store %arg3[%c0_3, %c0_4], %3 {strides = array<i32>} : memref<64x128xf32, #tpu.memory_space<vmem>>, vector<64x128xf32>,
    return
  }
  func.func @transform_0(%arg0: i32) -> (i32, i32) {
    %c0_i32 = arith.constant 0 : i32
    %c0_i32_0 = arith.constant 0 : i32
    return %arg0, %c0_i32 : i32, i32
  }
  func.func @transform_1(%arg0: i32) -> (i32, i32) {
    %c0_i32 = arith.constant 0 : i32
    %c0_i32_0 = arith.constant 0 : i32
    %c0_i32_1 = arith.constant 0 : i32
    return %c0_i32, %c0_i32_0 : i32, i32
  }
  func.func @transform_2(%arg0: i32) -> (i32, i32) {
    %c0_i32 = arith.constant 0 : i32
    %c0_i32_0 = arith.constant 0 : i32
    return %arg0, %c0_i32 : i32, i32
  }
}

module attributes {stable_mosaic.version = 11 : i64} {
  func.func @_matmul_add_bias_relu_kernel(%arg0: i32, %arg1: memref<256x128xf32, #tpu.memory_space<vmem>>, %arg2: memref<256x128xf32, #tpu.memory_space<vmem>>, %arg3: memref<128x128xbf16, #tpu.memory_space<vmem>>, %arg4: memref<1x128xf32, #tpu.memory_space<vmem>>, %arg5: memref<256x128xf32, #tpu.memory_space<vmem>>) attributes {dimension_semantics = [#tpu.dimension_semantics<parallel>], iteration_bounds = array<i64: 2>, scalar_prefetch = 0 : i64, scratch_operands = 0 : i64, tpu.core_type = #tpu.core_type<tc>, window_params = [{transform_indices = @transform_0, window_bounds = array<i64: 256, 128>}, {transform_indices = @transform_1, window_bounds = array<i64: 256, 128>}, {pipeline_mode = #tpu.pipeline_mode<synchronous>, transform_indices = @transform_2, window_bounds = array<i64: 128, 128>}, {pipeline_mode = #tpu.pipeline_mode<synchronous>, transform_indices = @transform_3, window_bounds = array<i64: 1, 128>}, {transform_indices = @transform_4, window_bounds = array<i64: 256, 128>}]} {
    %c0 = arith.constant 0 : index
    %c0_0 = arith.constant 0 : index
    %0 = vector.load %arg1[%c0, %c0_0] : memref<256x128xf32, #tpu.memory_space<vmem>>, vector<256x128xf32>
    %1 = arith.truncf %0 : vector<256x128xf32> to vector<256x128xbf16>
    %c0_1 = arith.constant 0 : index
    %c0_2 = arith.constant 0 : index
    %2 = vector.load %arg3[%c0_1, %c0_2] : memref<128x128xbf16, #tpu.memory_space<vmem>>, vector<128x128xbf16>
    %cst = arith.constant dense<0.000000e+00> : vector<256x128xf32>
    %3 = tpu.matmul %1, %2, %cst {dimension_numbers = #tpu.dot_dimension_numbers<[1], [0], [0], [1], [0, 0, 1, 1], [], []>} : vector<256x128xbf16>, vector<128x128xbf16>, vector<256x128xf32> -> vector<256x128xf32>
    %c0_3 = arith.constant 0 : index
    %c0_4 = arith.constant 0 : index
    %4 = vector.load %arg2[%c0_3, %c0_4] : memref<256x128xf32, #tpu.memory_space<vmem>>, vector<256x128xf32>
    %5 = arith.addf %3, %4 : vector<256x128xf32>
    %c0_5 = arith.constant 0 : index
    %c0_6 = arith.constant 0 : index
    %6 = vector.load %arg4[%c0_5, %c0_6] : memref<1x128xf32, #tpu.memory_space<vmem>>, vector<1x128xf32>
    %7 = vector.broadcast %6 : vector<1x128xf32> to vector<256x128xf32>
    %8 = arith.addf %5, %7 : vector<256x128xf32>
    %cst_7 = arith.constant 0.000000e+00 : f32
    %9 = vector.broadcast %cst_7 : f32 to vector<256x128xf32>
    %10 = arith.maximumf %8, %9 : vector<256x128xf32>
    %c0_8 = arith.constant 0 : index
    %c0_9 = arith.constant 0 : index
    %11 = vector.load %arg5[%c0_8, %c0_9] : memref<256x128xf32, #tpu.memory_space<vmem>>, vector<256x128xf32>
    tpu.vector_store %arg5[%c0_8, %c0_9], %10 {strides = array<i32>} : memref<256x128xf32, #tpu.memory_space<vmem>>, vector<256x128xf32>,
    return
  }
  func.func @transform_0(%arg0: i32) -> (i32, i32) {
    %c0_i32 = arith.constant 0 : i32
    %c0_i32_0 = arith.constant 0 : i32
    return %arg0, %c0_i32 : i32, i32
  }
  func.func @transform_1(%arg0: i32) -> (i32, i32) {
    %c0_i32 = arith.constant 0 : i32
    %c0_i32_0 = arith.constant 0 : i32
    return %arg0, %c0_i32 : i32, i32
  }
  func.func @transform_2(%arg0: i32) -> (i32, i32) {
    %c0_i32 = arith.constant 0 : i32
    %c0_i32_0 = arith.constant 0 : i32
    %c0_i32_1 = arith.constant 0 : i32
    return %c0_i32, %c0_i32_0 : i32, i32
  }
  func.func @transform_3(%arg0: i32) -> (i32, i32) {
    %c0_i32 = arith.constant 0 : i32
    %c0_i32_0 = arith.constant 0 : i32
    %c0_i32_1 = arith.constant 0 : i32
    return %c0_i32, %c0_i32_0 : i32, i32
  }
  func.func @transform_4(%arg0: i32) -> (i32, i32) {
    %c0_i32 = arith.constant 0 : i32
    %c0_i32_0 = arith.constant 0 : i32
    return %arg0, %c0_i32 : i32, i32
  }
}

module attributes {stable_mosaic.version = 11 : i64} {
  func.func @_matmul2_bias_relu_kernel(%arg0: i32, %arg1: memref<64x128xf32, #tpu.memory_space<vmem>>, %arg2: memref<64x128xf32, #tpu.memory_space<vmem>>, %arg3: memref<128x128xbf16, #tpu.memory_space<vmem>>, %arg4: memref<128x128xbf16, #tpu.memory_space<vmem>>, %arg5: memref<1x128xf32, #tpu.memory_space<vmem>>, %arg6: memref<64x128xf32, #tpu.memory_space<vmem>>) attributes {dimension_semantics = [#tpu.dimension_semantics<parallel>], iteration_bounds = array<i64: 2>, scalar_prefetch = 0 : i64, scratch_operands = 0 : i64, tpu.core_type = #tpu.core_type<tc>, window_params = [{transform_indices = @transform_0, window_bounds = array<i64: 64, 128>}, {transform_indices = @transform_1, window_bounds = array<i64: 64, 128>}, {pipeline_mode = #tpu.pipeline_mode<synchronous>, transform_indices = @transform_2, window_bounds = array<i64: 128, 128>}, {pipeline_mode = #tpu.pipeline_mode<synchronous>, transform_indices = @transform_3, window_bounds = array<i64: 128, 128>}, {pipeline_mode = #tpu.pipeline_mode<synchronous>, transform_indices = @transform_4, window_bounds = array<i64: 1, 128>}, {transform_indices = @transform_5, window_bounds = array<i64: 64, 128>}]} {
    %c0 = arith.constant 0 : index
    %c0_0 = arith.constant 0 : index
    %0 = vector.load %arg1[%c0, %c0_0] : memref<64x128xf32, #tpu.memory_space<vmem>>, vector<64x128xf32>
    %1 = arith.truncf %0 : vector<64x128xf32> to vector<64x128xbf16>
    %c0_1 = arith.constant 0 : index
    %c0_2 = arith.constant 0 : index
    %2 = vector.load %arg2[%c0_1, %c0_2] : memref<64x128xf32, #tpu.memory_space<vmem>>, vector<64x128xf32>
    %3 = arith.truncf %2 : vector<64x128xf32> to vector<64x128xbf16>
    %c0_3 = arith.constant 0 : index
    %c0_4 = arith.constant 0 : index
    %4 = vector.load %arg3[%c0_3, %c0_4] : memref<128x128xbf16, #tpu.memory_space<vmem>>, vector<128x128xbf16>
    %cst = arith.constant dense<0.000000e+00> : vector<64x128xf32>
    %5 = tpu.matmul %1, %4, %cst {dimension_numbers = #tpu.dot_dimension_numbers<[1], [0], [0], [1], [0, 0, 1, 1], [], []>} : vector<64x128xbf16>, vector<128x128xbf16>, vector<64x128xf32> -> vector<64x128xf32>
    %c0_5 = arith.constant 0 : index
    %c0_6 = arith.constant 0 : index
    %6 = vector.load %arg4[%c0_5, %c0_6] : memref<128x128xbf16, #tpu.memory_space<vmem>>, vector<128x128xbf16>
    %cst_7 = arith.constant dense<0.000000e+00> : vector<64x128xf32>
    %7 = tpu.matmul %3, %6, %cst_7 {dimension_numbers = #tpu.dot_dimension_numbers<[1], [0], [0], [1], [0, 0, 1, 1], [], []>} : vector<64x128xbf16>, vector<128x128xbf16>, vector<64x128xf32> -> vector<64x128xf32>
    %8 = arith.addf %5, %7 : vector<64x128xf32>
    %c0_8 = arith.constant 0 : index
    %c0_9 = arith.constant 0 : index
    %9 = vector.load %arg5[%c0_8, %c0_9] : memref<1x128xf32, #tpu.memory_space<vmem>>, vector<1x128xf32>
    %10 = vector.broadcast %9 : vector<1x128xf32> to vector<64x128xf32>
    %11 = arith.addf %8, %10 : vector<64x128xf32>
    %cst_10 = arith.constant 0.000000e+00 : f32
    %12 = vector.broadcast %cst_10 : f32 to vector<64x128xf32>
    %13 = arith.maximumf %11, %12 : vector<64x128xf32>
    %c0_11 = arith.constant 0 : index
    %c0_12 = arith.constant 0 : index
    %14 = vector.load %arg6[%c0_11, %c0_12] : memref<64x128xf32, #tpu.memory_space<vmem>>, vector<64x128xf32>
    tpu.vector_store %arg6[%c0_11, %c0_12], %13 {strides = array<i32>} : memref<64x128xf32, #tpu.memory_space<vmem>>, vector<64x128xf32>,
    return
  }
  func.func @transform_0(%arg0: i32) -> (i32, i32) {
    %c0_i32 = arith.constant 0 : i32
    %c0_i32_0 = arith.constant 0 : i32
    return %arg0, %c0_i32 : i32, i32
  }
  func.func @transform_1(%arg0: i32) -> (i32, i32) {
    %c0_i32 = arith.constant 0 : i32
    %c0_i32_0 = arith.constant 0 : i32
    return %arg0, %c0_i32 : i32, i32
  }
  func.func @transform_2(%arg0: i32) -> (i32, i32) {
    %c0_i32 = arith.constant 0 : i32
    %c0_i32_0 = arith.constant 0 : i32
    %c0_i32_1 = arith.constant 0 : i32
    return %c0_i32, %c0_i32_0 : i32, i32
  }
  func.func @transform_3(%arg0: i32) -> (i32, i32) {
    %c0_i32 = arith.constant 0 : i32
    %c0_i32_0 = arith.constant 0 : i32
    %c0_i32_1 = arith.constant 0 : i32
    return %c0_i32, %c0_i32_0 : i32, i32
  }
  func.func @transform_4(%arg0: i32) -> (i32, i32) {
    %c0_i32 = arith.constant 0 : i32
    %c0_i32_0 = arith.constant 0 : i32
    %c0_i32_1 = arith.constant 0 : i32
    return %c0_i32, %c0_i32_0 : i32, i32
  }
  func.func @transform_5(%arg0: i32) -> (i32, i32) {
    %c0_i32 = arith.constant 0 : i32
    %c0_i32_0 = arith.constant 0 : i32
    return %arg0, %c0_i32 : i32, i32
  }
}

module attributes {stable_mosaic.version = 11 : i64} {
  func.func @_down3x3_kernel(%arg0: i32, %arg1: i32, %arg2: memref<1x1x9x128xf32, #tpu.memory_space<vmem>>, %arg3: memref<1x1x9x128xf32, #tpu.memory_space<vmem>>, %arg4: memref<1x1x9x128xf32, #tpu.memory_space<vmem>>, %arg5: memref<1x1x9x128xf32, #tpu.memory_space<vmem>>, %arg6: memref<1x1x9x128xf32, #tpu.memory_space<vmem>>, %arg7: memref<1x1x9x128xf32, #tpu.memory_space<vmem>>, %arg8: memref<9x128x128xbf16, #tpu.memory_space<vmem>>, %arg9: memref<1x128xf32, #tpu.memory_space<vmem>>, %arg10: memref<1x1x8x128xf32, #tpu.memory_space<vmem>>) attributes {dimension_semantics = [#tpu.dimension_semantics<parallel>, #tpu.dimension_semantics<parallel>], iteration_bounds = array<i64: 2, 8>, scalar_prefetch = 0 : i64, scratch_operands = 0 : i64, tpu.core_type = #tpu.core_type<tc>, window_params = [{transform_indices = @transform_0, window_bounds = array<i64: 1, 1, 9, 128>}, {transform_indices = @transform_1, window_bounds = array<i64: 1, 1, 9, 128>}, {transform_indices = @transform_2, window_bounds = array<i64: 1, 1, 9, 128>}, {transform_indices = @transform_3, window_bounds = array<i64: 1, 1, 9, 128>}, {transform_indices = @transform_4, window_bounds = array<i64: 1, 1, 9, 128>}, {transform_indices = @transform_5, window_bounds = array<i64: 1, 1, 9, 128>}, {pipeline_mode = #tpu.pipeline_mode<synchronous>, transform_indices = @transform_6, window_bounds = array<i64: 9, 128, 128>}, {pipeline_mode = #tpu.pipeline_mode<synchronous>, transform_indices = @transform_7, window_bounds = array<i64: 1, 128>}, {transform_indices = @transform_8, window_bounds = array<i64: 1, 1, 8, 128>}]} {
    %cst = arith.constant 0.000000e+00 : f32
    %0 = vector.broadcast %cst : f32 to vector<8x128xf32>
    %c0 = arith.constant 0 : index
    %c0_0 = arith.constant 0 : index
    %c0_1 = arith.constant 0 : index
    %c0_2 = arith.constant 0 : index
    %1 = vector.load %arg2[%c0, %c0_0, %c0_1, %c0_2] : memref<1x1x9x128xf32, #tpu.memory_space<vmem>>, vector<1x1x8x128xf32>
    %2 = vector.shape_cast %1 : vector<1x1x8x128xf32> to vector<8x128xf32>
    %3 = arith.truncf %2 : vector<8x128xf32> to vector<8x128xbf16>
    %c0_3 = arith.constant 0 : index
    %c0_4 = arith.constant 0 : index
    %c0_5 = arith.constant 0 : index
    %c0_6 = arith.constant 0 : index
    %4 = vector.load %arg3[%c0_3, %c0_4, %c0_5, %c0_6] : memref<1x1x9x128xf32, #tpu.memory_space<vmem>>, vector<1x1x8x128xf32>
    %5 = vector.shape_cast %4 : vector<1x1x8x128xf32> to vector<8x128xf32>
    %6 = arith.truncf %5 : vector<8x128xf32> to vector<8x128xbf16>
    %c0_7 = arith.constant 0 : index
    %c0_8 = arith.constant 0 : index
    %c1 = arith.constant 1 : index
    %c0_9 = arith.constant 0 : index
    %7 = vector.load %arg2[%c0_7, %c0_8, %c1, %c0_9] : memref<1x1x9x128xf32, #tpu.memory_space<vmem>>, vector<1x1x8x128xf32>
    %8 = vector.shape_cast %7 : vector<1x1x8x128xf32> to vector<8x128xf32>
    %9 = arith.truncf %8 : vector<8x128xf32> to vector<8x128xbf16>
    %c0_10 = arith.constant 0 : index
    %c0_11 = arith.constant 0 : index
    %c0_12 = arith.constant 0 : index
    %10 = vector.load %arg8[%c0_10, %c0_11, %c0_12] : memref<9x128x128xbf16, #tpu.memory_space<vmem>>, vector<1x128x128xbf16>
    %11 = vector.shape_cast %10 : vector<1x128x128xbf16> to vector<128x128xbf16>
    %cst_13 = arith.constant dense<0.000000e+00> : vector<8x128xf32>
    %12 = tpu.matmul %3, %11, %cst_13 {dimension_numbers = #tpu.dot_dimension_numbers<[1], [0], [0], [1], [0, 0, 1, 1], [], []>} : vector<8x128xbf16>, vector<128x128xbf16>, vector<8x128xf32> -> vector<8x128xf32>
    %13 = arith.addf %0, %12 : vector<8x128xf32>
    %c1_14 = arith.constant 1 : index
    %c0_15 = arith.constant 0 : index
    %c0_16 = arith.constant 0 : index
    %14 = vector.load %arg8[%c1_14, %c0_15, %c0_16] : memref<9x128x128xbf16, #tpu.memory_space<vmem>>, vector<1x128x128xbf16>
    %15 = vector.shape_cast %14 : vector<1x128x128xbf16> to vector<128x128xbf16>
    %cst_17 = arith.constant dense<0.000000e+00> : vector<8x128xf32>
    %16 = tpu.matmul %6, %15, %cst_17 {dimension_numbers = #tpu.dot_dimension_numbers<[1], [0], [0], [1], [0, 0, 1, 1], [], []>} : vector<8x128xbf16>, vector<128x128xbf16>, vector<8x128xf32> -> vector<8x128xf32>
    %17 = arith.addf %13, %16 : vector<8x128xf32>
    %c2 = arith.constant 2 : index
    %c0_18 = arith.constant 0 : index
    %c0_19 = arith.constant 0 : index
    %18 = vector.load %arg8[%c2, %c0_18, %c0_19] : memref<9x128x128xbf16, #tpu.memory_space<vmem>>, vector<1x128x128xbf16>
    %19 = vector.shape_cast %18 : vector<1x128x128xbf16> to vector<128x128xbf16>
    %cst_20 = arith.constant dense<0.000000e+00> : vector<8x128xf32>
    %20 = tpu.matmul %9, %19, %cst_20 {dimension_numbers = #tpu.dot_dimension_numbers<[1], [0], [0], [1], [0, 0, 1, 1], [], []>} : vector<8x128xbf16>, vector<128x128xbf16>, vector<8x128xf32> -> vector<8x128xf32>
    %21 = arith.addf %17, %20 : vector<8x128xf32>
    %c0_21 = arith.constant 0 : index
    %c0_22 = arith.constant 0 : index
    %c0_23 = arith.constant 0 : index
    %c0_24 = arith.constant 0 : index
    %22 = vector.load %arg4[%c0_21, %c0_22, %c0_23, %c0_24] : memref<1x1x9x128xf32, #tpu.memory_space<vmem>>, vector<1x1x8x128xf32>
    %23 = vector.shape_cast %22 : vector<1x1x8x128xf32> to vector<8x128xf32>
    %24 = arith.truncf %23 : vector<8x128xf32> to vector<8x128xbf16>
    %c0_25 = arith.constant 0 : index
    %c0_26 = arith.constant 0 : index
    %c0_27 = arith.constant 0 : index
    %c0_28 = arith.constant 0 : index
    %25 = vector.load %arg5[%c0_25, %c0_26, %c0_27, %c0_28] : memref<1x1x9x128xf32, #tpu.memory_space<vmem>>, vector<1x1x8x128xf32>
    %26 = vector.shape_cast %25 : vector<1x1x8x128xf32> to vector<8x128xf32>
    %27 = arith.truncf %26 : vector<8x128xf32> to vector<8x128xbf16>
    %c0_29 = arith.constant 0 : index
    %c0_30 = arith.constant 0 : index
    %c1_31 = arith.constant 1 : index
    %c0_32 = arith.constant 0 : index
    %28 = vector.load %arg4[%c0_29, %c0_30, %c1_31, %c0_32] : memref<1x1x9x128xf32, #tpu.memory_space<vmem>>, vector<1x1x8x128xf32>
    %29 = vector.shape_cast %28 : vector<1x1x8x128xf32> to vector<8x128xf32>
    %30 = arith.truncf %29 : vector<8x128xf32> to vector<8x128xbf16>
    %c3 = arith.constant 3 : index
    %c0_33 = arith.constant 0 : index
    %c0_34 = arith.constant 0 : index
    %31 = vector.load %arg8[%c3, %c0_33, %c0_34] : memref<9x128x128xbf16, #tpu.memory_space<vmem>>, vector<1x128x128xbf16>
    %32 = vector.shape_cast %31 : vector<1x128x128xbf16> to vector<128x128xbf16>
    %cst_35 = arith.constant dense<0.000000e+00> : vector<8x128xf32>
    %33 = tpu.matmul %24, %32, %cst_35 {dimension_numbers = #tpu.dot_dimension_numbers<[1], [0], [0], [1], [0, 0, 1, 1], [], []>} : vector<8x128xbf16>, vector<128x128xbf16>, vector<8x128xf32> -> vector<8x128xf32>
    %34 = arith.addf %21, %33 : vector<8x128xf32>
    %c4 = arith.constant 4 : index
    %c0_36 = arith.constant 0 : index
    %c0_37 = arith.constant 0 : index
    %35 = vector.load %arg8[%c4, %c0_36, %c0_37] : memref<9x128x128xbf16, #tpu.memory_space<vmem>>, vector<1x128x128xbf16>
    %36 = vector.shape_cast %35 : vector<1x128x128xbf16> to vector<128x128xbf16>
    %cst_38 = arith.constant dense<0.000000e+00> : vector<8x128xf32>
    %37 = tpu.matmul %27, %36, %cst_38 {dimension_numbers = #tpu.dot_dimension_numbers<[1], [0], [0], [1], [0, 0, 1, 1], [], []>} : vector<8x128xbf16>, vector<128x128xbf16>, vector<8x128xf32> -> vector<8x128xf32>
    %38 = arith.addf %34, %37 : vector<8x128xf32>
    %c5 = arith.constant 5 : index
    %c0_39 = arith.constant 0 : index
    %c0_40 = arith.constant 0 : index
    %39 = vector.load %arg8[%c5, %c0_39, %c0_40] : memref<9x128x128xbf16, #tpu.memory_space<vmem>>, vector<1x128x128xbf16>
    %40 = vector.shape_cast %39 : vector<1x128x128xbf16> to vector<128x128xbf16>
    %cst_41 = arith.constant dense<0.000000e+00> : vector<8x128xf32>
    %41 = tpu.matmul %30, %40, %cst_41 {dimension_numbers = #tpu.dot_dimension_numbers<[1], [0], [0], [1], [0, 0, 1, 1], [], []>} : vector<8x128xbf16>, vector<128x128xbf16>, vector<8x128xf32> -> vector<8x128xf32>
    %42 = arith.addf %38, %41 : vector<8x128xf32>
    %c0_42 = arith.constant 0 : index
    %c0_43 = arith.constant 0 : index
    %c0_44 = arith.constant 0 : index
    %c0_45 = arith.constant 0 : index
    %43 = vector.load %arg6[%c0_42, %c0_43, %c0_44, %c0_45] : memref<1x1x9x128xf32, #tpu.memory_space<vmem>>, vector<1x1x8x128xf32>
    %44 = vector.shape_cast %43 : vector<1x1x8x128xf32> to vector<8x128xf32>
    %45 = arith.truncf %44 : vector<8x128xf32> to vector<8x128xbf16>
    %c0_46 = arith.constant 0 : index
    %c0_47 = arith.constant 0 : index
    %c0_48 = arith.constant 0 : index
    %c0_49 = arith.constant 0 : index
    %46 = vector.load %arg7[%c0_46, %c0_47, %c0_48, %c0_49] : memref<1x1x9x128xf32, #tpu.memory_space<vmem>>, vector<1x1x8x128xf32>
    %47 = vector.shape_cast %46 : vector<1x1x8x128xf32> to vector<8x128xf32>
    %48 = arith.truncf %47 : vector<8x128xf32> to vector<8x128xbf16>
    %c0_50 = arith.constant 0 : index
    %c0_51 = arith.constant 0 : index
    %c1_52 = arith.constant 1 : index
    %c0_53 = arith.constant 0 : index
    %49 = vector.load %arg6[%c0_50, %c0_51, %c1_52, %c0_53] : memref<1x1x9x128xf32, #tpu.memory_space<vmem>>, vector<1x1x8x128xf32>
    %50 = vector.shape_cast %49 : vector<1x1x8x128xf32> to vector<8x128xf32>
    %51 = arith.truncf %50 : vector<8x128xf32> to vector<8x128xbf16>
    %c6 = arith.constant 6 : index
    %c0_54 = arith.constant 0 : index
    %c0_55 = arith.constant 0 : index
    %52 = vector.load %arg8[%c6, %c0_54, %c0_55] : memref<9x128x128xbf16, #tpu.memory_space<vmem>>, vector<1x128x128xbf16>
    %53 = vector.shape_cast %52 : vector<1x128x128xbf16> to vector<128x128xbf16>
    %cst_56 = arith.constant dense<0.000000e+00> : vector<8x128xf32>
    %54 = tpu.matmul %45, %53, %cst_56 {dimension_numbers = #tpu.dot_dimension_numbers<[1], [0], [0], [1], [0, 0, 1, 1], [], []>} : vector<8x128xbf16>, vector<128x128xbf16>, vector<8x128xf32> -> vector<8x128xf32>
    %55 = arith.addf %42, %54 : vector<8x128xf32>
    %c7 = arith.constant 7 : index
    %c0_57 = arith.constant 0 : index
    %c0_58 = arith.constant 0 : index
    %56 = vector.load %arg8[%c7, %c0_57, %c0_58] : memref<9x128x128xbf16, #tpu.memory_space<vmem>>, vector<1x128x128xbf16>
    %57 = vector.shape_cast %56 : vector<1x128x128xbf16> to vector<128x128xbf16>
    %cst_59 = arith.constant dense<0.000000e+00> : vector<8x128xf32>
    %58 = tpu.matmul %48, %57, %cst_59 {dimension_numbers = #tpu.dot_dimension_numbers<[1], [0], [0], [1], [0, 0, 1, 1], [], []>} : vector<8x128xbf16>, vector<128x128xbf16>, vector<8x128xf32> -> vector<8x128xf32>
    %59 = arith.addf %55, %58 : vector<8x128xf32>
    %c8 = arith.constant 8 : index
    %c0_60 = arith.constant 0 : index
    %c0_61 = arith.constant 0 : index
    %60 = vector.load %arg8[%c8, %c0_60, %c0_61] : memref<9x128x128xbf16, #tpu.memory_space<vmem>>, vector<1x128x128xbf16>
    %61 = vector.shape_cast %60 : vector<1x128x128xbf16> to vector<128x128xbf16>
    %cst_62 = arith.constant dense<0.000000e+00> : vector<8x128xf32>
    %62 = tpu.matmul %51, %61, %cst_62 {dimension_numbers = #tpu.dot_dimension_numbers<[1], [0], [0], [1], [0, 0, 1, 1], [], []>} : vector<8x128xbf16>, vector<128x128xbf16>, vector<8x128xf32> -> vector<8x128xf32>
    %63 = arith.addf %59, %62 : vector<8x128xf32>
    %c0_63 = arith.constant 0 : index
    %c0_64 = arith.constant 0 : index
    %64 = vector.load %arg9[%c0_63, %c0_64] : memref<1x128xf32, #tpu.memory_space<vmem>>, vector<1x128xf32>
    %65 = vector.broadcast %64 : vector<1x128xf32> to vector<8x128xf32>
    %66 = arith.addf %63, %65 : vector<8x128xf32>
    %cst_65 = arith.constant 0.000000e+00 : f32
    %67 = vector.broadcast %cst_65 : f32 to vector<8x128xf32>
    %68 = arith.maximumf %66, %67 : vector<8x128xf32>
    %c0_66 = arith.constant 0 : index
    %c0_67 = arith.constant 0 : index
    %c0_68 = arith.constant 0 : index
    %c0_69 = arith.constant 0 : index
    %69 = vector.load %arg10[%c0_66, %c0_67, %c0_68, %c0_69] : memref<1x1x8x128xf32, #tpu.memory_space<vmem>>, vector<1x1x8x128xf32>
    %70 = vector.shape_cast %69 : vector<1x1x8x128xf32> to vector<8x128xf32>
    %71 = vector.shape_cast %68 : vector<8x128xf32> to vector<1x1x8x128xf32>
    tpu.vector_store %arg10[%c0_66, %c0_67, %c0_68, %c0_69], %71 {strides = array<i32>} : memref<1x1x8x128xf32, #tpu.memory_space<vmem>>, vector<1x1x8x128xf32>,
    return
  }
  func.func @transform_0(%arg0: i32, %arg1: i32) -> (i32, i32, i32, i32) {
    %c2_i32 = arith.constant 2 : i32
    %0 = arith.muli %c2_i32, %arg1 : i32
    %c0_i32 = arith.constant 0 : i32
    %1 = arith.addi %0, %c0_i32 : i32
    %c0_i32_0 = arith.constant 0 : i32
    %c0_i32_1 = arith.constant 0 : i32
    %c0_i32_2 = arith.constant 0 : i32
    return %arg0, %1, %c0_i32_0, %c0_i32_1 : i32, i32, i32, i32
  }
  func.func @transform_1(%arg0: i32, %arg1: i32) -> (i32, i32, i32, i32) {
    %c2_i32 = arith.constant 2 : i32
    %0 = arith.muli %c2_i32, %arg1 : i32
    %c0_i32 = arith.constant 0 : i32
    %1 = arith.addi %0, %c0_i32 : i32
    %c0_i32_0 = arith.constant 0 : i32
    %c0_i32_1 = arith.constant 0 : i32
    %c0_i32_2 = arith.constant 0 : i32
    return %arg0, %1, %c0_i32_0, %c0_i32_1 : i32, i32, i32, i32
  }
  func.func @transform_2(%arg0: i32, %arg1: i32) -> (i32, i32, i32, i32) {
    %c2_i32 = arith.constant 2 : i32
    %0 = arith.muli %c2_i32, %arg1 : i32
    %c1_i32 = arith.constant 1 : i32
    %1 = arith.addi %0, %c1_i32 : i32
    %c0_i32 = arith.constant 0 : i32
    %c0_i32_0 = arith.constant 0 : i32
    %c0_i32_1 = arith.constant 0 : i32
    return %arg0, %1, %c0_i32, %c0_i32_0 : i32, i32, i32, i32
  }
  func.func @transform_3(%arg0: i32, %arg1: i32) -> (i32, i32, i32, i32) {
    %c2_i32 = arith.constant 2 : i32
    %0 = arith.muli %c2_i32, %arg1 : i32
    %c1_i32 = arith.constant 1 : i32
    %1 = arith.addi %0, %c1_i32 : i32
    %c0_i32 = arith.constant 0 : i32
    %c0_i32_0 = arith.constant 0 : i32
    %c0_i32_1 = arith.constant 0 : i32
    return %arg0, %1, %c0_i32, %c0_i32_0 : i32, i32, i32, i32
  }
  func.func @transform_4(%arg0: i32, %arg1: i32) -> (i32, i32, i32, i32) {
    %c2_i32 = arith.constant 2 : i32
    %0 = arith.muli %c2_i32, %arg1 : i32
    %c2_i32_0 = arith.constant 2 : i32
    %1 = arith.addi %0, %c2_i32_0 : i32
    %c0_i32 = arith.constant 0 : i32
    %c0_i32_1 = arith.constant 0 : i32
    %c0_i32_2 = arith.constant 0 : i32
    return %arg0, %1, %c0_i32, %c0_i32_1 : i32, i32, i32, i32
  }
  func.func @transform_5(%arg0: i32, %arg1: i32) -> (i32, i32, i32, i32) {
    %c2_i32 = arith.constant 2 : i32
    %0 = arith.muli %c2_i32, %arg1 : i32
    %c2_i32_0 = arith.constant 2 : i32
    %1 = arith.addi %0, %c2_i32_0 : i32
    %c0_i32 = arith.constant 0 : i32
    %c0_i32_1 = arith.constant 0 : i32
    %c0_i32_2 = arith.constant 0 : i32
    return %arg0, %1, %c0_i32, %c0_i32_1 : i32, i32, i32, i32
  }
  func.func @transform_6(%arg0: i32, %arg1: i32) -> (i32, i32, i32) {
    %c0_i32 = arith.constant 0 : i32
    %c0_i32_0 = arith.constant 0 : i32
    %c0_i32_1 = arith.constant 0 : i32
    %c0_i32_2 = arith.constant 0 : i32
    return %c0_i32, %c0_i32_0, %c0_i32_1 : i32, i32, i32
  }
  func.func @transform_7(%arg0: i32, %arg1: i32) -> (i32, i32) {
    %c0_i32 = arith.constant 0 : i32
    %c0_i32_0 = arith.constant 0 : i32
    %c0_i32_1 = arith.constant 0 : i32
    return %c0_i32, %c0_i32_0 : i32, i32
  }
  func.func @transform_8(%arg0: i32, %arg1: i32) -> (i32, i32, i32, i32) {
    %c0_i32 = arith.constant 0 : i32
    %c0_i32_0 = arith.constant 0 : i32
    %c0_i32_1 = arith.constant 0 : i32
    return %arg0, %arg1, %c0_i32, %c0_i32_0 : i32, i32, i32, i32
  }
}

module attributes {stable_mosaic.version = 11 : i64} {
  func.func @_down3x3_kernel(%arg0: i32, %arg1: i32, %arg2: memref<1x1x5x128xf32, #tpu.memory_space<vmem>>, %arg3: memref<1x1x5x128xf32, #tpu.memory_space<vmem>>, %arg4: memref<1x1x5x128xf32, #tpu.memory_space<vmem>>, %arg5: memref<1x1x5x128xf32, #tpu.memory_space<vmem>>, %arg6: memref<1x1x5x128xf32, #tpu.memory_space<vmem>>, %arg7: memref<1x1x5x128xf32, #tpu.memory_space<vmem>>, %arg8: memref<9x128x128xbf16, #tpu.memory_space<vmem>>, %arg9: memref<1x128xf32, #tpu.memory_space<vmem>>, %arg10: memref<1x1x4x128xf32, #tpu.memory_space<vmem>>) attributes {dimension_semantics = [#tpu.dimension_semantics<parallel>, #tpu.dimension_semantics<parallel>], iteration_bounds = array<i64: 2, 4>, scalar_prefetch = 0 : i64, scratch_operands = 0 : i64, tpu.core_type = #tpu.core_type<tc>, window_params = [{transform_indices = @transform_0, window_bounds = array<i64: 1, 1, 5, 128>}, {transform_indices = @transform_1, window_bounds = array<i64: 1, 1, 5, 128>}, {transform_indices = @transform_2, window_bounds = array<i64: 1, 1, 5, 128>}, {transform_indices = @transform_3, window_bounds = array<i64: 1, 1, 5, 128>}, {transform_indices = @transform_4, window_bounds = array<i64: 1, 1, 5, 128>}, {transform_indices = @transform_5, window_bounds = array<i64: 1, 1, 5, 128>}, {pipeline_mode = #tpu.pipeline_mode<synchronous>, transform_indices = @transform_6, window_bounds = array<i64: 9, 128, 128>}, {pipeline_mode = #tpu.pipeline_mode<synchronous>, transform_indices = @transform_7, window_bounds = array<i64: 1, 128>}, {transform_indices = @transform_8, window_bounds = array<i64: 1, 1, 4, 128>}]} {
    %cst = arith.constant 0.000000e+00 : f32
    %0 = vector.broadcast %cst : f32 to vector<4x128xf32>
    %c0 = arith.constant 0 : index
    %c0_0 = arith.constant 0 : index
    %c0_1 = arith.constant 0 : index
    %c0_2 = arith.constant 0 : index
    %1 = vector.load %arg2[%c0, %c0_0, %c0_1, %c0_2] : memref<1x1x5x128xf32, #tpu.memory_space<vmem>>, vector<1x1x4x128xf32>
    %2 = vector.shape_cast %1 : vector<1x1x4x128xf32> to vector<4x128xf32>
    %3 = arith.truncf %2 : vector<4x128xf32> to vector<4x128xbf16>
    %c0_3 = arith.constant 0 : index
    %c0_4 = arith.constant 0 : index
    %c0_5 = arith.constant 0 : index
    %c0_6 = arith.constant 0 : index
    %4 = vector.load %arg3[%c0_3, %c0_4, %c0_5, %c0_6] : memref<1x1x5x128xf32, #tpu.memory_space<vmem>>, vector<1x1x4x128xf32>
    %5 = vector.shape_cast %4 : vector<1x1x4x128xf32> to vector<4x128xf32>
    %6 = arith.truncf %5 : vector<4x128xf32> to vector<4x128xbf16>
    %c0_7 = arith.constant 0 : index
    %c0_8 = arith.constant 0 : index
    %c1 = arith.constant 1 : index
    %c0_9 = arith.constant 0 : index
    %7 = vector.load %arg2[%c0_7, %c0_8, %c1, %c0_9] : memref<1x1x5x128xf32, #tpu.memory_space<vmem>>, vector<1x1x4x128xf32>
    %8 = vector.shape_cast %7 : vector<1x1x4x128xf32> to vector<4x128xf32>
    %9 = arith.truncf %8 : vector<4x128xf32> to vector<4x128xbf16>
    %c0_10 = arith.constant 0 : index
    %c0_11 = arith.constant 0 : index
    %c0_12 = arith.constant 0 : index
    %10 = vector.load %arg8[%c0_10, %c0_11, %c0_12] : memref<9x128x128xbf16, #tpu.memory_space<vmem>>, vector<1x128x128xbf16>
    %11 = vector.shape_cast %10 : vector<1x128x128xbf16> to vector<128x128xbf16>
    %cst_13 = arith.constant dense<0.000000e+00> : vector<4x128xf32>
    %12 = tpu.matmul %3, %11, %cst_13 {dimension_numbers = #tpu.dot_dimension_numbers<[1], [0], [0], [1], [0, 0, 1, 1], [], []>} : vector<4x128xbf16>, vector<128x128xbf16>, vector<4x128xf32> -> vector<4x128xf32>
    %13 = arith.addf %0, %12 : vector<4x128xf32>
    %c1_14 = arith.constant 1 : index
    %c0_15 = arith.constant 0 : index
    %c0_16 = arith.constant 0 : index
    %14 = vector.load %arg8[%c1_14, %c0_15, %c0_16] : memref<9x128x128xbf16, #tpu.memory_space<vmem>>, vector<1x128x128xbf16>
    %15 = vector.shape_cast %14 : vector<1x128x128xbf16> to vector<128x128xbf16>
    %cst_17 = arith.constant dense<0.000000e+00> : vector<4x128xf32>
    %16 = tpu.matmul %6, %15, %cst_17 {dimension_numbers = #tpu.dot_dimension_numbers<[1], [0], [0], [1], [0, 0, 1, 1], [], []>} : vector<4x128xbf16>, vector<128x128xbf16>, vector<4x128xf32> -> vector<4x128xf32>
    %17 = arith.addf %13, %16 : vector<4x128xf32>
    %c2 = arith.constant 2 : index
    %c0_18 = arith.constant 0 : index
    %c0_19 = arith.constant 0 : index
    %18 = vector.load %arg8[%c2, %c0_18, %c0_19] : memref<9x128x128xbf16, #tpu.memory_space<vmem>>, vector<1x128x128xbf16>
    %19 = vector.shape_cast %18 : vector<1x128x128xbf16> to vector<128x128xbf16>
    %cst_20 = arith.constant dense<0.000000e+00> : vector<4x128xf32>
    %20 = tpu.matmul %9, %19, %cst_20 {dimension_numbers = #tpu.dot_dimension_numbers<[1], [0], [0], [1], [0, 0, 1, 1], [], []>} : vector<4x128xbf16>, vector<128x128xbf16>, vector<4x128xf32> -> vector<4x128xf32>
    %21 = arith.addf %17, %20 : vector<4x128xf32>
    %c0_21 = arith.constant 0 : index
    %c0_22 = arith.constant 0 : index
    %c0_23 = arith.constant 0 : index
    %c0_24 = arith.constant 0 : index
    %22 = vector.load %arg4[%c0_21, %c0_22, %c0_23, %c0_24] : memref<1x1x5x128xf32, #tpu.memory_space<vmem>>, vector<1x1x4x128xf32>
    %23 = vector.shape_cast %22 : vector<1x1x4x128xf32> to vector<4x128xf32>
    %24 = arith.truncf %23 : vector<4x128xf32> to vector<4x128xbf16>
    %c0_25 = arith.constant 0 : index
    %c0_26 = arith.constant 0 : index
    %c0_27 = arith.constant 0 : index
    %c0_28 = arith.constant 0 : index
    %25 = vector.load %arg5[%c0_25, %c0_26, %c0_27, %c0_28] : memref<1x1x5x128xf32, #tpu.memory_space<vmem>>, vector<1x1x4x128xf32>
    %26 = vector.shape_cast %25 : vector<1x1x4x128xf32> to vector<4x128xf32>
    %27 = arith.truncf %26 : vector<4x128xf32> to vector<4x128xbf16>
    %c0_29 = arith.constant 0 : index
    %c0_30 = arith.constant 0 : index
    %c1_31 = arith.constant 1 : index
    %c0_32 = arith.constant 0 : index
    %28 = vector.load %arg4[%c0_29, %c0_30, %c1_31, %c0_32] : memref<1x1x5x128xf32, #tpu.memory_space<vmem>>, vector<1x1x4x128xf32>
    %29 = vector.shape_cast %28 : vector<1x1x4x128xf32> to vector<4x128xf32>
    %30 = arith.truncf %29 : vector<4x128xf32> to vector<4x128xbf16>
    %c3 = arith.constant 3 : index
    %c0_33 = arith.constant 0 : index
    %c0_34 = arith.constant 0 : index
    %31 = vector.load %arg8[%c3, %c0_33, %c0_34] : memref<9x128x128xbf16, #tpu.memory_space<vmem>>, vector<1x128x128xbf16>
    %32 = vector.shape_cast %31 : vector<1x128x128xbf16> to vector<128x128xbf16>
    %cst_35 = arith.constant dense<0.000000e+00> : vector<4x128xf32>
    %33 = tpu.matmul %24, %32, %cst_35 {dimension_numbers = #tpu.dot_dimension_numbers<[1], [0], [0], [1], [0, 0, 1, 1], [], []>} : vector<4x128xbf16>, vector<128x128xbf16>, vector<4x128xf32> -> vector<4x128xf32>
    %34 = arith.addf %21, %33 : vector<4x128xf32>
    %c4 = arith.constant 4 : index
    %c0_36 = arith.constant 0 : index
    %c0_37 = arith.constant 0 : index
    %35 = vector.load %arg8[%c4, %c0_36, %c0_37] : memref<9x128x128xbf16, #tpu.memory_space<vmem>>, vector<1x128x128xbf16>
    %36 = vector.shape_cast %35 : vector<1x128x128xbf16> to vector<128x128xbf16>
    %cst_38 = arith.constant dense<0.000000e+00> : vector<4x128xf32>
    %37 = tpu.matmul %27, %36, %cst_38 {dimension_numbers = #tpu.dot_dimension_numbers<[1], [0], [0], [1], [0, 0, 1, 1], [], []>} : vector<4x128xbf16>, vector<128x128xbf16>, vector<4x128xf32> -> vector<4x128xf32>
    %38 = arith.addf %34, %37 : vector<4x128xf32>
    %c5 = arith.constant 5 : index
    %c0_39 = arith.constant 0 : index
    %c0_40 = arith.constant 0 : index
    %39 = vector.load %arg8[%c5, %c0_39, %c0_40] : memref<9x128x128xbf16, #tpu.memory_space<vmem>>, vector<1x128x128xbf16>
    %40 = vector.shape_cast %39 : vector<1x128x128xbf16> to vector<128x128xbf16>
    %cst_41 = arith.constant dense<0.000000e+00> : vector<4x128xf32>
    %41 = tpu.matmul %30, %40, %cst_41 {dimension_numbers = #tpu.dot_dimension_numbers<[1], [0], [0], [1], [0, 0, 1, 1], [], []>} : vector<4x128xbf16>, vector<128x128xbf16>, vector<4x128xf32> -> vector<4x128xf32>
    %42 = arith.addf %38, %41 : vector<4x128xf32>
    %c0_42 = arith.constant 0 : index
    %c0_43 = arith.constant 0 : index
    %c0_44 = arith.constant 0 : index
    %c0_45 = arith.constant 0 : index
    %43 = vector.load %arg6[%c0_42, %c0_43, %c0_44, %c0_45] : memref<1x1x5x128xf32, #tpu.memory_space<vmem>>, vector<1x1x4x128xf32>
    %44 = vector.shape_cast %43 : vector<1x1x4x128xf32> to vector<4x128xf32>
    %45 = arith.truncf %44 : vector<4x128xf32> to vector<4x128xbf16>
    %c0_46 = arith.constant 0 : index
    %c0_47 = arith.constant 0 : index
    %c0_48 = arith.constant 0 : index
    %c0_49 = arith.constant 0 : index
    %46 = vector.load %arg7[%c0_46, %c0_47, %c0_48, %c0_49] : memref<1x1x5x128xf32, #tpu.memory_space<vmem>>, vector<1x1x4x128xf32>
    %47 = vector.shape_cast %46 : vector<1x1x4x128xf32> to vector<4x128xf32>
    %48 = arith.truncf %47 : vector<4x128xf32> to vector<4x128xbf16>
    %c0_50 = arith.constant 0 : index
    %c0_51 = arith.constant 0 : index
    %c1_52 = arith.constant 1 : index
    %c0_53 = arith.constant 0 : index
    %49 = vector.load %arg6[%c0_50, %c0_51, %c1_52, %c0_53] : memref<1x1x5x128xf32, #tpu.memory_space<vmem>>, vector<1x1x4x128xf32>
    %50 = vector.shape_cast %49 : vector<1x1x4x128xf32> to vector<4x128xf32>
    %51 = arith.truncf %50 : vector<4x128xf32> to vector<4x128xbf16>
    %c6 = arith.constant 6 : index
    %c0_54 = arith.constant 0 : index
    %c0_55 = arith.constant 0 : index
    %52 = vector.load %arg8[%c6, %c0_54, %c0_55] : memref<9x128x128xbf16, #tpu.memory_space<vmem>>, vector<1x128x128xbf16>
    %53 = vector.shape_cast %52 : vector<1x128x128xbf16> to vector<128x128xbf16>
    %cst_56 = arith.constant dense<0.000000e+00> : vector<4x128xf32>
    %54 = tpu.matmul %45, %53, %cst_56 {dimension_numbers = #tpu.dot_dimension_numbers<[1], [0], [0], [1], [0, 0, 1, 1], [], []>} : vector<4x128xbf16>, vector<128x128xbf16>, vector<4x128xf32> -> vector<4x128xf32>
    %55 = arith.addf %42, %54 : vector<4x128xf32>
    %c7 = arith.constant 7 : index
    %c0_57 = arith.constant 0 : index
    %c0_58 = arith.constant 0 : index
    %56 = vector.load %arg8[%c7, %c0_57, %c0_58] : memref<9x128x128xbf16, #tpu.memory_space<vmem>>, vector<1x128x128xbf16>
    %57 = vector.shape_cast %56 : vector<1x128x128xbf16> to vector<128x128xbf16>
    %cst_59 = arith.constant dense<0.000000e+00> : vector<4x128xf32>
    %58 = tpu.matmul %48, %57, %cst_59 {dimension_numbers = #tpu.dot_dimension_numbers<[1], [0], [0], [1], [0, 0, 1, 1], [], []>} : vector<4x128xbf16>, vector<128x128xbf16>, vector<4x128xf32> -> vector<4x128xf32>
    %59 = arith.addf %55, %58 : vector<4x128xf32>
    %c8 = arith.constant 8 : index
    %c0_60 = arith.constant 0 : index
    %c0_61 = arith.constant 0 : index
    %60 = vector.load %arg8[%c8, %c0_60, %c0_61] : memref<9x128x128xbf16, #tpu.memory_space<vmem>>, vector<1x128x128xbf16>
    %61 = vector.shape_cast %60 : vector<1x128x128xbf16> to vector<128x128xbf16>
    %cst_62 = arith.constant dense<0.000000e+00> : vector<4x128xf32>
    %62 = tpu.matmul %51, %61, %cst_62 {dimension_numbers = #tpu.dot_dimension_numbers<[1], [0], [0], [1], [0, 0, 1, 1], [], []>} : vector<4x128xbf16>, vector<128x128xbf16>, vector<4x128xf32> -> vector<4x128xf32>
    %63 = arith.addf %59, %62 : vector<4x128xf32>
    %c0_63 = arith.constant 0 : index
    %c0_64 = arith.constant 0 : index
    %64 = vector.load %arg9[%c0_63, %c0_64] : memref<1x128xf32, #tpu.memory_space<vmem>>, vector<1x128xf32>
    %65 = vector.broadcast %64 : vector<1x128xf32> to vector<4x128xf32>
    %66 = arith.addf %63, %65 : vector<4x128xf32>
    %cst_65 = arith.constant 0.000000e+00 : f32
    %67 = vector.broadcast %cst_65 : f32 to vector<4x128xf32>
    %68 = arith.maximumf %66, %67 : vector<4x128xf32>
    %c0_66 = arith.constant 0 : index
    %c0_67 = arith.constant 0 : index
    %c0_68 = arith.constant 0 : index
    %c0_69 = arith.constant 0 : index
    %69 = vector.load %arg10[%c0_66, %c0_67, %c0_68, %c0_69] : memref<1x1x4x128xf32, #tpu.memory_space<vmem>>, vector<1x1x4x128xf32>
    %70 = vector.shape_cast %69 : vector<1x1x4x128xf32> to vector<4x128xf32>
    %71 = vector.shape_cast %68 : vector<4x128xf32> to vector<1x1x4x128xf32>
    tpu.vector_store %arg10[%c0_66, %c0_67, %c0_68, %c0_69], %71 {strides = array<i32>} : memref<1x1x4x128xf32, #tpu.memory_space<vmem>>, vector<1x1x4x128xf32>,
    return
  }
  func.func @transform_0(%arg0: i32, %arg1: i32) -> (i32, i32, i32, i32) {
    %c2_i32 = arith.constant 2 : i32
    %0 = arith.muli %c2_i32, %arg1 : i32
    %c0_i32 = arith.constant 0 : i32
    %1 = arith.addi %0, %c0_i32 : i32
    %c0_i32_0 = arith.constant 0 : i32
    %c0_i32_1 = arith.constant 0 : i32
    %c0_i32_2 = arith.constant 0 : i32
    return %arg0, %1, %c0_i32_0, %c0_i32_1 : i32, i32, i32, i32
  }
  func.func @transform_1(%arg0: i32, %arg1: i32) -> (i32, i32, i32, i32) {
    %c2_i32 = arith.constant 2 : i32
    %0 = arith.muli %c2_i32, %arg1 : i32
    %c0_i32 = arith.constant 0 : i32
    %1 = arith.addi %0, %c0_i32 : i32
    %c0_i32_0 = arith.constant 0 : i32
    %c0_i32_1 = arith.constant 0 : i32
    %c0_i32_2 = arith.constant 0 : i32
    return %arg0, %1, %c0_i32_0, %c0_i32_1 : i32, i32, i32, i32
  }
  func.func @transform_2(%arg0: i32, %arg1: i32) -> (i32, i32, i32, i32) {
    %c2_i32 = arith.constant 2 : i32
    %0 = arith.muli %c2_i32, %arg1 : i32
    %c1_i32 = arith.constant 1 : i32
    %1 = arith.addi %0, %c1_i32 : i32
    %c0_i32 = arith.constant 0 : i32
    %c0_i32_0 = arith.constant 0 : i32
    %c0_i32_1 = arith.constant 0 : i32
    return %arg0, %1, %c0_i32, %c0_i32_0 : i32, i32, i32, i32
  }
  func.func @transform_3(%arg0: i32, %arg1: i32) -> (i32, i32, i32, i32) {
    %c2_i32 = arith.constant 2 : i32
    %0 = arith.muli %c2_i32, %arg1 : i32
    %c1_i32 = arith.constant 1 : i32
    %1 = arith.addi %0, %c1_i32 : i32
    %c0_i32 = arith.constant 0 : i32
    %c0_i32_0 = arith.constant 0 : i32
    %c0_i32_1 = arith.constant 0 : i32
    return %arg0, %1, %c0_i32, %c0_i32_0 : i32, i32, i32, i32
  }
  func.func @transform_4(%arg0: i32, %arg1: i32) -> (i32, i32, i32, i32) {
    %c2_i32 = arith.constant 2 : i32
    %0 = arith.muli %c2_i32, %arg1 : i32
    %c2_i32_0 = arith.constant 2 : i32
    %1 = arith.addi %0, %c2_i32_0 : i32
    %c0_i32 = arith.constant 0 : i32
    %c0_i32_1 = arith.constant 0 : i32
    %c0_i32_2 = arith.constant 0 : i32
    return %arg0, %1, %c0_i32, %c0_i32_1 : i32, i32, i32, i32
  }
  func.func @transform_5(%arg0: i32, %arg1: i32) -> (i32, i32, i32, i32) {
    %c2_i32 = arith.constant 2 : i32
    %0 = arith.muli %c2_i32, %arg1 : i32
    %c2_i32_0 = arith.constant 2 : i32
    %1 = arith.addi %0, %c2_i32_0 : i32
    %c0_i32 = arith.constant 0 : i32
    %c0_i32_1 = arith.constant 0 : i32
    %c0_i32_2 = arith.constant 0 : i32
    return %arg0, %1, %c0_i32, %c0_i32_1 : i32, i32, i32, i32
  }
  func.func @transform_6(%arg0: i32, %arg1: i32) -> (i32, i32, i32) {
    %c0_i32 = arith.constant 0 : i32
    %c0_i32_0 = arith.constant 0 : i32
    %c0_i32_1 = arith.constant 0 : i32
    %c0_i32_2 = arith.constant 0 : i32
    return %c0_i32, %c0_i32_0, %c0_i32_1 : i32, i32, i32
  }
  func.func @transform_7(%arg0: i32, %arg1: i32) -> (i32, i32) {
    %c0_i32 = arith.constant 0 : i32
    %c0_i32_0 = arith.constant 0 : i32
    %c0_i32_1 = arith.constant 0 : i32
    return %c0_i32, %c0_i32_0 : i32, i32
  }
  func.func @transform_8(%arg0: i32, %arg1: i32) -> (i32, i32, i32, i32) {
    %c0_i32 = arith.constant 0 : i32
    %c0_i32_0 = arith.constant 0 : i32
    %c0_i32_1 = arith.constant 0 : i32
    return %arg0, %arg1, %c0_i32, %c0_i32_0 : i32, i32, i32, i32
  }
}

module attributes {stable_mosaic.version = 11 : i64} {
  func.func @_matmul2_bias_relu_kernel(%arg0: i32, %arg1: memref<16x128xf32, #tpu.memory_space<vmem>>, %arg2: memref<16x128xf32, #tpu.memory_space<vmem>>, %arg3: memref<128x128xbf16, #tpu.memory_space<vmem>>, %arg4: memref<128x128xbf16, #tpu.memory_space<vmem>>, %arg5: memref<1x128xf32, #tpu.memory_space<vmem>>, %arg6: memref<16x128xf32, #tpu.memory_space<vmem>>) attributes {dimension_semantics = [#tpu.dimension_semantics<parallel>], iteration_bounds = array<i64: 2>, scalar_prefetch = 0 : i64, scratch_operands = 0 : i64, tpu.core_type = #tpu.core_type<tc>, window_params = [{transform_indices = @transform_0, window_bounds = array<i64: 16, 128>}, {transform_indices = @transform_1, window_bounds = array<i64: 16, 128>}, {pipeline_mode = #tpu.pipeline_mode<synchronous>, transform_indices = @transform_2, window_bounds = array<i64: 128, 128>}, {pipeline_mode = #tpu.pipeline_mode<synchronous>, transform_indices = @transform_3, window_bounds = array<i64: 128, 128>}, {pipeline_mode = #tpu.pipeline_mode<synchronous>, transform_indices = @transform_4, window_bounds = array<i64: 1, 128>}, {transform_indices = @transform_5, window_bounds = array<i64: 16, 128>}]} {
    %c0 = arith.constant 0 : index
    %c0_0 = arith.constant 0 : index
    %0 = vector.load %arg1[%c0, %c0_0] : memref<16x128xf32, #tpu.memory_space<vmem>>, vector<16x128xf32>
    %1 = arith.truncf %0 : vector<16x128xf32> to vector<16x128xbf16>
    %c0_1 = arith.constant 0 : index
    %c0_2 = arith.constant 0 : index
    %2 = vector.load %arg2[%c0_1, %c0_2] : memref<16x128xf32, #tpu.memory_space<vmem>>, vector<16x128xf32>
    %3 = arith.truncf %2 : vector<16x128xf32> to vector<16x128xbf16>
    %c0_3 = arith.constant 0 : index
    %c0_4 = arith.constant 0 : index
    %4 = vector.load %arg3[%c0_3, %c0_4] : memref<128x128xbf16, #tpu.memory_space<vmem>>, vector<128x128xbf16>
    %cst = arith.constant dense<0.000000e+00> : vector<16x128xf32>
    %5 = tpu.matmul %1, %4, %cst {dimension_numbers = #tpu.dot_dimension_numbers<[1], [0], [0], [1], [0, 0, 1, 1], [], []>} : vector<16x128xbf16>, vector<128x128xbf16>, vector<16x128xf32> -> vector<16x128xf32>
    %c0_5 = arith.constant 0 : index
    %c0_6 = arith.constant 0 : index
    %6 = vector.load %arg4[%c0_5, %c0_6] : memref<128x128xbf16, #tpu.memory_space<vmem>>, vector<128x128xbf16>
    %cst_7 = arith.constant dense<0.000000e+00> : vector<16x128xf32>
    %7 = tpu.matmul %3, %6, %cst_7 {dimension_numbers = #tpu.dot_dimension_numbers<[1], [0], [0], [1], [0, 0, 1, 1], [], []>} : vector<16x128xbf16>, vector<128x128xbf16>, vector<16x128xf32> -> vector<16x128xf32>
    %8 = arith.addf %5, %7 : vector<16x128xf32>
    %c0_8 = arith.constant 0 : index
    %c0_9 = arith.constant 0 : index
    %9 = vector.load %arg5[%c0_8, %c0_9] : memref<1x128xf32, #tpu.memory_space<vmem>>, vector<1x128xf32>
    %10 = vector.broadcast %9 : vector<1x128xf32> to vector<16x128xf32>
    %11 = arith.addf %8, %10 : vector<16x128xf32>
    %cst_10 = arith.constant 0.000000e+00 : f32
    %12 = vector.broadcast %cst_10 : f32 to vector<16x128xf32>
    %13 = arith.maximumf %11, %12 : vector<16x128xf32>
    %c0_11 = arith.constant 0 : index
    %c0_12 = arith.constant 0 : index
    %14 = vector.load %arg6[%c0_11, %c0_12] : memref<16x128xf32, #tpu.memory_space<vmem>>, vector<16x128xf32>
    tpu.vector_store %arg6[%c0_11, %c0_12], %13 {strides = array<i32>} : memref<16x128xf32, #tpu.memory_space<vmem>>, vector<16x128xf32>,
    return
  }
  func.func @transform_0(%arg0: i32) -> (i32, i32) {
    %c0_i32 = arith.constant 0 : i32
    %c0_i32_0 = arith.constant 0 : i32
    return %arg0, %c0_i32 : i32, i32
  }
  func.func @transform_1(%arg0: i32) -> (i32, i32) {
    %c0_i32 = arith.constant 0 : i32
    %c0_i32_0 = arith.constant 0 : i32
    return %arg0, %c0_i32 : i32, i32
  }
  func.func @transform_2(%arg0: i32) -> (i32, i32) {
    %c0_i32 = arith.constant 0 : i32
    %c0_i32_0 = arith.constant 0 : i32
    %c0_i32_1 = arith.constant 0 : i32
    return %c0_i32, %c0_i32_0 : i32, i32
  }
  func.func @transform_3(%arg0: i32) -> (i32, i32) {
    %c0_i32 = arith.constant 0 : i32
    %c0_i32_0 = arith.constant 0 : i32
    %c0_i32_1 = arith.constant 0 : i32
    return %c0_i32, %c0_i32_0 : i32, i32
  }
  func.func @transform_4(%arg0: i32) -> (i32, i32) {
    %c0_i32 = arith.constant 0 : i32
    %c0_i32_0 = arith.constant 0 : i32
    %c0_i32_1 = arith.constant 0 : i32
    return %c0_i32, %c0_i32_0 : i32, i32
  }
  func.func @transform_5(%arg0: i32) -> (i32, i32) {
    %c0_i32 = arith.constant 0 : i32
    %c0_i32_0 = arith.constant 0 : i32
    return %arg0, %c0_i32 : i32, i32
  }
}

</mosaic_0001>

<llo_original>
// kernel: bi_propagate_forward.8
$region0: #{bi_propagate_forward.8}
  #allocation0 [shape = 'u32[]', space=smem, size = 0x4, offset = 0x4, fixed_abs, tag = 'smem constant byte address 0x4 - core index']
  #allocation1 [shape = 'u32[72,128]{1,0:T(1,128)}', space=vmem, size = 0x9000, scoped, tag = 'internal scratch']
  %s0 = inlined_call_operand.vmem [shape: f32[32,128], index: 0, kind: input, shape index: {}]
  %s1 = inlined_call_operand.vmem [shape: bf16[128,128], index: 1, kind: input, shape index: {}]
  %s2 = inlined_call_operand.vmem [shape: f32[32,128], index: 2, kind: output, shape index: {}]
  %s3 = sld [smem:[#allocation0]]
  $region41: #{bi_propagate_forward.8} parent=0
    _
  %s5 = ssub.s32 1, %s3
  %s6 = scalar_select 0, %s5, %s3
  loop: start=0, step=1, limit=4
  $region2: #{bi_propagate_forward.8} parent=0 // loop_pre_header
    _
  $region3: #{bi_propagate_forward.8} parent=0 // loop_header
    %s8 = sphi 0, %s12
    %p9 = scmp.ge.s32.totalorder %s8, 4
    %s18 = sphi 0, %s20
    %s21 = sphi 0, %s18
    %s22 = sphi 0, %s21
    %s38 = sphi 0, %s22
    %s42 = sphi 0, %s42
    %s44 = sphi 0, %s42
    %s45 = sphi 0, %s44
    %s59 = sphi 0, %s45
    %s65 = sphi 0, %s67
    %s68 = sphi 0, %s65
    %s69 = sphi 0, %s68
    %s85 = sphi 0, %s69
  $region4: #{bi_propagate_forward.8} parent=0 // loop_header_branch
    %11 = sbr.rel (%p9) target = $region8
  $region5: #{bi_propagate_forward.8} parent=0 // loop_body
    %s13 = ssub.s32 %s8, 1
    %s14 = ssub.s32 %s8, 2
    %s15 = sadd.s32 %s8, 1
    %s16 = ssub.s32 %s8, %s15
    %p17 = scmp.eq.s32.totalorder %s16, 0
    %s19 = sadd.s32 %s18, 1
    %s20 = scalar_select %p17, %s18, %s19
    %p23 = pneg %p17
    %p24 = scmp.eq.s32.totalorder %s8, 1
    %p25 = por %p23, %p24
    %p26 = scmp.ne.s32.totalorder %s18, %s21
    %p27 = scmp.eq.s32.totalorder %s8, 0
    %p28 = por %p26, %p27
    %p29 = scmp.ne.s32.totalorder %s18, %s21
    %p30 = scmp.eq.s32.totalorder %s13, 1
    %p31 = por %p29, %p30
    %p32 = scmp.ne.s32.totalorder %s21, %s22
    %p33 = scmp.eq.s32.totalorder %s13, 0
    %p34 = por %p32, %p33
    %p35 = scmp.ne.s32.totalorder %s21, %s22
    %p36 = scmp.eq.s32.totalorder %s14, 1
    %p37 = por %p35, %p36
    %p39 = scmp.ne.s32.totalorder %s22, %s38
    %p40 = scmp.eq.s32.totalorder %s14, 0
    %p41 = por %p39, %p40
    %s43 = sadd.s32 %s42, 1
    %p46 = scmp.eq.s32.totalorder %s8, 1
    %p47 = scmp.ne.s32.totalorder %s42, %s44
    %p48 = scmp.eq.s32.totalorder %s8, 0
    %p49 = por %p47, %p48
    %p50 = scmp.ne.s32.totalorder %s42, %s44
    %p51 = scmp.eq.s32.totalorder %s13, 1
    %p52 = por %p50, %p51
    %p53 = scmp.ne.s32.totalorder %s44, %s45
    %p54 = scmp.eq.s32.totalorder %s13, 0
    %p55 = por %p53, %p54
    %p56 = scmp.ne.s32.totalorder %s44, %s45
    %p57 = scmp.eq.s32.totalorder %s14, 1
    %p58 = por %p56, %p57
    %p60 = scmp.ne.s32.totalorder %s45, %s59
    %p61 = scmp.eq.s32.totalorder %s14, 0
    %p62 = por %p60, %p61
    %s63 = ssub.s32 %s8, %s15
    %p64 = scmp.eq.s32.totalorder %s63, 0
    %s66 = sadd.s32 %s65, 1
    %s67 = scalar_select %p64, %s65, %s66
    %p70 = pneg %p64
    %p71 = scmp.eq.s32.totalorder %s8, 1
    %p72 = por %p70, %p71
    %p73 = scmp.ne.s32.totalorder %s65, %s68
    %p74 = scmp.eq.s32.totalorder %s8, 0
    %p75 = por %p73, %p74
    %p76 = scmp.ne.s32.totalorder %s65, %s68
    %p77 = scmp.eq.s32.totalorder %s13, 1
    %p78 = por %p76, %p77
    %p79 = scmp.ne.s32.totalorder %s68, %s69
    %p80 = scmp.eq.s32.totalorder %s13, 0
    %p81 = por %p79, %p80
    %p82 = scmp.ne.s32.totalorder %s68, %s69
    %p83 = scmp.eq.s32.totalorder %s14, 1
    %p84 = por %p82, %p83
    %p86 = scmp.ne.s32.totalorder %s69, %s85
    %p87 = scmp.eq.s32.totalorder %s14, 0
    %p88 = por %p86, %p87
    %p89 = scmp.le.s32.totalorder 1, %s8
    %p90 = scmp.lt.s32.totalorder %s8, 3
    %p91 = pnand %p89, %p90
    %p92 = pneg %p91
    // Predicated region
    $region9: #{bi_propagate_forward.8} parent=5 // pred_check
      _
    $region10: #{bi_propagate_forward.8} parent=5 // pred_check_branch
      %94 = sbr.rel (%p91) target = $region12
    $region11: #{bi_propagate_forward.8} parent=5 // pred_region
      %s95 = ssub.s32 %s8, 1
      // Predicated region
      $region13: #{bi_propagate_forward.8} parent=11 // pred_check
        %p96 = pneg %p55
      $region14: #{bi_propagate_forward.8} parent=11 // pred_check_branch
        %98 = sbr.rel (%p96) target = $region16
      $region15: #{bi_propagate_forward.8} parent=11 // pred_region
        _
      $region16: #{bi_propagate_forward.8} parent=11 // pred_fallthru
        _
    $region12: #{bi_propagate_forward.8} parent=5 // pred_fallthru
      _
    %p99 = scmp.lt.s32.totalorder %s8, 2
    // Predicated region
    $region17: #{bi_propagate_forward.8} parent=5 // pred_check
      %p100 = pneg %p99
    $region18: #{bi_propagate_forward.8} parent=5 // pred_check_branch
      %102 = sbr.rel (%p100) target = $region20
    $region19: #{bi_propagate_forward.8} parent=5 // pred_region
      // Predicated region
      $region21: #{bi_propagate_forward.8} parent=19 // pred_check
        %p103 = pneg %p28
      $region22: #{bi_propagate_forward.8} parent=19 // pred_check_branch
        %105 = sbr.rel (%p103) target = $region24
      $region23: #{bi_propagate_forward.8} parent=19 // pred_region
        %s106 = smul.u32 2, %s8
        %p107 = scmp.lt.s32.totalorder %s106, 3
        %s108 = scalar_select %p107, %s106, 3
        %s109 = smul.addr %s108, 8
        %s110 = scalar_lea.vmem %s0, %s109
        %s111 = smul.u32 2, %s8
      $region24: #{bi_propagate_forward.8} parent=19 // pred_fallthru
        _
    $region20: #{bi_propagate_forward.8} parent=5 // pred_fallthru
      _
    %p112 = scmp.le.s32.totalorder 1, %s8
    %p113 = scmp.lt.s32.totalorder %s8, 3
    %p114 = pnand %p112, %p113
    %p115 = pneg %p114
    // Predicated region
    $region25: #{bi_propagate_forward.8} parent=5 // pred_check
      _
    $region26: #{bi_propagate_forward.8} parent=5 // pred_check_branch
      %117 = sbr.rel (%p114) target = $region28
    $region27: #{bi_propagate_forward.8} parent=5 // pred_region
      %s118 = ssub.s32 %s8, 1
      %s119 = smul.u32 2, %s13
      %p120 = scmp.lt.s32.totalorder %s119, 3
      %s121 = scalar_select %p120, %s119, 3
      %s122 = smul.addr %s121, 8
      %s123 = scalar_lea.vmem %s0, %s122
      %p124 = pneg %p34
      %p125 = pneg %p31
      %p126 = pneg %p55
      %p127 = pneg %p52
      %p128 = pneg %p81
      %p129 = pneg %p78
      %s130 = smul.u32 2, %s13
      %p131 = scmp.lt.s32.totalorder %s130, 3
      %s132 = scalar_select %p131, %s130, 3
      %s133 = smul.addr %s132, 8
      %s134 = scalar_lea.vmem %s2, %s133
      %s135 = smul.u32 2, %s13
      %p136 = scmp.lt.s32.totalorder %s135, 3
      %s137 = scalar_select %p136, %s135, 3
      %s138 = smul.addr %s137, 8
      %s139 = scalar_lea.vmem %s0, %s138
      %s140 = smul.u32 2, %s13
      %s141 = smul.u32 2, %s13
      %p142 = scmp.lt.s32.totalorder %s141, 3
      %s143 = scalar_select %p142, %s141, 3
      %s144 = smul.addr %s143, 8
      %s145 = scalar_lea.vmem %s2, %s144
      %s146 = smul.u32 2, %s13
      %v147 = vld [vmem:[%s139] sm:$0xff]
      %v148 = vld [vmem:[%s139 + $0x8] sm:$0xff]
      %v149 = vpack.c.bf16 %v148, %v147
      %v150 = vld [vmem:[%s1] sm:$0xf]
      %v151 = vld [vmem:[%s1 + $0x4] sm:$0xf]
      %v152 = vld [vmem:[%s1 + $0x8] sm:$0xf]
      %v153 = vld [vmem:[%s1 + $0xc] sm:$0xf]
      %v154 = vld [vmem:[%s1 + $0x10] sm:$0xf]
      %v155 = vld [vmem:[%s1 + $0x14] sm:$0xf]
      %v156 = vld [vmem:[%s1 + $0x18] sm:$0xf]
      %v157 = vld [vmem:[%s1 + $0x1c] sm:$0xf]
      %v158 = vld [vmem:[%s1 + $0x20] sm:$0xf]
      %v159 = vld [vmem:[%s1 + $0x24] sm:$0xf]
      %v160 = vld [vmem:[%s1 + $0x28] sm:$0xf]
      %v161 = vld [vmem:[%s1 + $0x2c] sm:$0xf]
      %v162 = vld [vmem:[%s1 + $0x30] sm:$0xf]
      %v163 = vld [vmem:[%s1 + $0x34] sm:$0xf]
      %v164 = vld [vmem:[%s1 + $0x38] sm:$0xf]
      %v165 = vld [vmem:[%s1 + $0x3c] sm:$0xf]
      %v182 = vunpack.c.l.b16 %v150
      %v183 = vunpack.c.l.b16 %v151
      %v184 = vunpack.c.l.b16 %v152
      %v185 = vunpack.c.l.b16 %v153
      %v186 = vunpack.c.l.b16 %v154
      %v187 = vunpack.c.l.b16 %v155
      %v188 = vunpack.c.l.b16 %v156
      %v189 = vunpack.c.l.b16 %v157
      %v190 = vunpack.c.l.b16 %v158
      %v191 = vunpack.c.l.b16 %v159
      %v192 = vunpack.c.l.b16 %v160
      %v193 = vunpack.c.l.b16 %v161
      %v194 = vunpack.c.l.b16 %v162
      %v195 = vunpack.c.l.b16 %v163
      %v196 = vunpack.c.l.b16 %v164
      %v197 = vunpack.c.l.b16 %v165
      %v198 = vpack.c.b16 %v183, %v182
      %v199 = vpack.c.b16 %v185, %v184
      %v200 = vpack.c.b16 %v187, %v186
      %v201 = vpack.c.b16 %v189, %v188
      %v202 = vpack.c.b16 %v191, %v190
      %v203 = vpack.c.b16 %v193, %v192
      %v204 = vpack.c.b16 %v195, %v194
      %v205 = vpack.c.b16 %v197, %v196
      %214 = vmatpush.bf16.msra.mxu0 %v205
      %215 = vmatpush.bf16.msra.mxu0 %v204
      %216 = vmatpush.bf16.msra.mxu0 %v203
      %217 = vmatpush.bf16.msra.mxu0 %v202
      %218 = vmatpush.bf16.msra.mxu0 %v201
      %219 = vmatpush.bf16.msra.mxu0 %v200
      %220 = vmatpush.bf16.msra.mxu0 %v199
      %221 = vmatpush.bf16.msra.mxu0 %v198
      %222 = vmatmul.bf16.gmra.mxu0 %v149
      %v223 = vpop.f32.mrf.mxu0
      %v224 = vadd.f32 0.0, %v223
      %v225 = vpop.f32.mrf.mxu0
      %v226 = vadd.f32 0.0, %v225
      %227 = vdwg.mxu0
      %228 = vst [vmem:[%s145] sm:$0xff] %v224
      %229 = vst [vmem:[%s145 + $0x8] sm:$0xff] %v226
      %s230 = smul.u32 2, %s13
      %p231 = scmp.lt.s32.totalorder %s230, 3
      %s232 = scalar_select %p231, %s230, 3
      %s233 = smul.addr %s232, 8
      %s234 = scalar_lea.vmem %s2, %s233
      // Predicated region
      $region29: #{bi_propagate_forward.8} parent=27 // pred_check
        %p235 = pneg %p78
      $region30: #{bi_propagate_forward.8} parent=27 // pred_check_branch
        %237 = sbr.rel (%p235) target = $region32
      $region31: #{bi_propagate_forward.8} parent=27 // pred_region
        %s238 = smul.u32 2, %s13
      $region32: #{bi_propagate_forward.8} parent=27 // pred_fallthru
        _
    $region28: #{bi_propagate_forward.8} parent=5 // pred_fallthru
      _
    %p239 = scmp.le.s32.totalorder 2, %s8
    // Predicated region
    $region33: #{bi_propagate_forward.8} parent=5 // pred_check
      %p240 = pneg %p239
    $region34: #{bi_propagate_forward.8} parent=5 // pred_check_branch
      %242 = sbr.rel (%p240) target = $region36
    $region35: #{bi_propagate_forward.8} parent=5 // pred_region
      %s243 = ssub.s32 %s8, 2
      // Predicated region
      $region37: #{bi_propagate_forward.8} parent=35 // pred_check
        %p244 = pneg %p84
      $region38: #{bi_propagate_forward.8} parent=35 // pred_check_branch
        %246 = sbr.rel (%p244) target = $region40
      $region39: #{bi_propagate_forward.8} parent=35 // pred_region
        %s247 = smul.u32 2, %s14
        %p248 = scmp.lt.s32.totalorder %s247, 3
        %s249 = scalar_select %p248, %s247, 3
        %s250 = smul.addr %s249, 8
        %s251 = scalar_lea.vmem %s2, %s250
      $region40: #{bi_propagate_forward.8} parent=35 // pred_fallthru
        _
    $region36: #{bi_propagate_forward.8} parent=5 // pred_fallthru
      _
  $region6: #{bi_propagate_forward.8} parent=0 // loop_footer
    %s12 = sadd.s32 1, %s8
  $region7: #{bi_propagate_forward.8} parent=0 // loop_footer_branch
    %7 = sbr.rel target = $region3
  $region8: #{bi_propagate_forward.8} parent=0 // loop_exit
    _

// kernel: bi_propagate_forward.10
$region0: #{bi_propagate_forward.10}
  #allocation0 [shape = 'u32[]', space=smem, size = 0x4, offset = 0x4, fixed_abs, tag = 'smem constant byte address 0x4 - core index']
  #allocation1 [shape = 'u32[72,128]{1,0:T(1,128)}', space=vmem, size = 0x9000, scoped, tag = 'internal scratch']
  %s0 = inlined_call_operand.vmem [shape: f32[128,128], index: 0, kind: input, shape index: {}]
  %s1 = inlined_call_operand.vmem [shape: bf16[128,128], index: 1, kind: input, shape index: {}]
  %s2 = inlined_call_operand.vmem [shape: f32[128,128], index: 2, kind: output, shape index: {}]
  %s3 = sld [smem:[#allocation0]]
  $region41: #{bi_propagate_forward.10} parent=0
    _
  %s5 = ssub.s32 1, %s3
  %s6 = scalar_select 0, %s5, %s3
  loop: start=0, step=1, limit=4
  $region2: #{bi_propagate_forward.10} parent=0 // loop_pre_header
    _
  $region3: #{bi_propagate_forward.10} parent=0 // loop_header
    %s8 = sphi 0, %s12
    %p9 = scmp.ge.s32.totalorder %s8, 4
    %s18 = sphi 0, %s20
    %s21 = sphi 0, %s18
    %s22 = sphi 0, %s21
    %s38 = sphi 0, %s22
    %s42 = sphi 0, %s42
    %s44 = sphi 0, %s42
    %s45 = sphi 0, %s44
    %s59 = sphi 0, %s45
    %s65 = sphi 0, %s67
    %s68 = sphi 0, %s65
    %s69 = sphi 0, %s68
    %s85 = sphi 0, %s69
  $region4: #{bi_propagate_forward.10} parent=0 // loop_header_branch
    %11 = sbr.rel (%p9) target = $region8
  $region5: #{bi_propagate_forward.10} parent=0 // loop_body
    %s13 = ssub.s32 %s8, 1
    %s14 = ssub.s32 %s8, 2
    %s15 = sadd.s32 %s8, 1
    %s16 = ssub.s32 %s8, %s15
    %p17 = scmp.eq.s32.totalorder %s16, 0
    %s19 = sadd.s32 %s18, 1
    %s20 = scalar_select %p17, %s18, %s19
    %p23 = pneg %p17
    %p24 = scmp.eq.s32.totalorder %s8, 1
    %p25 = por %p23, %p24
    %p26 = scmp.ne.s32.totalorder %s18, %s21
    %p27 = scmp.eq.s32.totalorder %s8, 0
    %p28 = por %p26, %p27
    %p29 = scmp.ne.s32.totalorder %s18, %s21
    %p30 = scmp.eq.s32.totalorder %s13, 1
    %p31 = por %p29, %p30
    %p32 = scmp.ne.s32.totalorder %s21, %s22
    %p33 = scmp.eq.s32.totalorder %s13, 0
    %p34 = por %p32, %p33
    %p35 = scmp.ne.s32.totalorder %s21, %s22
    %p36 = scmp.eq.s32.totalorder %s14, 1
    %p37 = por %p35, %p36
    %p39 = scmp.ne.s32.totalorder %s22, %s38
    %p40 = scmp.eq.s32.totalorder %s14, 0
    %p41 = por %p39, %p40
    %s43 = sadd.s32 %s42, 1
    %p46 = scmp.eq.s32.totalorder %s8, 1
    %p47 = scmp.ne.s32.totalorder %s42, %s44
    %p48 = scmp.eq.s32.totalorder %s8, 0
    %p49 = por %p47, %p48
    %p50 = scmp.ne.s32.totalorder %s42, %s44
    %p51 = scmp.eq.s32.totalorder %s13, 1
    %p52 = por %p50, %p51
    %p53 = scmp.ne.s32.totalorder %s44, %s45
    %p54 = scmp.eq.s32.totalorder %s13, 0
    %p55 = por %p53, %p54
    %p56 = scmp.ne.s32.totalorder %s44, %s45
    %p57 = scmp.eq.s32.totalorder %s14, 1
    %p58 = por %p56, %p57
    %p60 = scmp.ne.s32.totalorder %s45, %s59
    %p61 = scmp.eq.s32.totalorder %s14, 0
    %p62 = por %p60, %p61
    %s63 = ssub.s32 %s8, %s15
    %p64 = scmp.eq.s32.totalorder %s63, 0
    %s66 = sadd.s32 %s65, 1
    %s67 = scalar_select %p64, %s65, %s66
    %p70 = pneg %p64
    %p71 = scmp.eq.s32.totalorder %s8, 1
    %p72 = por %p70, %p71
    %p73 = scmp.ne.s32.totalorder %s65, %s68
    %p74 = scmp.eq.s32.totalorder %s8, 0
    %p75 = por %p73, %p74
    %p76 = scmp.ne.s32.totalorder %s65, %s68
    %p77 = scmp.eq.s32.totalorder %s13, 1
    %p78 = por %p76, %p77
    %p79 = scmp.ne.s32.totalorder %s68, %s69
    %p80 = scmp.eq.s32.totalorder %s13, 0
    %p81 = por %p79, %p80
    %p82 = scmp.ne.s32.totalorder %s68, %s69
    %p83 = scmp.eq.s32.totalorder %s14, 1
    %p84 = por %p82, %p83
    %p86 = scmp.ne.s32.totalorder %s69, %s85
    %p87 = scmp.eq.s32.totalorder %s14, 0
    %p88 = por %p86, %p87
    %p89 = scmp.le.s32.totalorder 1, %s8
    %p90 = scmp.lt.s32.totalorder %s8, 3
    %p91 = pnand %p89, %p90
    %p92 = pneg %p91
    // Predicated region
    $region9: #{bi_propagate_forward.10} parent=5 // pred_check
      _
    $region10: #{bi_propagate_forward.10} parent=5 // pred_check_branch
      %94 = sbr.rel (%p91) target = $region12
    $region11: #{bi_propagate_forward.10} parent=5 // pred_region
      %s95 = ssub.s32 %s8, 1
      // Predicated region
      $region13: #{bi_propagate_forward.10} parent=11 // pred_check
        %p96 = pneg %p55
      $region14: #{bi_propagate_forward.10} parent=11 // pred_check_branch
        %98 = sbr.rel (%p96) target = $region16
      $region15: #{bi_propagate_forward.10} parent=11 // pred_region
        _
      $region16: #{bi_propagate_forward.10} parent=11 // pred_fallthru
        _
    $region12: #{bi_propagate_forward.10} parent=5 // pred_fallthru
      _
    %p99 = scmp.lt.s32.totalorder %s8, 2
    // Predicated region
    $region17: #{bi_propagate_forward.10} parent=5 // pred_check
      %p100 = pneg %p99
    $region18: #{bi_propagate_forward.10} parent=5 // pred_check_branch
      %102 = sbr.rel (%p100) target = $region20
    $region19: #{bi_propagate_forward.10} parent=5 // pred_region
      // Predicated region
      $region21: #{bi_propagate_forward.10} parent=19 // pred_check
        %p103 = pneg %p28
      $region22: #{bi_propagate_forward.10} parent=19 // pred_check_branch
        %105 = sbr.rel (%p103) target = $region24
      $region23: #{bi_propagate_forward.10} parent=19 // pred_region
        %s106 = smul.u32 8, %s8
        %p107 = scmp.lt.s32.totalorder %s106, 15
        %s108 = scalar_select %p107, %s106, 15
        %s109 = smul.addr %s108, 8
        %s110 = scalar_lea.vmem %s0, %s109
        %s111 = smul.u32 8, %s8
      $region24: #{bi_propagate_forward.10} parent=19 // pred_fallthru
        _
    $region20: #{bi_propagate_forward.10} parent=5 // pred_fallthru
      _
    %p112 = scmp.le.s32.totalorder 1, %s8
    %p113 = scmp.lt.s32.totalorder %s8, 3
    %p114 = pnand %p112, %p113
    %p115 = pneg %p114
    // Predicated region
    $region25: #{bi_propagate_forward.10} parent=5 // pred_check
      _
    $region26: #{bi_propagate_forward.10} parent=5 // pred_check_branch
      %117 = sbr.rel (%p114) target = $region28
    $region27: #{bi_propagate_forward.10} parent=5 // pred_region
      %s118 = ssub.s32 %s8, 1
      %s119 = smul.u32 8, %s13
      %p120 = scmp.lt.s32.totalorder %s119, 15
      %s121 = scalar_select %p120, %s119, 15
      %s122 = smul.addr %s121, 8
      %s123 = scalar_lea.vmem %s0, %s122
      %p124 = pneg %p34
      %p125 = pneg %p31
      %p126 = pneg %p55
      %p127 = pneg %p52
      %p128 = pneg %p81
      %p129 = pneg %p78
      %s130 = smul.u32 8, %s13
      %p131 = scmp.lt.s32.totalorder %s130, 15
      %s132 = scalar_select %p131, %s130, 15
      %s133 = smul.addr %s132, 8
      %s134 = scalar_lea.vmem %s2, %s133
      %s135 = smul.u32 8, %s13
      %p136 = scmp.lt.s32.totalorder %s135, 15
      %s137 = scalar_select %p136, %s135, 15
      %s138 = smul.addr %s137, 8
      %s139 = scalar_lea.vmem %s0, %s138
      %s140 = smul.u32 8, %s13
      %s141 = smul.u32 8, %s13
      %p142 = scmp.lt.s32.totalorder %s141, 15
      %s143 = scalar_select %p142, %s141, 15
      %s144 = smul.addr %s143, 8
      %s145 = scalar_lea.vmem %s2, %s144
      %s146 = smul.u32 8, %s13
      %v147 = vld [vmem:[%s139] sm:$0xff]
      %v148 = vld [vmem:[%s139 + $0x8] sm:$0xff]
      %v149 = vld [vmem:[%s139 + $0x10] sm:$0xff]
      %v150 = vld [vmem:[%s139 + $0x18] sm:$0xff]
      %v151 = vld [vmem:[%s139 + $0x20] sm:$0xff]
      %v152 = vld [vmem:[%s139 + $0x28] sm:$0xff]
      %v153 = vld [vmem:[%s139 + $0x30] sm:$0xff]
      %v154 = vld [vmem:[%s139 + $0x38] sm:$0xff]
      %v155 = vpack.c.bf16 %v148, %v147
      %v156 = vpack.c.bf16 %v150, %v149
      %v157 = vpack.c.bf16 %v152, %v151
      %v158 = vpack.c.bf16 %v154, %v153
      %v159 = vld [vmem:[%s1] sm:$0xf]
      %v160 = vld [vmem:[%s1 + $0x4] sm:$0xf]
      %v161 = vld [vmem:[%s1 + $0x8] sm:$0xf]
      %v162 = vld [vmem:[%s1 + $0xc] sm:$0xf]
      %v163 = vld [vmem:[%s1 + $0x10] sm:$0xf]
      %v164 = vld [vmem:[%s1 + $0x14] sm:$0xf]
      %v165 = vld [vmem:[%s1 + $0x18] sm:$0xf]
      %v166 = vld [vmem:[%s1 + $0x1c] sm:$0xf]
      %v167 = vld [vmem:[%s1 + $0x20] sm:$0xf]
      %v168 = vld [vmem:[%s1 + $0x24] sm:$0xf]
      %v169 = vld [vmem:[%s1 + $0x28] sm:$0xf]
      %v170 = vld [vmem:[%s1 + $0x2c] sm:$0xf]
      %v171 = vld [vmem:[%s1 + $0x30] sm:$0xf]
      %v172 = vld [vmem:[%s1 + $0x34] sm:$0xf]
      %v173 = vld [vmem:[%s1 + $0x38] sm:$0xf]
      %v174 = vld [vmem:[%s1 + $0x3c] sm:$0xf]
      %v191 = vunpack.c.l.b16 %v159
      %v192 = vunpack.c.l.b16 %v160
      %v193 = vunpack.c.l.b16 %v161
      %v194 = vunpack.c.l.b16 %v162
      %v195 = vunpack.c.l.b16 %v163
      %v196 = vunpack.c.l.b16 %v164
      %v197 = vunpack.c.l.b16 %v165
      %v198 = vunpack.c.l.b16 %v166
      %v199 = vunpack.c.l.b16 %v167
      %v200 = vunpack.c.l.b16 %v168
      %v201 = vunpack.c.l.b16 %v169
      %v202 = vunpack.c.l.b16 %v170
      %v203 = vunpack.c.l.b16 %v171
      %v204 = vunpack.c.l.b16 %v172
      %v205 = vunpack.c.l.b16 %v173
      %v206 = vunpack.c.l.b16 %v174
      %v207 = vpack.c.b16 %v192, %v191
      %v208 = vpack.c.b16 %v194, %v193
      %v209 = vpack.c.b16 %v196, %v195
      %v210 = vpack.c.b16 %v198, %v197
      %v211 = vpack.c.b16 %v200, %v199
      %v212 = vpack.c.b16 %v202, %v201
      %v213 = vpack.c.b16 %v204, %v203
      %v214 = vpack.c.b16 %v206, %v205
      %223 = vmatpush.bf16.msra.mxu0 %v214
      %224 = vmatpush.bf16.msra.mxu0 %v213
      %225 = vmatpush.bf16.msra.mxu0 %v212
      %226 = vmatpush.bf16.msra.mxu0 %v211
      %227 = vmatpush.bf16.msra.mxu0 %v210
      %228 = vmatpush.bf16.msra.mxu0 %v209
      %229 = vmatpush.bf16.msra.mxu0 %v208
      %230 = vmatpush.bf16.msra.mxu0 %v207
      %231 = vmatmul.bf16.gmra.mxu0 %v155
      %v232 = vpop.f32.mrf.mxu0
      %v233 = vadd.f32 0.0, %v232
      %v234 = vpop.f32.mrf.mxu0
      %v235 = vadd.f32 0.0, %v234
      %236 = vmatmul.bf16.gmra.mxu0 %v156
      %v237 = vpop.f32.mrf.mxu0
      %v238 = vadd.f32 0.0, %v237
      %v239 = vpop.f32.mrf.mxu0
      %v240 = vadd.f32 0.0, %v239
      %241 = vmatmul.bf16.gmra.mxu0 %v157
      %v242 = vpop.f32.mrf.mxu0
      %v243 = vadd.f32 0.0, %v242
      %v244 = vpop.f32.mrf.mxu0
      %v245 = vadd.f32 0.0, %v244
      %246 = vmatmul.bf16.gmra.mxu0 %v158
      %v247 = vpop.f32.mrf.mxu0
      %v248 = vadd.f32 0.0, %v247
      %v249 = vpop.f32.mrf.mxu0
      %v250 = vadd.f32 0.0, %v249
      %251 = vdwg.mxu0
      %252 = vst [vmem:[%s145] sm:$0xff] %v233
      %253 = vst [vmem:[%s145 + $0x8] sm:$0xff] %v235
      %254 = vst [vmem:[%s145 + $0x10] sm:$0xff] %v238
      %255 = vst [vmem:[%s145 + $0x18] sm:$0xff] %v240
      %256 = vst [vmem:[%s145 + $0x20] sm:$0xff] %v243
      %257 = vst [vmem:[%s145 + $0x28] sm:$0xff] %v245
      %258 = vst [vmem:[%s145 + $0x30] sm:$0xff] %v248
      %259 = vst [vmem:[%s145 + $0x38] sm:$0xff] %v250
      %s260 = smul.u32 8, %s13
      %p261 = scmp.lt.s32.totalorder %s260, 15
      %s262 = scalar_select %p261, %s260, 15
      %s263 = smul.addr %s262, 8
      %s264 = scalar_lea.vmem %s2, %s263
      // Predicated region
      $region29: #{bi_propagate_forward.10} parent=27 // pred_check
        %p265 = pneg %p78
      $region30: #{bi_propagate_forward.10} parent=27 // pred_check_branch
        %267 = sbr.rel (%p265) target = $region32
      $region31: #{bi_propagate_forward.10} parent=27 // pred_region
        %s268 = smul.u32 8, %s13
      $region32: #{bi_propagate_forward.10} parent=27 // pred_fallthru
        _
    $region28: #{bi_propagate_forward.10} parent=5 // pred_fallthru
      _
    %p269 = scmp.le.s32.totalorder 2, %s8
    // Predicated region
    $region33: #{bi_propagate_forward.10} parent=5 // pred_check
      %p270 = pneg %p269
    $region34: #{bi_propagate_forward.10} parent=5 // pred_check_branch
      %272 = sbr.rel (%p270) target = $region36
    $region35: #{bi_propagate_forward.10} parent=5 // pred_region
      %s273 = ssub.s32 %s8, 2
      // Predicated region
      $region37: #{bi_propagate_forward.10} parent=35 // pred_check
        %p274 = pneg %p84
      $region38: #{bi_propagate_forward.10} parent=35 // pred_check_branch
        %276 = sbr.rel (%p274) target = $region40
      $region39: #{bi_propagate_forward.10} parent=35 // pred_region
        %s277 = smul.u32 8, %s14
        %p278 = scmp.lt.s32.totalorder %s277, 15
        %s279 = scalar_select %p278, %s277, 15
        %s280 = smul.addr %s279, 8
        %s281 = scalar_lea.vmem %s2, %s280
      $region40: #{bi_propagate_forward.10} parent=35 // pred_fallthru
        _
    $region36: #{bi_propagate_forward.10} parent=5 // pred_fallthru
      _
  $region6: #{bi_propagate_forward.10} parent=0 // loop_footer
    %s12 = sadd.s32 1, %s8
  $region7: #{bi_propagate_forward.10} parent=0 // loop_footer_branch
    %7 = sbr.rel target = $region3
  $region8: #{bi_propagate_forward.10} parent=0 // loop_exit
    _

// kernel: bi_propagate_forward.9
$region0: #{bi_propagate_forward.9}
  #allocation0 [shape = 'u32[]', space=smem, size = 0x4, offset = 0x4, fixed_abs, tag = 'smem constant byte address 0x4 - core index']
  #allocation1 [shape = 'u32[72,128]{1,0:T(1,128)}', space=vmem, size = 0x9000, scoped, tag = 'internal scratch']
  %s0 = inlined_call_operand.vmem [shape: f32[128,128], index: 0, kind: input, shape index: {}]
  %s1 = inlined_call_operand.vmem [shape: f32[128,128], index: 1, kind: input, shape index: {}]
  %s2 = inlined_call_operand.vmem [shape: bf16[128,128], index: 2, kind: input, shape index: {}]
  %s3 = inlined_call_operand.vmem [shape: f32[1,128], index: 3, kind: input, shape index: {}]
  %s4 = inlined_call_operand.vmem [shape: f32[128,128], index: 4, kind: output, shape index: {}]
  %s5 = sld [smem:[#allocation0]]
  $region49: #{bi_propagate_forward.9} parent=0
    _
  %s7 = ssub.s32 1, %s5
  %s8 = scalar_select 0, %s7, %s5
  loop: start=0, step=1, limit=4
  $region2: #{bi_propagate_forward.9} parent=0 // loop_pre_header
    _
  $region3: #{bi_propagate_forward.9} parent=0 // loop_header
    %s10 = sphi 0, %s14
    %p11 = scmp.ge.s32.totalorder %s10, 4
    %s20 = sphi 0, %s22
    %s23 = sphi 0, %s20
    %s24 = sphi 0, %s23
    %s40 = sphi 0, %s24
    %s46 = sphi 0, %s48
    %s49 = sphi 0, %s46
    %s50 = sphi 0, %s49
    %s66 = sphi 0, %s50
    %s70 = sphi 0, %s70
    %s72 = sphi 0, %s70
    %s73 = sphi 0, %s72
    %s87 = sphi 0, %s73
    %s91 = sphi 0, %s91
    %s93 = sphi 0, %s91
    %s94 = sphi 0, %s93
    %s108 = sphi 0, %s94
    %s114 = sphi 0, %s116
    %s117 = sphi 0, %s114
    %s118 = sphi 0, %s117
    %s134 = sphi 0, %s118
  $region4: #{bi_propagate_forward.9} parent=0 // loop_header_branch
    %13 = sbr.rel (%p11) target = $region8
  $region5: #{bi_propagate_forward.9} parent=0 // loop_body
    %s15 = ssub.s32 %s10, 1
    %s16 = ssub.s32 %s10, 2
    %s17 = sadd.s32 %s10, 1
    %s18 = ssub.s32 %s10, %s17
    %p19 = scmp.eq.s32.totalorder %s18, 0
    %s21 = sadd.s32 %s20, 1
    %s22 = scalar_select %p19, %s20, %s21
    %p25 = pneg %p19
    %p26 = scmp.eq.s32.totalorder %s10, 1
    %p27 = por %p25, %p26
    %p28 = scmp.ne.s32.totalorder %s20, %s23
    %p29 = scmp.eq.s32.totalorder %s10, 0
    %p30 = por %p28, %p29
    %p31 = scmp.ne.s32.totalorder %s20, %s23
    %p32 = scmp.eq.s32.totalorder %s15, 1
    %p33 = por %p31, %p32
    %p34 = scmp.ne.s32.totalorder %s23, %s24
    %p35 = scmp.eq.s32.totalorder %s15, 0
    %p36 = por %p34, %p35
    %p37 = scmp.ne.s32.totalorder %s23, %s24
    %p38 = scmp.eq.s32.totalorder %s16, 1
    %p39 = por %p37, %p38
    %p41 = scmp.ne.s32.totalorder %s24, %s40
    %p42 = scmp.eq.s32.totalorder %s16, 0
    %p43 = por %p41, %p42
    %s44 = ssub.s32 %s10, %s17
    %p45 = scmp.eq.s32.totalorder %s44, 0
    %s47 = sadd.s32 %s46, 1
    %s48 = scalar_select %p45, %s46, %s47
    %p51 = pneg %p45
    %p52 = scmp.eq.s32.totalorder %s10, 1
    %p53 = por %p51, %p52
    %p54 = scmp.ne.s32.totalorder %s46, %s49
    %p55 = scmp.eq.s32.totalorder %s10, 0
    %p56 = por %p54, %p55
    %p57 = scmp.ne.s32.totalorder %s46, %s49
    %p58 = scmp.eq.s32.totalorder %s15, 1
    %p59 = por %p57, %p58
    %p60 = scmp.ne.s32.totalorder %s49, %s50
    %p61 = scmp.eq.s32.totalorder %s15, 0
    %p62 = por %p60, %p61
    %p63 = scmp.ne.s32.totalorder %s49, %s50
    %p64 = scmp.eq.s32.totalorder %s16, 1
    %p65 = por %p63, %p64
    %p67 = scmp.ne.s32.totalorder %s50, %s66
    %p68 = scmp.eq.s32.totalorder %s16, 0
    %p69 = por %p67, %p68
    %s71 = sadd.s32 %s70, 1
    %p74 = scmp.eq.s32.totalorder %s10, 1
    %p75 = scmp.ne.s32.totalorder %s70, %s72
    %p76 = scmp.eq.s32.totalorder %s10, 0
    %p77 = por %p75, %p76
    %p78 = scmp.ne.s32.totalorder %s70, %s72
    %p79 = scmp.eq.s32.totalorder %s15, 1
    %p80 = por %p78, %p79
    %p81 = scmp.ne.s32.totalorder %s72, %s73
    %p82 = scmp.eq.s32.totalorder %s15, 0
    %p83 = por %p81, %p82
    %p84 = scmp.ne.s32.totalorder %s72, %s73
    %p85 = scmp.eq.s32.totalorder %s16, 1
    %p86 = por %p84, %p85
    %p88 = scmp.ne.s32.totalorder %s73, %s87
    %p89 = scmp.eq.s32.totalorder %s16, 0
    %p90 = por %p88, %p89
    %s92 = sadd.s32 %s91, 1
    %p95 = scmp.eq.s32.totalorder %s10, 1
    %p96 = scmp.ne.s32.totalorder %s91, %s93
    %p97 = scmp.eq.s32.totalorder %s10, 0
    %p98 = por %p96, %p97
    %p99 = scmp.ne.s32.totalorder %s91, %s93
    %p100 = scmp.eq.s32.totalorder %s15, 1
    %p101 = por %p99, %p100
    %p102 = scmp.ne.s32.totalorder %s93, %s94
    %p103 = scmp.eq.s32.totalorder %s15, 0
    %p104 = por %p102, %p103
    %p105 = scmp.ne.s32.totalorder %s93, %s94
    %p106 = scmp.eq.s32.totalorder %s16, 1
    %p107 = por %p105, %p106
    %p109 = scmp.ne.s32.totalorder %s94, %s108
    %p110 = scmp.eq.s32.totalorder %s16, 0
    %p111 = por %p109, %p110
    %s112 = ssub.s32 %s10, %s17
    %p113 = scmp.eq.s32.totalorder %s112, 0
    %s115 = sadd.s32 %s114, 1
    %s116 = scalar_select %p113, %s114, %s115
    %p119 = pneg %p113
    %p120 = scmp.eq.s32.totalorder %s10, 1
    %p121 = por %p119, %p120
    %p122 = scmp.ne.s32.totalorder %s114, %s117
    %p123 = scmp.eq.s32.totalorder %s10, 0
    %p124 = por %p122, %p123
    %p125 = scmp.ne.s32.totalorder %s114, %s117
    %p126 = scmp.eq.s32.totalorder %s15, 1
    %p127 = por %p125, %p126
    %p128 = scmp.ne.s32.totalorder %s117, %s118
    %p129 = scmp.eq.s32.totalorder %s15, 0
    %p130 = por %p128, %p129
    %p131 = scmp.ne.s32.totalorder %s117, %s118
    %p132 = scmp.eq.s32.totalorder %s16, 1
    %p133 = por %p131, %p132
    %p135 = scmp.ne.s32.totalorder %s118, %s134
    %p136 = scmp.eq.s32.totalorder %s16, 0
    %p137 = por %p135, %p136
    %p138 = scmp.le.s32.totalorder 1, %s10
    %p139 = scmp.lt.s32.totalorder %s10, 3
    %p140 = pnand %p138, %p139
    %p141 = pneg %p140
    // Predicated region
    $region9: #{bi_propagate_forward.9} parent=5 // pred_check
      _
    $region10: #{bi_propagate_forward.9} parent=5 // pred_check_branch
      %143 = sbr.rel (%p140) target = $region12
    $region11: #{bi_propagate_forward.9} parent=5 // pred_region
      %s144 = ssub.s32 %s10, 1
      // Predicated region
      $region13: #{bi_propagate_forward.9} parent=11 // pred_check
        %p145 = pneg %p83
      $region14: #{bi_propagate_forward.9} parent=11 // pred_check_branch
        %147 = sbr.rel (%p145) target = $region16
      $region15: #{bi_propagate_forward.9} parent=11 // pred_region
        _
      $region16: #{bi_propagate_forward.9} parent=11 // pred_fallthru
        _
      // Predicated region
      $region17: #{bi_propagate_forward.9} parent=11 // pred_check
        %p148 = pneg %p104
      $region18: #{bi_propagate_forward.9} parent=11 // pred_check_branch
        %150 = sbr.rel (%p148) target = $region20
      $region19: #{bi_propagate_forward.9} parent=11 // pred_region
        _
      $region20: #{bi_propagate_forward.9} parent=11 // pred_fallthru
        _
    $region12: #{bi_propagate_forward.9} parent=5 // pred_fallthru
      _
    %p151 = scmp.lt.s32.totalorder %s10, 2
    // Predicated region
    $region21: #{bi_propagate_forward.9} parent=5 // pred_check
      %p152 = pneg %p151
    $region22: #{bi_propagate_forward.9} parent=5 // pred_check_branch
      %154 = sbr.rel (%p152) target = $region24
    $region23: #{bi_propagate_forward.9} parent=5 // pred_region
      // Predicated region
      $region25: #{bi_propagate_forward.9} parent=23 // pred_check
        %p155 = pneg %p30
      $region26: #{bi_propagate_forward.9} parent=23 // pred_check_branch
        %157 = sbr.rel (%p155) target = $region28
      $region27: #{bi_propagate_forward.9} parent=23 // pred_region
        %s158 = smul.u32 8, %s10
        %p159 = scmp.lt.s32.totalorder %s158, 15
        %s160 = scalar_select %p159, %s158, 15
        %s161 = smul.addr %s160, 8
        %s162 = scalar_lea.vmem %s0, %s161
        %s163 = smul.u32 8, %s10
      $region28: #{bi_propagate_forward.9} parent=23 // pred_fallthru
        _
      // Predicated region
      $region29: #{bi_propagate_forward.9} parent=23 // pred_check
        %p164 = pneg %p56
      $region30: #{bi_propagate_forward.9} parent=23 // pred_check_branch
        %166 = sbr.rel (%p164) target = $region32
      $region31: #{bi_propagate_forward.9} parent=23 // pred_region
        %s167 = smul.u32 8, %s10
        %p168 = scmp.lt.s32.totalorder %s167, 15
        %s169 = scalar_select %p168, %s167, 15
        %s170 = smul.addr %s169, 8
        %s171 = scalar_lea.vmem %s1, %s170
        %s172 = smul.u32 8, %s10
      $region32: #{bi_propagate_forward.9} parent=23 // pred_fallthru
        _
    $region24: #{bi_propagate_forward.9} parent=5 // pred_fallthru
      _
    %p173 = scmp.le.s32.totalorder 1, %s10
    %p174 = scmp.lt.s32.totalorder %s10, 3
    %p175 = pnand %p173, %p174
    %p176 = pneg %p175
    // Predicated region
    $region33: #{bi_propagate_forward.9} parent=5 // pred_check
      _
    $region34: #{bi_propagate_forward.9} parent=5 // pred_check_branch
      %178 = sbr.rel (%p175) target = $region36
    $region35: #{bi_propagate_forward.9} parent=5 // pred_region
      %s179 = ssub.s32 %s10, 1
      %s180 = smul.u32 8, %s15
      %p181 = scmp.lt.s32.totalorder %s180, 15
      %s182 = scalar_select %p181, %s180, 15
      %s183 = smul.addr %s182, 8
      %s184 = scalar_lea.vmem %s0, %s183
      %p185 = pneg %p36
      %p186 = pneg %p33
      %s187 = smul.u32 8, %s15
      %p188 = scmp.lt.s32.totalorder %s187, 15
      %s189 = scalar_select %p188, %s187, 15
      %s190 = smul.addr %s189, 8
      %s191 = scalar_lea.vmem %s1, %s190
      %p192 = pneg %p62
      %p193 = pneg %p59
      %p194 = pneg %p83
      %p195 = pneg %p80
      %p196 = pneg %p104
      %p197 = pneg %p101
      %p198 = pneg %p130
      %p199 = pneg %p127
      %s200 = smul.u32 8, %s15
      %p201 = scmp.lt.s32.totalorder %s200, 15
      %s202 = scalar_select %p201, %s200, 15
      %s203 = smul.addr %s202, 8
      %s204 = scalar_lea.vmem %s4, %s203
      %s205 = smul.u32 8, %s15
      %p206 = scmp.lt.s32.totalorder %s205, 15
      %s207 = scalar_select %p206, %s205, 15
      %s208 = smul.addr %s207, 8
      %s209 = scalar_lea.vmem %s0, %s208
      %s210 = smul.u32 8, %s15
      %s211 = smul.u32 8, %s15
      %p212 = scmp.lt.s32.totalorder %s211, 15
      %s213 = scalar_select %p212, %s211, 15
      %s214 = smul.addr %s213, 8
      %s215 = scalar_lea.vmem %s1, %s214
      %s216 = smul.u32 8, %s15
      %s217 = smul.u32 8, %s15
      %p218 = scmp.lt.s32.totalorder %s217, 15
      %s219 = scalar_select %p218, %s217, 15
      %s220 = smul.addr %s219, 8
      %s221 = scalar_lea.vmem %s4, %s220
      %s222 = smul.u32 8, %s15
      %v223 = vld [vmem:[%s209] sm:$0xff]
      %v224 = vld [vmem:[%s209 + $0x8] sm:$0xff]
      %v225 = vld [vmem:[%s209 + $0x10] sm:$0xff]
      %v226 = vld [vmem:[%s209 + $0x18] sm:$0xff]
      %v227 = vld [vmem:[%s209 + $0x20] sm:$0xff]
      %v228 = vld [vmem:[%s209 + $0x28] sm:$0xff]
      %v229 = vld [vmem:[%s209 + $0x30] sm:$0xff]
      %v230 = vld [vmem:[%s209 + $0x38] sm:$0xff]
      %v231 = vpack.c.bf16 %v224, %v223
      %v232 = vpack.c.bf16 %v226, %v225
      %v233 = vpack.c.bf16 %v228, %v227
      %v234 = vpack.c.bf16 %v230, %v229
      %v235 = vld [vmem:[%s2] sm:$0xf]
      %v236 = vld [vmem:[%s2 + $0x4] sm:$0xf]
      %v237 = vld [vmem:[%s2 + $0x8] sm:$0xf]
      %v238 = vld [vmem:[%s2 + $0xc] sm:$0xf]
      %v239 = vld [vmem:[%s2 + $0x10] sm:$0xf]
      %v240 = vld [vmem:[%s2 + $0x14] sm:$0xf]
      %v241 = vld [vmem:[%s2 + $0x18] sm:$0xf]
      %v242 = vld [vmem:[%s2 + $0x1c] sm:$0xf]
      %v243 = vld [vmem:[%s2 + $0x20] sm:$0xf]
      %v244 = vld [vmem:[%s2 + $0x24] sm:$0xf]
      %v245 = vld [vmem:[%s2 + $0x28] sm:$0xf]
      %v246 = vld [vmem:[%s2 + $0x2c] sm:$0xf]
      %v247 = vld [vmem:[%s2 + $0x30] sm:$0xf]
      %v248 = vld [vmem:[%s2 + $0x34] sm:$0xf]
      %v249 = vld [vmem:[%s2 + $0x38] sm:$0xf]
      %v250 = vld [vmem:[%s2 + $0x3c] sm:$0xf]
      %v251 = vld [vmem:[%s215] sm:$0xff]
      %v252 = vld [vmem:[%s215 + $0x8] sm:$0xff]
      %v253 = vld [vmem:[%s215 + $0x10] sm:$0xff]
      %v254 = vld [vmem:[%s215 + $0x18] sm:$0xff]
      %v255 = vld [vmem:[%s215 + $0x20] sm:$0xff]
      %v256 = vld [vmem:[%s215 + $0x28] sm:$0xff]
      %v257 = vld [vmem:[%s215 + $0x30] sm:$0xff]
      %v258 = vld [vmem:[%s215 + $0x38] sm:$0xff]
      %v275 = vunpack.c.l.b16 %v235
      %v276 = vunpack.c.l.b16 %v236
      %v277 = vunpack.c.l.b16 %v237
      %v278 = vunpack.c.l.b16 %v238
      %v279 = vunpack.c.l.b16 %v239
      %v280 = vunpack.c.l.b16 %v240
      %v281 = vunpack.c.l.b16 %v241
      %v282 = vunpack.c.l.b16 %v242
      %v283 = vunpack.c.l.b16 %v243
      %v284 = vunpack.c.l.b16 %v244
      %v285 = vunpack.c.l.b16 %v245
      %v286 = vunpack.c.l.b16 %v246
      %v287 = vunpack.c.l.b16 %v247
      %v288 = vunpack.c.l.b16 %v248
      %v289 = vunpack.c.l.b16 %v249
      %v290 = vunpack.c.l.b16 %v250
      %v291 = vpack.c.b16 %v276, %v275
      %v292 = vpack.c.b16 %v278, %v277
      %v293 = vpack.c.b16 %v280, %v279
      %v294 = vpack.c.b16 %v282, %v281
      %v295 = vpack.c.b16 %v284, %v283
      %v296 = vpack.c.b16 %v286, %v285
      %v297 = vpack.c.b16 %v288, %v287
      %v298 = vpack.c.b16 %v290, %v289
      %307 = vmatpush.bf16.msra.mxu0 %v298
      %308 = vmatpush.bf16.msra.mxu0 %v297
      %309 = vmatpush.bf16.msra.mxu0 %v296
      %310 = vmatpush.bf16.msra.mxu0 %v295
      %311 = vmatpush.bf16.msra.mxu0 %v294
      %312 = vmatpush.bf16.msra.mxu0 %v293
      %313 = vmatpush.bf16.msra.mxu0 %v292
      %314 = vmatpush.bf16.msra.mxu0 %v291
      %315 = vmatmul.bf16.gmra.mxu0 %v231
      %v316 = vpop.f32.mrf.mxu0
      %v317 = vadd.f32 %v251, %v316
      %v318 = vpop.f32.mrf.mxu0
      %v319 = vadd.f32 %v252, %v318
      %320 = vmatmul.bf16.gmra.mxu0 %v232
      %v321 = vpop.f32.mrf.mxu0
      %v322 = vadd.f32 %v253, %v321
      %v323 = vpop.f32.mrf.mxu0
      %v324 = vadd.f32 %v254, %v323
      %325 = vmatmul.bf16.gmra.mxu0 %v233
      %v326 = vpop.f32.mrf.mxu0
      %v327 = vadd.f32 %v255, %v326
      %v328 = vpop.f32.mrf.mxu0
      %v329 = vadd.f32 %v256, %v328
      %330 = vmatmul.bf16.gmra.mxu0 %v234
      %v331 = vpop.f32.mrf.mxu0
      %v332 = vadd.f32 %v257, %v331
      %v333 = vpop.f32.mrf.mxu0
      %v334 = vadd.f32 %v258, %v333
      %335 = vdwg.mxu0
      %v336 = vld [vmem:[%s3] sm:$0x1]
      %v338 = vperm.slane %v336, 0
      %v340 = vadd.f32 %v317, %v338
      %v341 = vadd.f32 %v319, %v338
      %v342 = vadd.f32 %v322, %v338
      %v343 = vadd.f32 %v324, %v338
      %v344 = vadd.f32 %v327, %v338
      %v345 = vadd.f32 %v329, %v338
      %v346 = vadd.f32 %v332, %v338
      %v347 = vadd.f32 %v334, %v338
      %v348 = vmax.f32 %v340, 0.0
      %v349 = vmax.f32 %v341, 0.0
      %v350 = vmax.f32 %v342, 0.0
      %v351 = vmax.f32 %v343, 0.0
      %v352 = vmax.f32 %v344, 0.0
      %v353 = vmax.f32 %v345, 0.0
      %v354 = vmax.f32 %v346, 0.0
      %v355 = vmax.f32 %v347, 0.0
      %356 = vst [vmem:[%s221] sm:$0xff] %v348
      %357 = vst [vmem:[%s221 + $0x8] sm:$0xff] %v349
      %358 = vst [vmem:[%s221 + $0x10] sm:$0xff] %v350
      %359 = vst [vmem:[%s221 + $0x18] sm:$0xff] %v351
      %360 = vst [vmem:[%s221 + $0x20] sm:$0xff] %v352
      %361 = vst [vmem:[%s221 + $0x28] sm:$0xff] %v353
      %362 = vst [vmem:[%s221 + $0x30] sm:$0xff] %v354
      %363 = vst [vmem:[%s221 + $0x38] sm:$0xff] %v355
      %s364 = smul.u32 8, %s15
      %p365 = scmp.lt.s32.totalorder %s364, 15
      %s366 = scalar_select %p365, %s364, 15
      %s367 = smul.addr %s366, 8
      %s368 = scalar_lea.vmem %s4, %s367
      // Predicated region
      $region37: #{bi_propagate_forward.9} parent=35 // pred_check
        %p369 = pneg %p127
      $region38: #{bi_propagate_forward.9} parent=35 // pred_check_branch
        %371 = sbr.rel (%p369) target = $region40
      $region39: #{bi_propagate_forward.9} parent=35 // pred_region
        %s372 = smul.u32 8, %s15
      $region40: #{bi_propagate_forward.9} parent=35 // pred_fallthru
        _
    $region36: #{bi_propagate_forward.9} parent=5 // pred_fallthru
      _
    %p373 = scmp.le.s32.totalorder 2, %s10
    // Predicated region
    $region41: #{bi_propagate_forward.9} parent=5 // pred_check
      %p374 = pneg %p373
    $region42: #{bi_propagate_forward.9} parent=5 // pred_check_branch
      %376 = sbr.rel (%p374) target = $region44
    $region43: #{bi_propagate_forward.9} parent=5 // pred_region
      %s377 = ssub.s32 %s10, 2
      // Predicated region
      $region45: #{bi_propagate_forward.9} parent=43 // pred_check
        %p378 = pneg %p133
      $region46: #{bi_propagate_forward.9} parent=43 // pred_check_branch
        %380 = sbr.rel (%p378) target = $region48
      $region47: #{bi_propagate_forward.9} parent=43 // pred_region
        %s381 = smul.u32 8, %s16
        %p382 = scmp.lt.s32.totalorder %s381, 15
        %s383 = scalar_select %p382, %s381, 15
        %s384 = smul.addr %s383, 8
        %s385 = scalar_lea.vmem %s4, %s384
      $region48: #{bi_propagate_forward.9} parent=43 // pred_fallthru
        _
    $region44: #{bi_propagate_forward.9} parent=5 // pred_fallthru
      _
  $region6: #{bi_propagate_forward.9} parent=0 // loop_footer
    %s14 = sadd.s32 1, %s10
  $region7: #{bi_propagate_forward.9} parent=0 // loop_footer_branch
    %9 = sbr.rel target = $region3
  $region8: #{bi_propagate_forward.9} parent=0 // loop_exit
    _

// kernel: bi_propagate_forward.11
$region0: #{bi_propagate_forward.11}
  #allocation0 [shape = 'u32[]', space=smem, size = 0x4, offset = 0x4, fixed_abs, tag = 'smem constant byte address 0x4 - core index']
  #allocation1 [shape = 'u32[72,128]{1,0:T(1,128)}', space=vmem, size = 0x9000, scoped, tag = 'internal scratch']
  %s0 = inlined_call_operand.vmem [shape: f32[512,128], index: 0, kind: input, shape index: {}]
  %s1 = inlined_call_operand.vmem [shape: f32[512,128], index: 1, kind: input, shape index: {}]
  %s2 = inlined_call_operand.vmem [shape: bf16[128,128], index: 2, kind: input, shape index: {}]
  %s3 = inlined_call_operand.vmem [shape: f32[1,128], index: 3, kind: input, shape index: {}]
  %s4 = inlined_call_operand.vmem [shape: f32[512,128], index: 4, kind: output, shape index: {}]
  %s5 = sld [smem:[#allocation0]]
  $region49: #{bi_propagate_forward.11} parent=0
    _
  %s7 = ssub.s32 1, %s5
  %s8 = scalar_select 0, %s7, %s5
  loop: start=0, step=1, limit=4
  $region2: #{bi_propagate_forward.11} parent=0 // loop_pre_header
    _
  $region3: #{bi_propagate_forward.11} parent=0 // loop_header
    %s10 = sphi 0, %s14
    %p11 = scmp.ge.s32.totalorder %s10, 4
    %s20 = sphi 0, %s22
    %s23 = sphi 0, %s20
    %s24 = sphi 0, %s23
    %s40 = sphi 0, %s24
    %s46 = sphi 0, %s48
    %s49 = sphi 0, %s46
    %s50 = sphi 0, %s49
    %s66 = sphi 0, %s50
    %s70 = sphi 0, %s70
    %s72 = sphi 0, %s70
    %s73 = sphi 0, %s72
    %s87 = sphi 0, %s73
    %s91 = sphi 0, %s91
    %s93 = sphi 0, %s91
    %s94 = sphi 0, %s93
    %s108 = sphi 0, %s94
    %s114 = sphi 0, %s116
    %s117 = sphi 0, %s114
    %s118 = sphi 0, %s117
    %s134 = sphi 0, %s118
  $region4: #{bi_propagate_forward.11} parent=0 // loop_header_branch
    %13 = sbr.rel (%p11) target = $region8
  $region5: #{bi_propagate_forward.11} parent=0 // loop_body
    %s15 = ssub.s32 %s10, 1
    %s16 = ssub.s32 %s10, 2
    %s17 = sadd.s32 %s10, 1
    %s18 = ssub.s32 %s10, %s17
    %p19 = scmp.eq.s32.totalorder %s18, 0
    %s21 = sadd.s32 %s20, 1
    %s22 = scalar_select %p19, %s20, %s21
    %p25 = pneg %p19
    %p26 = scmp.eq.s32.totalorder %s10, 1
    %p27 = por %p25, %p26
    %p28 = scmp.ne.s32.totalorder %s20, %s23
    %p29 = scmp.eq.s32.totalorder %s10, 0
    %p30 = por %p28, %p29
    %p31 = scmp.ne.s32.totalorder %s20, %s23
    %p32 = scmp.eq.s32.totalorder %s15, 1
    %p33 = por %p31, %p32
    %p34 = scmp.ne.s32.totalorder %s23, %s24
    %p35 = scmp.eq.s32.totalorder %s15, 0
    %p36 = por %p34, %p35
    %p37 = scmp.ne.s32.totalorder %s23, %s24
    %p38 = scmp.eq.s32.totalorder %s16, 1
    %p39 = por %p37, %p38
    %p41 = scmp.ne.s32.totalorder %s24, %s40
    %p42 = scmp.eq.s32.totalorder %s16, 0
    %p43 = por %p41, %p42
    %s44 = ssub.s32 %s10, %s17
    %p45 = scmp.eq.s32.totalorder %s44, 0
    %s47 = sadd.s32 %s46, 1
    %s48 = scalar_select %p45, %s46, %s47
    %p51 = pneg %p45
    %p52 = scmp.eq.s32.totalorder %s10, 1
    %p53 = por %p51, %p52
    %p54 = scmp.ne.s32.totalorder %s46, %s49
    %p55 = scmp.eq.s32.totalorder %s10, 0
    %p56 = por %p54, %p55
    %p57 = scmp.ne.s32.totalorder %s46, %s49
    %p58 = scmp.eq.s32.totalorder %s15, 1
    %p59 = por %p57, %p58
    %p60 = scmp.ne.s32.totalorder %s49, %s50
    %p61 = scmp.eq.s32.totalorder %s15, 0
    %p62 = por %p60, %p61
    %p63 = scmp.ne.s32.totalorder %s49, %s50
    %p64 = scmp.eq.s32.totalorder %s16, 1
    %p65 = por %p63, %p64
    %p67 = scmp.ne.s32.totalorder %s50, %s66
    %p68 = scmp.eq.s32.totalorder %s16, 0
    %p69 = por %p67, %p68
    %s71 = sadd.s32 %s70, 1
    %p74 = scmp.eq.s32.totalorder %s10, 1
    %p75 = scmp.ne.s32.totalorder %s70, %s72
    %p76 = scmp.eq.s32.totalorder %s10, 0
    %p77 = por %p75, %p76
    %p78 = scmp.ne.s32.totalorder %s70, %s72
    %p79 = scmp.eq.s32.totalorder %s15, 1
    %p80 = por %p78, %p79
    %p81 = scmp.ne.s32.totalorder %s72, %s73
    %p82 = scmp.eq.s32.totalorder %s15, 0
    %p83 = por %p81, %p82
    %p84 = scmp.ne.s32.totalorder %s72, %s73
    %p85 = scmp.eq.s32.totalorder %s16, 1
    %p86 = por %p84, %p85
    %p88 = scmp.ne.s32.totalorder %s73, %s87
    %p89 = scmp.eq.s32.totalorder %s16, 0
    %p90 = por %p88, %p89
    %s92 = sadd.s32 %s91, 1
    %p95 = scmp.eq.s32.totalorder %s10, 1
    %p96 = scmp.ne.s32.totalorder %s91, %s93
    %p97 = scmp.eq.s32.totalorder %s10, 0
    %p98 = por %p96, %p97
    %p99 = scmp.ne.s32.totalorder %s91, %s93
    %p100 = scmp.eq.s32.totalorder %s15, 1
    %p101 = por %p99, %p100
    %p102 = scmp.ne.s32.totalorder %s93, %s94
    %p103 = scmp.eq.s32.totalorder %s15, 0
    %p104 = por %p102, %p103
    %p105 = scmp.ne.s32.totalorder %s93, %s94
    %p106 = scmp.eq.s32.totalorder %s16, 1
    %p107 = por %p105, %p106
    %p109 = scmp.ne.s32.totalorder %s94, %s108
    %p110 = scmp.eq.s32.totalorder %s16, 0
    %p111 = por %p109, %p110
    %s112 = ssub.s32 %s10, %s17
    %p113 = scmp.eq.s32.totalorder %s112, 0
    %s115 = sadd.s32 %s114, 1
    %s116 = scalar_select %p113, %s114, %s115
    %p119 = pneg %p113
    %p120 = scmp.eq.s32.totalorder %s10, 1
    %p121 = por %p119, %p120
    %p122 = scmp.ne.s32.totalorder %s114, %s117
    %p123 = scmp.eq.s32.totalorder %s10, 0
    %p124 = por %p122, %p123
    %p125 = scmp.ne.s32.totalorder %s114, %s117
    %p126 = scmp.eq.s32.totalorder %s15, 1
    %p127 = por %p125, %p126
    %p128 = scmp.ne.s32.totalorder %s117, %s118
    %p129 = scmp.eq.s32.totalorder %s15, 0
    %p130 = por %p128, %p129
    %p131 = scmp.ne.s32.totalorder %s117, %s118
    %p132 = scmp.eq.s32.totalorder %s16, 1
    %p133 = por %p131, %p132
    %p135 = scmp.ne.s32.totalorder %s118, %s134
    %p136 = scmp.eq.s32.totalorder %s16, 0
    %p137 = por %p135, %p136
    %p138 = scmp.le.s32.totalorder 1, %s10
    %p139 = scmp.lt.s32.totalorder %s10, 3
    %p140 = pnand %p138, %p139
    %p141 = pneg %p140
    // Predicated region
    $region9: #{bi_propagate_forward.11} parent=5 // pred_check
      _
    $region10: #{bi_propagate_forward.11} parent=5 // pred_check_branch
      %143 = sbr.rel (%p140) target = $region12
    $region11: #{bi_propagate_forward.11} parent=5 // pred_region
      %s144 = ssub.s32 %s10, 1
      // Predicated region
      $region13: #{bi_propagate_forward.11} parent=11 // pred_check
        %p145 = pneg %p83
      $region14: #{bi_propagate_forward.11} parent=11 // pred_check_branch
        %147 = sbr.rel (%p145) target = $region16
      $region15: #{bi_propagate_forward.11} parent=11 // pred_region
        _
      $region16: #{bi_propagate_forward.11} parent=11 // pred_fallthru
        _
      // Predicated region
      $region17: #{bi_propagate_forward.11} parent=11 // pred_check
        %p148 = pneg %p104
      $region18: #{bi_propagate_forward.11} parent=11 // pred_check_branch
        %150 = sbr.rel (%p148) target = $region20
      $region19: #{bi_propagate_forward.11} parent=11 // pred_region
        _
      $region20: #{bi_propagate_forward.11} parent=11 // pred_fallthru
        _
    $region12: #{bi_propagate_forward.11} parent=5 // pred_fallthru
      _
    %p151 = scmp.lt.s32.totalorder %s10, 2
    // Predicated region
    $region21: #{bi_propagate_forward.11} parent=5 // pred_check
      %p152 = pneg %p151
    $region22: #{bi_propagate_forward.11} parent=5 // pred_check_branch
      %154 = sbr.rel (%p152) target = $region24
    $region23: #{bi_propagate_forward.11} parent=5 // pred_region
      // Predicated region
      $region25: #{bi_propagate_forward.11} parent=23 // pred_check
        %p155 = pneg %p30
      $region26: #{bi_propagate_forward.11} parent=23 // pred_check_branch
        %157 = sbr.rel (%p155) target = $region28
      $region27: #{bi_propagate_forward.11} parent=23 // pred_region
        %s158 = smul.u32 32, %s10
        %p159 = scmp.lt.s32.totalorder %s158, 63
        %s160 = scalar_select %p159, %s158, 63
        %s161 = smul.addr %s160, 8
        %s162 = scalar_lea.vmem %s0, %s161
        %s163 = smul.u32 32, %s10
      $region28: #{bi_propagate_forward.11} parent=23 // pred_fallthru
        _
      // Predicated region
      $region29: #{bi_propagate_forward.11} parent=23 // pred_check
        %p164 = pneg %p56
      $region30: #{bi_propagate_forward.11} parent=23 // pred_check_branch
        %166 = sbr.rel (%p164) target = $region32
      $region31: #{bi_propagate_forward.11} parent=23 // pred_region
        %s167 = smul.u32 32, %s10
        %p168 = scmp.lt.s32.totalorder %s167, 63
        %s169 = scalar_select %p168, %s167, 63
        %s170 = smul.addr %s169, 8
        %s171 = scalar_lea.vmem %s1, %s170
        %s172 = smul.u32 32, %s10
      $region32: #{bi_propagate_forward.11} parent=23 // pred_fallthru
        _
    $region24: #{bi_propagate_forward.11} parent=5 // pred_fallthru
      _
    %p173 = scmp.le.s32.totalorder 1, %s10
    %p174 = scmp.lt.s32.totalorder %s10, 3
    %p175 = pnand %p173, %p174
    %p176 = pneg %p175
    // Predicated region
    $region33: #{bi_propagate_forward.11} parent=5 // pred_check
      _
    $region34: #{bi_propagate_forward.11} parent=5 // pred_check_branch
      %178 = sbr.rel (%p175) target = $region36
    $region35: #{bi_propagate_forward.11} parent=5 // pred_region
      %s179 = ssub.s32 %s10, 1
      %s180 = smul.u32 32, %s15
      %p181 = scmp.lt.s32.totalorder %s180, 63
      %s182 = scalar_select %p181, %s180, 63
      %s183 = smul.addr %s182, 8
      %s184 = scalar_lea.vmem %s0, %s183
      %p185 = pneg %p36
      %p186 = pneg %p33
      %s187 = smul.u32 32, %s15
      %p188 = scmp.lt.s32.totalorder %s187, 63
      %s189 = scalar_select %p188, %s187, 63
      %s190 = smul.addr %s189, 8
      %s191 = scalar_lea.vmem %s1, %s190
      %p192 = pneg %p62
      %p193 = pneg %p59
      %p194 = pneg %p83
      %p195 = pneg %p80
      %p196 = pneg %p104
      %p197 = pneg %p101
      %p198 = pneg %p130
      %p199 = pneg %p127
      %s200 = smul.u32 32, %s15
      %p201 = scmp.lt.s32.totalorder %s200, 63
      %s202 = scalar_select %p201, %s200, 63
      %s203 = smul.addr %s202, 8
      %s204 = scalar_lea.vmem %s4, %s203
      %s205 = smul.u32 32, %s15
      %p206 = scmp.lt.s32.totalorder %s205, 63
      %s207 = scalar_select %p206, %s205, 63
      %s208 = smul.addr %s207, 8
      %s209 = scalar_lea.vmem %s0, %s208
      %s210 = smul.u32 32, %s15
      %s211 = smul.u32 32, %s15
      %p212 = scmp.lt.s32.totalorder %s211, 63
      %s213 = scalar_select %p212, %s211, 63
      %s214 = smul.addr %s213, 8
      %s215 = scalar_lea.vmem %s1, %s214
      %s216 = smul.u32 32, %s15
      %s217 = smul.u32 32, %s15
      %p218 = scmp.lt.s32.totalorder %s217, 63
      %s219 = scalar_select %p218, %s217, 63
      %s220 = smul.addr %s219, 8
      %s221 = scalar_lea.vmem %s4, %s220
      %s222 = smul.u32 32, %s15
      %v223 = vld [vmem:[%s209] sm:$0xff]
      %v224 = vld [vmem:[%s209 + $0x8] sm:$0xff]
      %v225 = vld [vmem:[%s209 + $0x10] sm:$0xff]
      %v226 = vld [vmem:[%s209 + $0x18] sm:$0xff]
      %v227 = vld [vmem:[%s209 + $0x20] sm:$0xff]
      %v228 = vld [vmem:[%s209 + $0x28] sm:$0xff]
      %v229 = vld [vmem:[%s209 + $0x30] sm:$0xff]
      %v230 = vld [vmem:[%s209 + $0x38] sm:$0xff]
      %v231 = vld [vmem:[%s209 + $0x40] sm:$0xff]
      %v232 = vld [vmem:[%s209 + $0x48] sm:$0xff]
      %v233 = vld [vmem:[%s209 + $0x50] sm:$0xff]
      %v234 = vld [vmem:[%s209 + $0x58] sm:$0xff]
      %v235 = vld [vmem:[%s209 + $0x60] sm:$0xff]
      %v236 = vld [vmem:[%s209 + $0x68] sm:$0xff]
      %v237 = vld [vmem:[%s209 + $0x70] sm:$0xff]
      %v238 = vld [vmem:[%s209 + $0x78] sm:$0xff]
      %v239 = vld [vmem:[%s209 + $0x80] sm:$0xff]
      %v240 = vld [vmem:[%s209 + $0x88] sm:$0xff]
      %v241 = vld [vmem:[%s209 + $0x90] sm:$0xff]
      %v242 = vld [vmem:[%s209 + $0x98] sm:$0xff]
      %v243 = vld [vmem:[%s209 + $0xa0] sm:$0xff]
      %v244 = vld [vmem:[%s209 + $0xa8] sm:$0xff]
      %v245 = vld [vmem:[%s209 + $0xb0] sm:$0xff]
      %v246 = vld [vmem:[%s209 + $0xb8] sm:$0xff]
      %v247 = vld [vmem:[%s209 + $0xc0] sm:$0xff]
      %v248 = vld [vmem:[%s209 + $0xc8] sm:$0xff]
      %v249 = vld [vmem:[%s209 + $0xd0] sm:$0xff]
      %v250 = vld [vmem:[%s209 + $0xd8] sm:$0xff]
      %v251 = vld [vmem:[%s209 + $0xe0] sm:$0xff]
      %v252 = vld [vmem:[%s209 + $0xe8] sm:$0xff]
      %v253 = vld [vmem:[%s209 + $0xf0] sm:$0xff]
      %v254 = vld [vmem:[%s209 + $0xf8] sm:$0xff]
      %v255 = vpack.c.bf16 %v224, %v223
      %v256 = vpack.c.bf16 %v226, %v225
      %v257 = vpack.c.bf16 %v228, %v227
      %v258 = vpack.c.bf16 %v230, %v229
      %v259 = vpack.c.bf16 %v232, %v231
      %v260 = vpack.c.bf16 %v234, %v233
      %v261 = vpack.c.bf16 %v236, %v235
      %v262 = vpack.c.bf16 %v238, %v237
      %v263 = vpack.c.bf16 %v240, %v239
      %v264 = vpack.c.bf16 %v242, %v241
      %v265 = vpack.c.bf16 %v244, %v243
      %v266 = vpack.c.bf16 %v246, %v245
      %v267 = vpack.c.bf16 %v248, %v247
      %v268 = vpack.c.bf16 %v250, %v249
      %v269 = vpack.c.bf16 %v252, %v251
      %v270 = vpack.c.bf16 %v254, %v253
      %v271 = vld [vmem:[%s2] sm:$0xf]
      %v272 = vld [vmem:[%s2 + $0x4] sm:$0xf]
      %v273 = vld [vmem:[%s2 + $0x8] sm:$0xf]
      %v274 = vld [vmem:[%s2 + $0xc] sm:$0xf]
      %v275 = vld [vmem:[%s2 + $0x10] sm:$0xf]
      %v276 = vld [vmem:[%s2 + $0x14] sm:$0xf]
      %v277 = vld [vmem:[%s2 + $0x18] sm:$0xf]
      %v278 = vld [vmem:[%s2 + $0x1c] sm:$0xf]
      %v279 = vld [vmem:[%s2 + $0x20] sm:$0xf]
      %v280 = vld [vmem:[%s2 + $0x24] sm:$0xf]
      %v281 = vld [vmem:[%s2 + $0x28] sm:$0xf]
      %v282 = vld [vmem:[%s2 + $0x2c] sm:$0xf]
      %v283 = vld [vmem:[%s2 + $0x30] sm:$0xf]
      %v284 = vld [vmem:[%s2 + $0x34] sm:$0xf]
      %v285 = vld [vmem:[%s2 + $0x38] sm:$0xf]
      %v286 = vld [vmem:[%s2 + $0x3c] sm:$0xf]
      %v287 = vld [vmem:[%s215] sm:$0xff]
      %v288 = vld [vmem:[%s215 + $0x8] sm:$0xff]
      %v289 = vld [vmem:[%s215 + $0x10] sm:$0xff]
      %v290 = vld [vmem:[%s215 + $0x18] sm:$0xff]
      %v291 = vld [vmem:[%s215 + $0x20] sm:$0xff]
      %v292 = vld [vmem:[%s215 + $0x28] sm:$0xff]
      %v293 = vld [vmem:[%s215 + $0x30] sm:$0xff]
      %v294 = vld [vmem:[%s215 + $0x38] sm:$0xff]
      %v295 = vld [vmem:[%s215 + $0x40] sm:$0xff]
      %v296 = vld [vmem:[%s215 + $0x48] sm:$0xff]
      %v297 = vld [vmem:[%s215 + $0x50] sm:$0xff]
      %v298 = vld [vmem:[%s215 + $0x58] sm:$0xff]
      %v299 = vld [vmem:[%s215 + $0x60] sm:$0xff]
      %v300 = vld [vmem:[%s215 + $0x68] sm:$0xff]
      %v301 = vld [vmem:[%s215 + $0x70] sm:$0xff]
      %v302 = vld [vmem:[%s215 + $0x78] sm:$0xff]
      %v303 = vld [vmem:[%s215 + $0x80] sm:$0xff]
      %v304 = vld [vmem:[%s215 + $0x88] sm:$0xff]
      %v305 = vld [vmem:[%s215 + $0x90] sm:$0xff]
      %v306 = vld [vmem:[%s215 + $0x98] sm:$0xff]
      %v307 = vld [vmem:[%s215 + $0xa0] sm:$0xff]
      %v308 = vld [vmem:[%s215 + $0xa8] sm:$0xff]
      %v309 = vld [vmem:[%s215 + $0xb0] sm:$0xff]
      %v310 = vld [vmem:[%s215 + $0xb8] sm:$0xff]
      %v311 = vld [vmem:[%s215 + $0xc0] sm:$0xff]
      %v312 = vld [vmem:[%s215 + $0xc8] sm:$0xff]
      %v313 = vld [vmem:[%s215 + $0xd0] sm:$0xff]
      %v314 = vld [vmem:[%s215 + $0xd8] sm:$0xff]
      %v315 = vld [vmem:[%s215 + $0xe0] sm:$0xff]
      %v316 = vld [vmem:[%s215 + $0xe8] sm:$0xff]
      %v317 = vld [vmem:[%s215 + $0xf0] sm:$0xff]
      %v318 = vld [vmem:[%s215 + $0xf8] sm:$0xff]
      %v335 = vunpack.c.l.b16 %v271
      %v336 = vunpack.c.l.b16 %v272
      %v337 = vunpack.c.l.b16 %v273
      %v338 = vunpack.c.l.b16 %v274
      %v339 = vunpack.c.l.b16 %v275
      %v340 = vunpack.c.l.b16 %v276
      %v341 = vunpack.c.l.b16 %v277
      %v342 = vunpack.c.l.b16 %v278
      %v343 = vunpack.c.l.b16 %v279
      %v344 = vunpack.c.l.b16 %v280
      %v345 = vunpack.c.l.b16 %v281
      %v346 = vunpack.c.l.b16 %v282
      %v347 = vunpack.c.l.b16 %v283
      %v348 = vunpack.c.l.b16 %v284
      %v349 = vunpack.c.l.b16 %v285
      %v350 = vunpack.c.l.b16 %v286
      %v351 = vpack.c.b16 %v336, %v335
      %v352 = vpack.c.b16 %v338, %v337
      %v353 = vpack.c.b16 %v340, %v339
      %v354 = vpack.c.b16 %v342, %v341
      %v355 = vpack.c.b16 %v344, %v343
      %v356 = vpack.c.b16 %v346, %v345
      %v357 = vpack.c.b16 %v348, %v347
      %v358 = vpack.c.b16 %v350, %v349
      %367 = vmatpush.bf16.msra.mxu0 %v358
      %368 = vmatpush.bf16.msra.mxu0 %v357
      %369 = vmatpush.bf16.msra.mxu0 %v356
      %370 = vmatpush.bf16.msra.mxu0 %v355
      %371 = vmatpush.bf16.msra.mxu0 %v354
      %372 = vmatpush.bf16.msra.mxu0 %v353
      %373 = vmatpush.bf16.msra.mxu0 %v352
      %374 = vmatpush.bf16.msra.mxu0 %v351
      %375 = vmatmul.bf16.gmra.mxu0 %v255
      %v376 = vpop.f32.mrf.mxu0
      %v377 = vadd.f32 %v287, %v376
      %v378 = vpop.f32.mrf.mxu0
      %v379 = vadd.f32 %v288, %v378
      %380 = vmatmul.bf16.gmra.mxu0 %v256
      %v381 = vpop.f32.mrf.mxu0
      %v382 = vadd.f32 %v289, %v381
      %v383 = vpop.f32.mrf.mxu0
      %v384 = vadd.f32 %v290, %v383
      %385 = vmatmul.bf16.gmra.mxu0 %v257
      %v386 = vpop.f32.mrf.mxu0
      %v387 = vadd.f32 %v291, %v386
      %v388 = vpop.f32.mrf.mxu0
      %v389 = vadd.f32 %v292, %v388
      %390 = vmatmul.bf16.gmra.mxu0 %v258
      %v391 = vpop.f32.mrf.mxu0
      %v392 = vadd.f32 %v293, %v391
      %v393 = vpop.f32.mrf.mxu0
      %v394 = vadd.f32 %v294, %v393
      %395 = vmatmul.bf16.gmra.mxu0 %v259
      %v396 = vpop.f32.mrf.mxu0
      %v397 = vadd.f32 %v295, %v396
      %v398 = vpop.f32.mrf.mxu0
      %v399 = vadd.f32 %v296, %v398
      %400 = vmatmul.bf16.gmra.mxu0 %v260
      %v401 = vpop.f32.mrf.mxu0
      %v402 = vadd.f32 %v297, %v401
      %v403 = vpop.f32.mrf.mxu0
      %v404 = vadd.f32 %v298, %v403
      %405 = vmatmul.bf16.gmra.mxu0 %v261
      %v406 = vpop.f32.mrf.mxu0
      %v407 = vadd.f32 %v299, %v406
      %v408 = vpop.f32.mrf.mxu0
      %v409 = vadd.f32 %v300, %v408
      %410 = vmatmul.bf16.gmra.mxu0 %v262
      %v411 = vpop.f32.mrf.mxu0
      %v412 = vadd.f32 %v301, %v411
      %v413 = vpop.f32.mrf.mxu0
      %v414 = vadd.f32 %v302, %v413
      %415 = vmatmul.bf16.gmra.mxu0 %v263
      %v416 = vpop.f32.mrf.mxu0
      %v417 = vadd.f32 %v303, %v416
      %v418 = vpop.f32.mrf.mxu0
      %v419 = vadd.f32 %v304, %v418
      %420 = vmatmul.bf16.gmra.mxu0 %v264
      %v421 = vpop.f32.mrf.mxu0
      %v422 = vadd.f32 %v305, %v421
      %v423 = vpop.f32.mrf.mxu0
      %v424 = vadd.f32 %v306, %v423
      %425 = vmatmul.bf16.gmra.mxu0 %v265
      %v426 = vpop.f32.mrf.mxu0
      %v427 = vadd.f32 %v307, %v426
      %v428 = vpop.f32.mrf.mxu0
      %v429 = vadd.f32 %v308, %v428
      %430 = vmatmul.bf16.gmra.mxu0 %v266
      %v431 = vpop.f32.mrf.mxu0
      %v432 = vadd.f32 %v309, %v431
      %v433 = vpop.f32.mrf.mxu0
      %v434 = vadd.f32 %v310, %v433
      %435 = vmatmul.bf16.gmra.mxu0 %v267
      %v436 = vpop.f32.mrf.mxu0
      %v437 = vadd.f32 %v311, %v436
      %v438 = vpop.f32.mrf.mxu0
      %v439 = vadd.f32 %v312, %v438
      %440 = vmatmul.bf16.gmra.mxu0 %v268
      %v441 = vpop.f32.mrf.mxu0
      %v442 = vadd.f32 %v313, %v441
      %v443 = vpop.f32.mrf.mxu0
      %v444 = vadd.f32 %v314, %v443
      %445 = vmatmul.bf16.gmra.mxu0 %v269
      %v446 = vpop.f32.mrf.mxu0
      %v447 = vadd.f32 %v315, %v446
      %v448 = vpop.f32.mrf.mxu0
      %v449 = vadd.f32 %v316, %v448
      %450 = vmatmul.bf16.gmra.mxu0 %v270
      %v451 = vpop.f32.mrf.mxu0
      %v452 = vadd.f32 %v317, %v451
      %v453 = vpop.f32.mrf.mxu0
      %v454 = vadd.f32 %v318, %v453
      %455 = vdwg.mxu0
      %v456 = vld [vmem:[%s3] sm:$0x1]
      %v458 = vperm.slane %v456, 0
      %v460 = vadd.f32 %v377, %v458
      %v461 = vadd.f32 %v379, %v458
      %v462 = vadd.f32 %v382, %v458
      %v463 = vadd.f32 %v384, %v458
      %v464 = vadd.f32 %v387, %v458
      %v465 = vadd.f32 %v389, %v458
      %v466 = vadd.f32 %v392, %v458
      %v467 = vadd.f32 %v394, %v458
      %v468 = vadd.f32 %v397, %v458
      %v469 = vadd.f32 %v399, %v458
      %v470 = vadd.f32 %v402, %v458
      %v471 = vadd.f32 %v404, %v458
      %v472 = vadd.f32 %v407, %v458
      %v473 = vadd.f32 %v409, %v458
      %v474 = vadd.f32 %v412, %v458
      %v475 = vadd.f32 %v414, %v458
      %v476 = vadd.f32 %v417, %v458
      %v477 = vadd.f32 %v419, %v458
      %v478 = vadd.f32 %v422, %v458
      %v479 = vadd.f32 %v424, %v458
      %v480 = vadd.f32 %v427, %v458
      %v481 = vadd.f32 %v429, %v458
      %v482 = vadd.f32 %v432, %v458
      %v483 = vadd.f32 %v434, %v458
      %v484 = vadd.f32 %v437, %v458
      %v485 = vadd.f32 %v439, %v458
      %v486 = vadd.f32 %v442, %v458
      %v487 = vadd.f32 %v444, %v458
      %v488 = vadd.f32 %v447, %v458
      %v489 = vadd.f32 %v449, %v458
      %v490 = vadd.f32 %v452, %v458
      %v491 = vadd.f32 %v454, %v458
      %v492 = vmax.f32 %v460, 0.0
      %v493 = vmax.f32 %v461, 0.0
      %v494 = vmax.f32 %v462, 0.0
      %v495 = vmax.f32 %v463, 0.0
      %v496 = vmax.f32 %v464, 0.0
      %v497 = vmax.f32 %v465, 0.0
      %v498 = vmax.f32 %v466, 0.0
      %v499 = vmax.f32 %v467, 0.0
      %v500 = vmax.f32 %v468, 0.0
      %v501 = vmax.f32 %v469, 0.0
      %v502 = vmax.f32 %v470, 0.0
      %v503 = vmax.f32 %v471, 0.0
      %v504 = vmax.f32 %v472, 0.0
      %v505 = vmax.f32 %v473, 0.0
      %v506 = vmax.f32 %v474, 0.0
      %v507 = vmax.f32 %v475, 0.0
      %v508 = vmax.f32 %v476, 0.0
      %v509 = vmax.f32 %v477, 0.0
      %v510 = vmax.f32 %v478, 0.0
      %v511 = vmax.f32 %v479, 0.0
      %v512 = vmax.f32 %v480, 0.0
      %v513 = vmax.f32 %v481, 0.0
      %v514 = vmax.f32 %v482, 0.0
      %v515 = vmax.f32 %v483, 0.0
      %v516 = vmax.f32 %v484, 0.0
      %v517 = vmax.f32 %v485, 0.0
      %v518 = vmax.f32 %v486, 0.0
      %v519 = vmax.f32 %v487, 0.0
      %v520 = vmax.f32 %v488, 0.0
      %v521 = vmax.f32 %v489, 0.0
      %v522 = vmax.f32 %v490, 0.0
      %v523 = vmax.f32 %v491, 0.0
      %524 = vst [vmem:[%s221] sm:$0xff] %v492
      %525 = vst [vmem:[%s221 + $0x8] sm:$0xff] %v493
      %526 = vst [vmem:[%s221 + $0x10] sm:$0xff] %v494
      %527 = vst [vmem:[%s221 + $0x18] sm:$0xff] %v495
      %528 = vst [vmem:[%s221 + $0x20] sm:$0xff] %v496
      %529 = vst [vmem:[%s221 + $0x28] sm:$0xff] %v497
      %530 = vst [vmem:[%s221 + $0x30] sm:$0xff] %v498
      %531 = vst [vmem:[%s221 + $0x38] sm:$0xff] %v499
      %532 = vst [vmem:[%s221 + $0x40] sm:$0xff] %v500
      %533 = vst [vmem:[%s221 + $0x48] sm:$0xff] %v501
      %534 = vst [vmem:[%s221 + $0x50] sm:$0xff] %v502
      %535 = vst [vmem:[%s221 + $0x58] sm:$0xff] %v503
      %536 = vst [vmem:[%s221 + $0x60] sm:$0xff] %v504
      %537 = vst [vmem:[%s221 + $0x68] sm:$0xff] %v505
      %538 = vst [vmem:[%s221 + $0x70] sm:$0xff] %v506
      %539 = vst [vmem:[%s221 + $0x78] sm:$0xff] %v507
      %540 = vst [vmem:[%s221 + $0x80] sm:$0xff] %v508
      %541 = vst [vmem:[%s221 + $0x88] sm:$0xff] %v509
      %542 = vst [vmem:[%s221 + $0x90] sm:$0xff] %v510
      %543 = vst [vmem:[%s221 + $0x98] sm:$0xff] %v511
      %544 = vst [vmem:[%s221 + $0xa0] sm:$0xff] %v512
      %545 = vst [vmem:[%s221 + $0xa8] sm:$0xff] %v513
      %546 = vst [vmem:[%s221 + $0xb0] sm:$0xff] %v514
      %547 = vst [vmem:[%s221 + $0xb8] sm:$0xff] %v515
      %548 = vst [vmem:[%s221 + $0xc0] sm:$0xff] %v516
      %549 = vst [vmem:[%s221 + $0xc8] sm:$0xff] %v517
      %550 = vst [vmem:[%s221 + $0xd0] sm:$0xff] %v518
      %551 = vst [vmem:[%s221 + $0xd8] sm:$0xff] %v519
      %552 = vst [vmem:[%s221 + $0xe0] sm:$0xff] %v520
      %553 = vst [vmem:[%s221 + $0xe8] sm:$0xff] %v521
      %554 = vst [vmem:[%s221 + $0xf0] sm:$0xff] %v522
      %555 = vst [vmem:[%s221 + $0xf8] sm:$0xff] %v523
      %s556 = smul.u32 32, %s15
      %p557 = scmp.lt.s32.totalorder %s556, 63
      %s558 = scalar_select %p557, %s556, 63
      %s559 = smul.addr %s558, 8
      %s560 = scalar_lea.vmem %s4, %s559
      // Predicated region
      $region37: #{bi_propagate_forward.11} parent=35 // pred_check
        %p561 = pneg %p127
      $region38: #{bi_propagate_forward.11} parent=35 // pred_check_branch
        %563 = sbr.rel (%p561) target = $region40
      $region39: #{bi_propagate_forward.11} parent=35 // pred_region
        %s564 = smul.u32 32, %s15
      $region40: #{bi_propagate_forward.11} parent=35 // pred_fallthru
        _
    $region36: #{bi_propagate_forward.11} parent=5 // pred_fallthru
      _
    %p565 = scmp.le.s32.totalorder 2, %s10
    // Predicated region
    $region41: #{bi_propagate_forward.11} parent=5 // pred_check
      %p566 = pneg %p565
    $region42: #{bi_propagate_forward.11} parent=5 // pred_check_branch
      %568 = sbr.rel (%p566) target = $region44
    $region43: #{bi_propagate_forward.11} parent=5 // pred_region
      %s569 = ssub.s32 %s10, 2
      // Predicated region
      $region45: #{bi_propagate_forward.11} parent=43 // pred_check
        %p570 = pneg %p133
      $region46: #{bi_propagate_forward.11} parent=43 // pred_check_branch
        %572 = sbr.rel (%p570) target = $region48
      $region47: #{bi_propagate_forward.11} parent=43 // pred_region
        %s573 = smul.u32 32, %s16
        %p574 = scmp.lt.s32.totalorder %s573, 63
        %s575 = scalar_select %p574, %s573, 63
        %s576 = smul.addr %s575, 8
        %s577 = scalar_lea.vmem %s4, %s576
      $region48: #{bi_propagate_forward.11} parent=43 // pred_fallthru
        _
    $region44: #{bi_propagate_forward.11} parent=5 // pred_fallthru
      _
  $region6: #{bi_propagate_forward.11} parent=0 // loop_footer
    %s14 = sadd.s32 1, %s10
  $region7: #{bi_propagate_forward.11} parent=0 // loop_footer_branch
    %9 = sbr.rel target = $region3
  $region8: #{bi_propagate_forward.11} parent=0 // loop_exit
    _

// kernel: bi_propagate_forward.13
$region0: #{bi_propagate_forward.13}
  #allocation0 [shape = 'u32[]', space=smem, size = 0x4, offset = 0x4, fixed_abs, tag = 'smem constant byte address 0x4 - core index']
  #allocation1 [shape = 'u32[72,128]{1,0:T(1,128)}', space=vmem, size = 0x9000, scoped, tag = 'internal scratch']
  %s0 = inlined_call_operand.vmem [shape: f32[128,128], index: 0, kind: input, shape index: {}]
  %s1 = inlined_call_operand.vmem [shape: f32[128,128], index: 1, kind: input, shape index: {}]
  %s2 = inlined_call_operand.vmem [shape: bf16[128,128], index: 2, kind: input, shape index: {}]
  %s3 = inlined_call_operand.vmem [shape: bf16[128,128], index: 3, kind: input, shape index: {}]
  %s4 = inlined_call_operand.vmem [shape: f32[1,128], index: 4, kind: input, shape index: {}]
  %s5 = inlined_call_operand.vmem [shape: f32[128,128], index: 5, kind: output, shape index: {}]
  %s6 = sld [smem:[#allocation0]]
  $region53: #{bi_propagate_forward.13} parent=0
    _
  %s8 = ssub.s32 1, %s6
  %s9 = scalar_select 0, %s8, %s6
  loop: start=0, step=1, limit=4
  $region2: #{bi_propagate_forward.13} parent=0 // loop_pre_header
    _
  $region3: #{bi_propagate_forward.13} parent=0 // loop_header
    %s11 = sphi 0, %s15
    %p12 = scmp.ge.s32.totalorder %s11, 4
    %s21 = sphi 0, %s23
    %s24 = sphi 0, %s21
    %s25 = sphi 0, %s24
    %s41 = sphi 0, %s25
    %s47 = sphi 0, %s49
    %s50 = sphi 0, %s47
    %s51 = sphi 0, %s50
    %s67 = sphi 0, %s51
    %s71 = sphi 0, %s71
    %s73 = sphi 0, %s71
    %s74 = sphi 0, %s73
    %s88 = sphi 0, %s74
    %s92 = sphi 0, %s92
    %s94 = sphi 0, %s92
    %s95 = sphi 0, %s94
    %s109 = sphi 0, %s95
    %s113 = sphi 0, %s113
    %s115 = sphi 0, %s113
    %s116 = sphi 0, %s115
    %s130 = sphi 0, %s116
    %s136 = sphi 0, %s138
    %s139 = sphi 0, %s136
    %s140 = sphi 0, %s139
    %s156 = sphi 0, %s140
  $region4: #{bi_propagate_forward.13} parent=0 // loop_header_branch
    %14 = sbr.rel (%p12) target = $region8
  $region5: #{bi_propagate_forward.13} parent=0 // loop_body
    %s16 = ssub.s32 %s11, 1
    %s17 = ssub.s32 %s11, 2
    %s18 = sadd.s32 %s11, 1
    %s19 = ssub.s32 %s11, %s18
    %p20 = scmp.eq.s32.totalorder %s19, 0
    %s22 = sadd.s32 %s21, 1
    %s23 = scalar_select %p20, %s21, %s22
    %p26 = pneg %p20
    %p27 = scmp.eq.s32.totalorder %s11, 1
    %p28 = por %p26, %p27
    %p29 = scmp.ne.s32.totalorder %s21, %s24
    %p30 = scmp.eq.s32.totalorder %s11, 0
    %p31 = por %p29, %p30
    %p32 = scmp.ne.s32.totalorder %s21, %s24
    %p33 = scmp.eq.s32.totalorder %s16, 1
    %p34 = por %p32, %p33
    %p35 = scmp.ne.s32.totalorder %s24, %s25
    %p36 = scmp.eq.s32.totalorder %s16, 0
    %p37 = por %p35, %p36
    %p38 = scmp.ne.s32.totalorder %s24, %s25
    %p39 = scmp.eq.s32.totalorder %s17, 1
    %p40 = por %p38, %p39
    %p42 = scmp.ne.s32.totalorder %s25, %s41
    %p43 = scmp.eq.s32.totalorder %s17, 0
    %p44 = por %p42, %p43
    %s45 = ssub.s32 %s11, %s18
    %p46 = scmp.eq.s32.totalorder %s45, 0
    %s48 = sadd.s32 %s47, 1
    %s49 = scalar_select %p46, %s47, %s48
    %p52 = pneg %p46
    %p53 = scmp.eq.s32.totalorder %s11, 1
    %p54 = por %p52, %p53
    %p55 = scmp.ne.s32.totalorder %s47, %s50
    %p56 = scmp.eq.s32.totalorder %s11, 0
    %p57 = por %p55, %p56
    %p58 = scmp.ne.s32.totalorder %s47, %s50
    %p59 = scmp.eq.s32.totalorder %s16, 1
    %p60 = por %p58, %p59
    %p61 = scmp.ne.s32.totalorder %s50, %s51
    %p62 = scmp.eq.s32.totalorder %s16, 0
    %p63 = por %p61, %p62
    %p64 = scmp.ne.s32.totalorder %s50, %s51
    %p65 = scmp.eq.s32.totalorder %s17, 1
    %p66 = por %p64, %p65
    %p68 = scmp.ne.s32.totalorder %s51, %s67
    %p69 = scmp.eq.s32.totalorder %s17, 0
    %p70 = por %p68, %p69
    %s72 = sadd.s32 %s71, 1
    %p75 = scmp.eq.s32.totalorder %s11, 1
    %p76 = scmp.ne.s32.totalorder %s71, %s73
    %p77 = scmp.eq.s32.totalorder %s11, 0
    %p78 = por %p76, %p77
    %p79 = scmp.ne.s32.totalorder %s71, %s73
    %p80 = scmp.eq.s32.totalorder %s16, 1
    %p81 = por %p79, %p80
    %p82 = scmp.ne.s32.totalorder %s73, %s74
    %p83 = scmp.eq.s32.totalorder %s16, 0
    %p84 = por %p82, %p83
    %p85 = scmp.ne.s32.totalorder %s73, %s74
    %p86 = scmp.eq.s32.totalorder %s17, 1
    %p87 = por %p85, %p86
    %p89 = scmp.ne.s32.totalorder %s74, %s88
    %p90 = scmp.eq.s32.totalorder %s17, 0
    %p91 = por %p89, %p90
    %s93 = sadd.s32 %s92, 1
    %p96 = scmp.eq.s32.totalorder %s11, 1
    %p97 = scmp.ne.s32.totalorder %s92, %s94
    %p98 = scmp.eq.s32.totalorder %s11, 0
    %p99 = por %p97, %p98
    %p100 = scmp.ne.s32.totalorder %s92, %s94
    %p101 = scmp.eq.s32.totalorder %s16, 1
    %p102 = por %p100, %p101
    %p103 = scmp.ne.s32.totalorder %s94, %s95
    %p104 = scmp.eq.s32.totalorder %s16, 0
    %p105 = por %p103, %p104
    %p106 = scmp.ne.s32.totalorder %s94, %s95
    %p107 = scmp.eq.s32.totalorder %s17, 1
    %p108 = por %p106, %p107
    %p110 = scmp.ne.s32.totalorder %s95, %s109
    %p111 = scmp.eq.s32.totalorder %s17, 0
    %p112 = por %p110, %p111
    %s114 = sadd.s32 %s113, 1
    %p117 = scmp.eq.s32.totalorder %s11, 1
    %p118 = scmp.ne.s32.totalorder %s113, %s115
    %p119 = scmp.eq.s32.totalorder %s11, 0
    %p120 = por %p118, %p119
    %p121 = scmp.ne.s32.totalorder %s113, %s115
    %p122 = scmp.eq.s32.totalorder %s16, 1
    %p123 = por %p121, %p122
    %p124 = scmp.ne.s32.totalorder %s115, %s116
    %p125 = scmp.eq.s32.totalorder %s16, 0
    %p126 = por %p124, %p125
    %p127 = scmp.ne.s32.totalorder %s115, %s116
    %p128 = scmp.eq.s32.totalorder %s17, 1
    %p129 = por %p127, %p128
    %p131 = scmp.ne.s32.totalorder %s116, %s130
    %p132 = scmp.eq.s32.totalorder %s17, 0
    %p133 = por %p131, %p132
    %s134 = ssub.s32 %s11, %s18
    %p135 = scmp.eq.s32.totalorder %s134, 0
    %s137 = sadd.s32 %s136, 1
    %s138 = scalar_select %p135, %s136, %s137
    %p141 = pneg %p135
    %p142 = scmp.eq.s32.totalorder %s11, 1
    %p143 = por %p141, %p142
    %p144 = scmp.ne.s32.totalorder %s136, %s139
    %p145 = scmp.eq.s32.totalorder %s11, 0
    %p146 = por %p144, %p145
    %p147 = scmp.ne.s32.totalorder %s136, %s139
    %p148 = scmp.eq.s32.totalorder %s16, 1
    %p149 = por %p147, %p148
    %p150 = scmp.ne.s32.totalorder %s139, %s140
    %p151 = scmp.eq.s32.totalorder %s16, 0
    %p152 = por %p150, %p151
    %p153 = scmp.ne.s32.totalorder %s139, %s140
    %p154 = scmp.eq.s32.totalorder %s17, 1
    %p155 = por %p153, %p154
    %p157 = scmp.ne.s32.totalorder %s140, %s156
    %p158 = scmp.eq.s32.totalorder %s17, 0
    %p159 = por %p157, %p158
    %p160 = scmp.le.s32.totalorder 1, %s11
    %p161 = scmp.lt.s32.totalorder %s11, 3
    %p162 = pnand %p160, %p161
    %p163 = pneg %p162
    // Predicated region
    $region9: #{bi_propagate_forward.13} parent=5 // pred_check
      _
    $region10: #{bi_propagate_forward.13} parent=5 // pred_check_branch
      %165 = sbr.rel (%p162) target = $region12
    $region11: #{bi_propagate_forward.13} parent=5 // pred_region
      %s166 = ssub.s32 %s11, 1
      // Predicated region
      $region13: #{bi_propagate_forward.13} parent=11 // pred_check
        %p167 = pneg %p84
      $region14: #{bi_propagate_forward.13} parent=11 // pred_check_branch
        %169 = sbr.rel (%p167) target = $region16
      $region15: #{bi_propagate_forward.13} parent=11 // pred_region
        _
      $region16: #{bi_propagate_forward.13} parent=11 // pred_fallthru
        _
      // Predicated region
      $region17: #{bi_propagate_forward.13} parent=11 // pred_check
        %p170 = pneg %p105
      $region18: #{bi_propagate_forward.13} parent=11 // pred_check_branch
        %172 = sbr.rel (%p170) target = $region20
      $region19: #{bi_propagate_forward.13} parent=11 // pred_region
        _
      $region20: #{bi_propagate_forward.13} parent=11 // pred_fallthru
        _
      // Predicated region
      $region21: #{bi_propagate_forward.13} parent=11 // pred_check
        %p173 = pneg %p126
      $region22: #{bi_propagate_forward.13} parent=11 // pred_check_branch
        %175 = sbr.rel (%p173) target = $region24
      $region23: #{bi_propagate_forward.13} parent=11 // pred_region
        _
      $region24: #{bi_propagate_forward.13} parent=11 // pred_fallthru
        _
    $region12: #{bi_propagate_forward.13} parent=5 // pred_fallthru
      _
    %p176 = scmp.lt.s32.totalorder %s11, 2
    // Predicated region
    $region25: #{bi_propagate_forward.13} parent=5 // pred_check
      %p177 = pneg %p176
    $region26: #{bi_propagate_forward.13} parent=5 // pred_check_branch
      %179 = sbr.rel (%p177) target = $region28
    $region27: #{bi_propagate_forward.13} parent=5 // pred_region
      // Predicated region
      $region29: #{bi_propagate_forward.13} parent=27 // pred_check
        %p180 = pneg %p31
      $region30: #{bi_propagate_forward.13} parent=27 // pred_check_branch
        %182 = sbr.rel (%p180) target = $region32
      $region31: #{bi_propagate_forward.13} parent=27 // pred_region
        %s183 = smul.u32 8, %s11
        %p184 = scmp.lt.s32.totalorder %s183, 15
        %s185 = scalar_select %p184, %s183, 15
        %s186 = smul.addr %s185, 8
        %s187 = scalar_lea.vmem %s0, %s186
        %s188 = smul.u32 8, %s11
      $region32: #{bi_propagate_forward.13} parent=27 // pred_fallthru
        _
      // Predicated region
      $region33: #{bi_propagate_forward.13} parent=27 // pred_check
        %p189 = pneg %p57
      $region34: #{bi_propagate_forward.13} parent=27 // pred_check_branch
        %191 = sbr.rel (%p189) target = $region36
      $region35: #{bi_propagate_forward.13} parent=27 // pred_region
        %s192 = smul.u32 8, %s11
        %p193 = scmp.lt.s32.totalorder %s192, 15
        %s194 = scalar_select %p193, %s192, 15
        %s195 = smul.addr %s194, 8
        %s196 = scalar_lea.vmem %s1, %s195
        %s197 = smul.u32 8, %s11
      $region36: #{bi_propagate_forward.13} parent=27 // pred_fallthru
        _
    $region28: #{bi_propagate_forward.13} parent=5 // pred_fallthru
      _
    %p198 = scmp.le.s32.totalorder 1, %s11
    %p199 = scmp.lt.s32.totalorder %s11, 3
    %p200 = pnand %p198, %p199
    %p201 = pneg %p200
    // Predicated region
    $region37: #{bi_propagate_forward.13} parent=5 // pred_check
      _
    $region38: #{bi_propagate_forward.13} parent=5 // pred_check_branch
      %203 = sbr.rel (%p200) target = $region40
    $region39: #{bi_propagate_forward.13} parent=5 // pred_region
      %s204 = ssub.s32 %s11, 1
      %s205 = smul.u32 8, %s16
      %p206 = scmp.lt.s32.totalorder %s205, 15
      %s207 = scalar_select %p206, %s205, 15
      %s208 = smul.addr %s207, 8
      %s209 = scalar_lea.vmem %s0, %s208
      %p210 = pneg %p37
      %p211 = pneg %p34
      %s212 = smul.u32 8, %s16
      %p213 = scmp.lt.s32.totalorder %s212, 15
      %s214 = scalar_select %p213, %s212, 15
      %s215 = smul.addr %s214, 8
      %s216 = scalar_lea.vmem %s1, %s215
      %p217 = pneg %p63
      %p218 = pneg %p60
      %p219 = pneg %p84
      %p220 = pneg %p81
      %p221 = pneg %p105
      %p222 = pneg %p102
      %p223 = pneg %p126
      %p224 = pneg %p123
      %p225 = pneg %p152
      %p226 = pneg %p149
      %s227 = smul.u32 8, %s16
      %p228 = scmp.lt.s32.totalorder %s227, 15
      %s229 = scalar_select %p228, %s227, 15
      %s230 = smul.addr %s229, 8
      %s231 = scalar_lea.vmem %s5, %s230
      %s232 = smul.u32 8, %s16
      %p233 = scmp.lt.s32.totalorder %s232, 15
      %s234 = scalar_select %p233, %s232, 15
      %s235 = smul.addr %s234, 8
      %s236 = scalar_lea.vmem %s0, %s235
      %s237 = smul.u32 8, %s16
      %s238 = smul.u32 8, %s16
      %p239 = scmp.lt.s32.totalorder %s238, 15
      %s240 = scalar_select %p239, %s238, 15
      %s241 = smul.addr %s240, 8
      %s242 = scalar_lea.vmem %s1, %s241
      %s243 = smul.u32 8, %s16
      %s244 = smul.u32 8, %s16
      %p245 = scmp.lt.s32.totalorder %s244, 15
      %s246 = scalar_select %p245, %s244, 15
      %s247 = smul.addr %s246, 8
      %s248 = scalar_lea.vmem %s5, %s247
      %s249 = smul.u32 8, %s16
      %v250 = vld [vmem:[%s236] sm:$0xff]
      %v251 = vld [vmem:[%s236 + $0x8] sm:$0xff]
      %v252 = vld [vmem:[%s236 + $0x10] sm:$0xff]
      %v253 = vld [vmem:[%s236 + $0x18] sm:$0xff]
      %v254 = vld [vmem:[%s236 + $0x20] sm:$0xff]
      %v255 = vld [vmem:[%s236 + $0x28] sm:$0xff]
      %v256 = vld [vmem:[%s236 + $0x30] sm:$0xff]
      %v257 = vld [vmem:[%s236 + $0x38] sm:$0xff]
      %v258 = vpack.c.bf16 %v251, %v250
      %v259 = vpack.c.bf16 %v253, %v252
      %v260 = vpack.c.bf16 %v255, %v254
      %v261 = vpack.c.bf16 %v257, %v256
      %v262 = vld [vmem:[%s242] sm:$0xff]
      %v263 = vld [vmem:[%s242 + $0x8] sm:$0xff]
      %v264 = vld [vmem:[%s242 + $0x10] sm:$0xff]
      %v265 = vld [vmem:[%s242 + $0x18] sm:$0xff]
      %v266 = vld [vmem:[%s242 + $0x20] sm:$0xff]
      %v267 = vld [vmem:[%s242 + $0x28] sm:$0xff]
      %v268 = vld [vmem:[%s242 + $0x30] sm:$0xff]
      %v269 = vld [vmem:[%s242 + $0x38] sm:$0xff]
      %v270 = vpack.c.bf16 %v263, %v262
      %v271 = vpack.c.bf16 %v265, %v264
      %v272 = vpack.c.bf16 %v267, %v266
      %v273 = vpack.c.bf16 %v269, %v268
      %v274 = vld [vmem:[%s2] sm:$0xf]
      %v275 = vld [vmem:[%s2 + $0x4] sm:$0xf]
      %v276 = vld [vmem:[%s2 + $0x8] sm:$0xf]
      %v277 = vld [vmem:[%s2 + $0xc] sm:$0xf]
      %v278 = vld [vmem:[%s2 + $0x10] sm:$0xf]
      %v279 = vld [vmem:[%s2 + $0x14] sm:$0xf]
      %v280 = vld [vmem:[%s2 + $0x18] sm:$0xf]
      %v281 = vld [vmem:[%s2 + $0x1c] sm:$0xf]
      %v282 = vld [vmem:[%s2 + $0x20] sm:$0xf]
      %v283 = vld [vmem:[%s2 + $0x24] sm:$0xf]
      %v284 = vld [vmem:[%s2 + $0x28] sm:$0xf]
      %v285 = vld [vmem:[%s2 + $0x2c] sm:$0xf]
      %v286 = vld [vmem:[%s2 + $0x30] sm:$0xf]
      %v287 = vld [vmem:[%s2 + $0x34] sm:$0xf]
      %v288 = vld [vmem:[%s2 + $0x38] sm:$0xf]
      %v289 = vld [vmem:[%s2 + $0x3c] sm:$0xf]
      %v290 = vld [vmem:[%s3] sm:$0xf]
      %v291 = vld [vmem:[%s3 + $0x4] sm:$0xf]
      %v292 = vld [vmem:[%s3 + $0x8] sm:$0xf]
      %v293 = vld [vmem:[%s3 + $0xc] sm:$0xf]
      %v294 = vld [vmem:[%s3 + $0x10] sm:$0xf]
      %v295 = vld [vmem:[%s3 + $0x14] sm:$0xf]
      %v296 = vld [vmem:[%s3 + $0x18] sm:$0xf]
      %v297 = vld [vmem:[%s3 + $0x1c] sm:$0xf]
      %v298 = vld [vmem:[%s3 + $0x20] sm:$0xf]
      %v299 = vld [vmem:[%s3 + $0x24] sm:$0xf]
      %v300 = vld [vmem:[%s3 + $0x28] sm:$0xf]
      %v301 = vld [vmem:[%s3 + $0x2c] sm:$0xf]
      %v302 = vld [vmem:[%s3 + $0x30] sm:$0xf]
      %v303 = vld [vmem:[%s3 + $0x34] sm:$0xf]
      %v304 = vld [vmem:[%s3 + $0x38] sm:$0xf]
      %v305 = vld [vmem:[%s3 + $0x3c] sm:$0xf]
      %v322 = vunpack.c.l.b16 %v290
      %v323 = vunpack.c.l.b16 %v291
      %v324 = vunpack.c.l.b16 %v292
      %v325 = vunpack.c.l.b16 %v293
      %v326 = vunpack.c.l.b16 %v294
      %v327 = vunpack.c.l.b16 %v295
      %v328 = vunpack.c.l.b16 %v296
      %v329 = vunpack.c.l.b16 %v297
      %v330 = vunpack.c.l.b16 %v298
      %v331 = vunpack.c.l.b16 %v299
      %v332 = vunpack.c.l.b16 %v300
      %v333 = vunpack.c.l.b16 %v301
      %v334 = vunpack.c.l.b16 %v302
      %v335 = vunpack.c.l.b16 %v303
      %v336 = vunpack.c.l.b16 %v304
      %v337 = vunpack.c.l.b16 %v305
      %v338 = vpack.c.b16 %v323, %v322
      %v339 = vpack.c.b16 %v325, %v324
      %v340 = vpack.c.b16 %v327, %v326
      %v341 = vpack.c.b16 %v329, %v328
      %v342 = vpack.c.b16 %v331, %v330
      %v343 = vpack.c.b16 %v333, %v332
      %v344 = vpack.c.b16 %v335, %v334
      %v345 = vpack.c.b16 %v337, %v336
      %354 = vmatpush.bf16.msra.mxu0 %v345
      %355 = vmatpush.bf16.msra.mxu0 %v344
      %356 = vmatpush.bf16.msra.mxu0 %v343
      %357 = vmatpush.bf16.msra.mxu0 %v342
      %358 = vmatpush.bf16.msra.mxu0 %v341
      %359 = vmatpush.bf16.msra.mxu0 %v340
      %360 = vmatpush.bf16.msra.mxu0 %v339
      %361 = vmatpush.bf16.msra.mxu0 %v338
      %362 = vmatmul.bf16.gmra.mxu0 %v270
      %v363 = vpop.f32.mrf.mxu0
      %v364 = vadd.f32 0.0, %v363
      %v365 = vpop.f32.mrf.mxu0
      %v366 = vadd.f32 0.0, %v365
      %367 = vmatmul.bf16.gmra.mxu0 %v271
      %v368 = vpop.f32.mrf.mxu0
      %v369 = vadd.f32 0.0, %v368
      %v370 = vpop.f32.mrf.mxu0
      %v371 = vadd.f32 0.0, %v370
      %372 = vmatmul.bf16.gmra.mxu0 %v272
      %v373 = vpop.f32.mrf.mxu0
      %v374 = vadd.f32 0.0, %v373
      %v375 = vpop.f32.mrf.mxu0
      %v376 = vadd.f32 0.0, %v375
      %377 = vmatmul.bf16.gmra.mxu0 %v273
      %v378 = vpop.f32.mrf.mxu0
      %v379 = vadd.f32 0.0, %v378
      %v380 = vpop.f32.mrf.mxu0
      %v381 = vadd.f32 0.0, %v380
      %382 = vdwg.mxu0
      %v399 = vunpack.c.l.b16 %v274
      %v400 = vunpack.c.l.b16 %v275
      %v401 = vunpack.c.l.b16 %v276
      %v402 = vunpack.c.l.b16 %v277
      %v403 = vunpack.c.l.b16 %v278
      %v404 = vunpack.c.l.b16 %v279
      %v405 = vunpack.c.l.b16 %v280
      %v406 = vunpack.c.l.b16 %v281
      %v407 = vunpack.c.l.b16 %v282
      %v408 = vunpack.c.l.b16 %v283
      %v409 = vunpack.c.l.b16 %v284
      %v410 = vunpack.c.l.b16 %v285
      %v411 = vunpack.c.l.b16 %v286
      %v412 = vunpack.c.l.b16 %v287
      %v413 = vunpack.c.l.b16 %v288
      %v414 = vunpack.c.l.b16 %v289
      %v415 = vpack.c.b16 %v400, %v399
      %v416 = vpack.c.b16 %v402, %v401
      %v417 = vpack.c.b16 %v404, %v403
      %v418 = vpack.c.b16 %v406, %v405
      %v419 = vpack.c.b16 %v408, %v407
      %v420 = vpack.c.b16 %v410, %v409
      %v421 = vpack.c.b16 %v412, %v411
      %v422 = vpack.c.b16 %v414, %v413
      %431 = vmatpush.bf16.msra.mxu0 %v422
      %432 = vmatpush.bf16.msra.mxu0 %v421
      %433 = vmatpush.bf16.msra.mxu0 %v420
      %434 = vmatpush.bf16.msra.mxu0 %v419
      %435 = vmatpush.bf16.msra.mxu0 %v418
      %436 = vmatpush.bf16.msra.mxu0 %v417
      %437 = vmatpush.bf16.msra.mxu0 %v416
      %438 = vmatpush.bf16.msra.mxu0 %v415
      %439 = vmatmul.bf16.gmra.mxu0 %v258
      %v440 = vpop.f32.mrf.mxu0
      %v441 = vadd.f32 %v364, %v440
      %v442 = vpop.f32.mrf.mxu0
      %v443 = vadd.f32 %v366, %v442
      %444 = vmatmul.bf16.gmra.mxu0 %v259
      %v445 = vpop.f32.mrf.mxu0
      %v446 = vadd.f32 %v369, %v445
      %v447 = vpop.f32.mrf.mxu0
      %v448 = vadd.f32 %v371, %v447
      %449 = vmatmul.bf16.gmra.mxu0 %v260
      %v450 = vpop.f32.mrf.mxu0
      %v451 = vadd.f32 %v374, %v450
      %v452 = vpop.f32.mrf.mxu0
      %v453 = vadd.f32 %v376, %v452
      %454 = vmatmul.bf16.gmra.mxu0 %v261
      %v455 = vpop.f32.mrf.mxu0
      %v456 = vadd.f32 %v379, %v455
      %v457 = vpop.f32.mrf.mxu0
      %v458 = vadd.f32 %v381, %v457
      %459 = vdwg.mxu0
      %v460 = vld [vmem:[%s4] sm:$0x1]
      %v462 = vperm.slane %v460, 0
      %v464 = vadd.f32 %v441, %v462
      %v465 = vadd.f32 %v443, %v462
      %v466 = vadd.f32 %v446, %v462
      %v467 = vadd.f32 %v448, %v462
      %v468 = vadd.f32 %v451, %v462
      %v469 = vadd.f32 %v453, %v462
      %v470 = vadd.f32 %v456, %v462
      %v471 = vadd.f32 %v458, %v462
      %v472 = vmax.f32 %v464, 0.0
      %v473 = vmax.f32 %v465, 0.0
      %v474 = vmax.f32 %v466, 0.0
      %v475 = vmax.f32 %v467, 0.0
      %v476 = vmax.f32 %v468, 0.0
      %v477 = vmax.f32 %v469, 0.0
      %v478 = vmax.f32 %v470, 0.0
      %v479 = vmax.f32 %v471, 0.0
      %480 = vst [vmem:[%s248] sm:$0xff] %v472
      %481 = vst [vmem:[%s248 + $0x8] sm:$0xff] %v473
      %482 = vst [vmem:[%s248 + $0x10] sm:$0xff] %v474
      %483 = vst [vmem:[%s248 + $0x18] sm:$0xff] %v475
      %484 = vst [vmem:[%s248 + $0x20] sm:$0xff] %v476
      %485 = vst [vmem:[%s248 + $0x28] sm:$0xff] %v477
      %486 = vst [vmem:[%s248 + $0x30] sm:$0xff] %v478
      %487 = vst [vmem:[%s248 + $0x38] sm:$0xff] %v479
      %s488 = smul.u32 8, %s16
      %p489 = scmp.lt.s32.totalorder %s488, 15
      %s490 = scalar_select %p489, %s488, 15
      %s491 = smul.addr %s490, 8
      %s492 = scalar_lea.vmem %s5, %s491
      // Predicated region
      $region41: #{bi_propagate_forward.13} parent=39 // pred_check
        %p493 = pneg %p149
      $region42: #{bi_propagate_forward.13} parent=39 // pred_check_branch
        %495 = sbr.rel (%p493) target = $region44
      $region43: #{bi_propagate_forward.13} parent=39 // pred_region
        %s496 = smul.u32 8, %s16
      $region44: #{bi_propagate_forward.13} parent=39 // pred_fallthru
        _
    $region40: #{bi_propagate_forward.13} parent=5 // pred_fallthru
      _
    %p497 = scmp.le.s32.totalorder 2, %s11
    // Predicated region
    $region45: #{bi_propagate_forward.13} parent=5 // pred_check
      %p498 = pneg %p497
    $region46: #{bi_propagate_forward.13} parent=5 // pred_check_branch
      %500 = sbr.rel (%p498) target = $region48
    $region47: #{bi_propagate_forward.13} parent=5 // pred_region
      %s501 = ssub.s32 %s11, 2
      // Predicated region
      $region49: #{bi_propagate_forward.13} parent=47 // pred_check
        %p502 = pneg %p155
      $region50: #{bi_propagate_forward.13} parent=47 // pred_check_branch
        %504 = sbr.rel (%p502) target = $region52
      $region51: #{bi_propagate_forward.13} parent=47 // pred_region
        %s505 = smul.u32 8, %s17
        %p506 = scmp.lt.s32.totalorder %s505, 15
        %s507 = scalar_select %p506, %s505, 15
        %s508 = smul.addr %s507, 8
        %s509 = scalar_lea.vmem %s5, %s508
      $region52: #{bi_propagate_forward.13} parent=47 // pred_fallthru
        _
    $region48: #{bi_propagate_forward.13} parent=5 // pred_fallthru
      _
  $region6: #{bi_propagate_forward.13} parent=0 // loop_footer
    %s15 = sadd.s32 1, %s11
  $region7: #{bi_propagate_forward.13} parent=0 // loop_footer_branch
    %10 = sbr.rel target = $region3
  $region8: #{bi_propagate_forward.13} parent=0 // loop_exit
    _

// kernel: bi_propagate_forward.12
$region0: #{bi_propagate_forward.12}
  #allocation0 [shape = 'u32[]', space=smem, size = 0x4, offset = 0x4, fixed_abs, tag = 'smem constant byte address 0x4 - core index']
  #allocation1 [shape = 'u32[72,128]{1,0:T(1,128)}', space=vmem, size = 0x9000, scoped, tag = 'internal scratch']
  %s0 = inlined_call_operand.vmem [shape: f32[2,18,9,128], index: 0, kind: input, shape index: {}, may-alias: {0,2,4}]
  %s1 = inlined_call_operand.vmem [shape: f32[2,18,9,128], index: 1, kind: input, shape index: {}, may-alias: {1,3,5}]
  %s2 = inlined_call_operand.vmem [shape: f32[2,18,9,128], index: 2, kind: input, shape index: {}, may-alias: {0,2,4}]
  %s3 = inlined_call_operand.vmem [shape: f32[2,18,9,128], index: 3, kind: input, shape index: {}, may-alias: {1,3,5}]
  %s4 = inlined_call_operand.vmem [shape: f32[2,18,9,128], index: 4, kind: input, shape index: {}, may-alias: {0,2,4}]
  %s5 = inlined_call_operand.vmem [shape: f32[2,18,9,128], index: 5, kind: input, shape index: {}, may-alias: {1,3,5}]
  %s6 = inlined_call_operand.vmem [shape: bf16[9,128,128], index: 6, kind: input, shape index: {}]
  %s7 = inlined_call_operand.vmem [shape: f32[1,128], index: 7, kind: input, shape index: {}]
  %s8 = inlined_call_operand.vmem [shape: f32[2,8,8,128], index: 8, kind: output, shape index: {}]
  %s9 = sld [smem:[#allocation0]]
  $region65: #{bi_propagate_forward.12} parent=0
    _
  %s11 = ssub.s32 1, %s9
  %s12 = scalar_select 0, %s11, %s9
  loop: start=0, step=1, limit=18
  $region2: #{bi_propagate_forward.12} parent=0 // loop_pre_header
    _
  $region3: #{bi_propagate_forward.12} parent=0 // loop_header
    %s14 = sphi 0, %s18
    %p15 = scmp.ge.s32.totalorder %s14, 18
    %s21 = sphi 0, %s33
    %s22 = sphi 0, %s29
    %s23 = sphi 0, %s21
    %s24 = sphi 0, %s22
    %s25 = sphi 0, %s23
    %s26 = sphi 0, %s24
    %s40 = sphi 0, %s42
    %s43 = sphi 0, %s40
    %s44 = sphi 0, %s43
    %s60 = sphi 0, %s44
    %s70 = sphi 0, %s72
    %s73 = sphi 0, %s70
    %s74 = sphi 0, %s73
    %s90 = sphi 0, %s74
    %s102 = sphi 0, %s104
    %s105 = sphi 0, %s102
    %s106 = sphi 0, %s105
    %s122 = sphi 0, %s106
    %s134 = sphi 0, %s136
    %s137 = sphi 0, %s134
    %s138 = sphi 0, %s137
    %s154 = sphi 0, %s138
    %s166 = sphi 0, %s168
    %s169 = sphi 0, %s166
    %s170 = sphi 0, %s169
    %s186 = sphi 0, %s170
    %s198 = sphi 0, %s200
    %s201 = sphi 0, %s198
    %s202 = sphi 0, %s201
    %s218 = sphi 0, %s202
    %s222 = sphi 0, %s222
    %s224 = sphi 0, %s222
    %s225 = sphi 0, %s224
    %s239 = sphi 0, %s225
    %s243 = sphi 0, %s243
    %s245 = sphi 0, %s243
    %s246 = sphi 0, %s245
    %s260 = sphi 0, %s246
    %s268 = sphi 0, %s270
    %s271 = sphi 0, %s268
    %s272 = sphi 0, %s271
    %s288 = sphi 0, %s272
  $region4: #{bi_propagate_forward.12} parent=0 // loop_header_branch
    %17 = sbr.rel (%p15) target = $region8
  $region5: #{bi_propagate_forward.12} parent=0 // loop_body
    %s19 = ssub.s32 %s14, 1
    %s20 = ssub.s32 %s14, 2
    %s27 = sadd.s32 1, %s22
    %p28 = scmp.ge.s32.totalorder %s27, 8
    %s29 = scalar_select %p28, 0, %s27
    %s30 = sadd.s32 1, %s21
    %s31 = scalar_select %p28, %s30, %s21
    %p32 = scmp.ge.s32.totalorder %s31, 2
    %s33 = scalar_select %p32, 0, %s31
    %s34 = smul.u32 %s22, 2
    %s35 = smul.u32 %s29, 2
    %s36 = ssub.s32 %s21, %s33
    %s37 = ssub.s32 %s34, %s35
    %s38 = sor.u32 %s36, %s37
    %p39 = scmp.eq.s32.totalorder %s38, 0
    %s41 = sadd.s32 %s40, 1
    %s42 = scalar_select %p39, %s40, %s41
    %p45 = pneg %p39
    %p46 = scmp.eq.s32.totalorder %s14, 15
    %p47 = por %p45, %p46
    %p48 = scmp.ne.s32.totalorder %s40, %s43
    %p49 = scmp.eq.s32.totalorder %s14, 0
    %p50 = por %p48, %p49
    %p51 = scmp.ne.s32.totalorder %s40, %s43
    %p52 = scmp.eq.s32.totalorder %s19, 15
    %p53 = por %p51, %p52
    %p54 = scmp.ne.s32.totalorder %s43, %s44
    %p55 = scmp.eq.s32.totalorder %s19, 0
    %p56 = por %p54, %p55
    %p57 = scmp.ne.s32.totalorder %s43, %s44
    %p58 = scmp.eq.s32.totalorder %s20, 15
    %p59 = por %p57, %p58
    %p61 = scmp.ne.s32.totalorder %s44, %s60
    %p62 = scmp.eq.s32.totalorder %s20, 0
    %p63 = por %p61, %p62
    %s64 = smul.u32 %s22, 2
    %s65 = smul.u32 %s29, 2
    %s66 = ssub.s32 %s21, %s33
    %s67 = ssub.s32 %s64, %s65
    %s68 = sor.u32 %s66, %s67
    %p69 = scmp.eq.s32.totalorder %s68, 0
    %s71 = sadd.s32 %s70, 1
    %s72 = scalar_select %p69, %s70, %s71
    %p75 = pneg %p69
    %p76 = scmp.eq.s32.totalorder %s14, 15
    %p77 = por %p75, %p76
    %p78 = scmp.ne.s32.totalorder %s70, %s73
    %p79 = scmp.eq.s32.totalorder %s14, 0
    %p80 = por %p78, %p79
    %p81 = scmp.ne.s32.totalorder %s70, %s73
    %p82 = scmp.eq.s32.totalorder %s19, 15
    %p83 = por %p81, %p82
    %p84 = scmp.ne.s32.totalorder %s73, %s74
    %p85 = scmp.eq.s32.totalorder %s19, 0
    %p86 = por %p84, %p85
    %p87 = scmp.ne.s32.totalorder %s73, %s74
    %p88 = scmp.eq.s32.totalorder %s20, 15
    %p89 = por %p87, %p88
    %p91 = scmp.ne.s32.totalorder %s74, %s90
    %p92 = scmp.eq.s32.totalorder %s20, 0
    %p93 = por %p91, %p92
    %s94 = smul.u32 %s22, 2
    %s95 = sadd.s32 %s94, 1
    %s96 = smul.u32 %s29, 2
    %s97 = sadd.s32 %s96, 1
    %s98 = ssub.s32 %s21, %s33
    %s99 = ssub.s32 %s95, %s97
    %s100 = sor.u32 %s98, %s99
    %p101 = scmp.eq.s32.totalorder %s100, 0
    %s103 = sadd.s32 %s102, 1
    %s104 = scalar_select %p101, %s102, %s103
    %p107 = pneg %p101
    %p108 = scmp.eq.s32.totalorder %s14, 15
    %p109 = por %p107, %p108
    %p110 = scmp.ne.s32.totalorder %s102, %s105
    %p111 = scmp.eq.s32.totalorder %s14, 0
    %p112 = por %p110, %p111
    %p113 = scmp.ne.s32.totalorder %s102, %s105
    %p114 = scmp.eq.s32.totalorder %s19, 15
    %p115 = por %p113, %p114
    %p116 = scmp.ne.s32.totalorder %s105, %s106
    %p117 = scmp.eq.s32.totalorder %s19, 0
    %p118 = por %p116, %p117
    %p119 = scmp.ne.s32.totalorder %s105, %s106
    %p120 = scmp.eq.s32.totalorder %s20, 15
    %p121 = por %p119, %p120
    %p123 = scmp.ne.s32.totalorder %s106, %s122
    %p124 = scmp.eq.s32.totalorder %s20, 0
    %p125 = por %p123, %p124
    %s126 = smul.u32 %s22, 2
    %s127 = sadd.s32 %s126, 1
    %s128 = smul.u32 %s29, 2
    %s129 = sadd.s32 %s128, 1
    %s130 = ssub.s32 %s21, %s33
    %s131 = ssub.s32 %s127, %s129
    %s132 = sor.u32 %s130, %s131
    %p133 = scmp.eq.s32.totalorder %s132, 0
    %s135 = sadd.s32 %s134, 1
    %s136 = scalar_select %p133, %s134, %s135
    %p139 = pneg %p133
    %p140 = scmp.eq.s32.totalorder %s14, 15
    %p141 = por %p139, %p140
    %p142 = scmp.ne.s32.totalorder %s134, %s137
    %p143 = scmp.eq.s32.totalorder %s14, 0
    %p144 = por %p142, %p143
    %p145 = scmp.ne.s32.totalorder %s134, %s137
    %p146 = scmp.eq.s32.totalorder %s19, 15
    %p147 = por %p145, %p146
    %p148 = scmp.ne.s32.totalorder %s137, %s138
    %p149 = scmp.eq.s32.totalorder %s19, 0
    %p150 = por %p148, %p149
    %p151 = scmp.ne.s32.totalorder %s137, %s138
    %p152 = scmp.eq.s32.totalorder %s20, 15
    %p153 = por %p151, %p152
    %p155 = scmp.ne.s32.totalorder %s138, %s154
    %p156 = scmp.eq.s32.totalorder %s20, 0
    %p157 = por %p155, %p156
    %s158 = smul.u32 %s22, 2
    %s159 = sadd.s32 %s158, 2
    %s160 = smul.u32 %s29, 2
    %s161 = sadd.s32 %s160, 2
    %s162 = ssub.s32 %s21, %s33
    %s163 = ssub.s32 %s159, %s161
    %s164 = sor.u32 %s162, %s163
    %p165 = scmp.eq.s32.totalorder %s164, 0
    %s167 = sadd.s32 %s166, 1
    %s168 = scalar_select %p165, %s166, %s167
    %p171 = pneg %p165
    %p172 = scmp.eq.s32.totalorder %s14, 15
    %p173 = por %p171, %p172
    %p174 = scmp.ne.s32.totalorder %s166, %s169
    %p175 = scmp.eq.s32.totalorder %s14, 0
    %p176 = por %p174, %p175
    %p177 = scmp.ne.s32.totalorder %s166, %s169
    %p178 = scmp.eq.s32.totalorder %s19, 15
    %p179 = por %p177, %p178
    %p180 = scmp.ne.s32.totalorder %s169, %s170
    %p181 = scmp.eq.s32.totalorder %s19, 0
    %p182 = por %p180, %p181
    %p183 = scmp.ne.s32.totalorder %s169, %s170
    %p184 = scmp.eq.s32.totalorder %s20, 15
    %p185 = por %p183, %p184
    %p187 = scmp.ne.s32.totalorder %s170, %s186
    %p188 = scmp.eq.s32.totalorder %s20, 0
    %p189 = por %p187, %p188
    %s190 = smul.u32 %s22, 2
    %s191 = sadd.s32 %s190, 2
    %s192 = smul.u32 %s29, 2
    %s193 = sadd.s32 %s192, 2
    %s194 = ssub.s32 %s21, %s33
    %s195 = ssub.s32 %s191, %s193
    %s196 = sor.u32 %s194, %s195
    %p197 = scmp.eq.s32.totalorder %s196, 0
    %s199 = sadd.s32 %s198, 1
    %s200 = scalar_select %p197, %s198, %s199
    %p203 = pneg %p197
    %p204 = scmp.eq.s32.totalorder %s14, 15
    %p205 = por %p203, %p204
    %p206 = scmp.ne.s32.totalorder %s198, %s201
    %p207 = scmp.eq.s32.totalorder %s14, 0
    %p208 = por %p206, %p207
    %p209 = scmp.ne.s32.totalorder %s198, %s201
    %p210 = scmp.eq.s32.totalorder %s19, 15
    %p211 = por %p209, %p210
    %p212 = scmp.ne.s32.totalorder %s201, %s202
    %p213 = scmp.eq.s32.totalorder %s19, 0
    %p214 = por %p212, %p213
    %p215 = scmp.ne.s32.totalorder %s201, %s202
    %p216 = scmp.eq.s32.totalorder %s20, 15
    %p217 = por %p215, %p216
    %p219 = scmp.ne.s32.totalorder %s202, %s218
    %p220 = scmp.eq.s32.totalorder %s20, 0
    %p221 = por %p219, %p220
    %s223 = sadd.s32 %s222, 1
    %p226 = scmp.eq.s32.totalorder %s14, 15
    %p227 = scmp.ne.s32.totalorder %s222, %s224
    %p228 = scmp.eq.s32.totalorder %s14, 0
    %p229 = por %p227, %p228
    %p230 = scmp.ne.s32.totalorder %s222, %s224
    %p231 = scmp.eq.s32.totalorder %s19, 15
    %p232 = por %p230, %p231
    %p233 = scmp.ne.s32.totalorder %s224, %s225
    %p234 = scmp.eq.s32.totalorder %s19, 0
    %p235 = por %p233, %p234
    %p236 = scmp.ne.s32.totalorder %s224, %s225
    %p237 = scmp.eq.s32.totalorder %s20, 15
    %p238 = por %p236, %p237
    %p240 = scmp.ne.s32.totalorder %s225, %s239
    %p241 = scmp.eq.s32.totalorder %s20, 0
    %p242 = por %p240, %p241
    %s244 = sadd.s32 %s243, 1
    %p247 = scmp.eq.s32.totalorder %s14, 15
    %p248 = scmp.ne.s32.totalorder %s243, %s245
    %p249 = scmp.eq.s32.totalorder %s14, 0
    %p250 = por %p248, %p249
    %p251 = scmp.ne.s32.totalorder %s243, %s245
    %p252 = scmp.eq.s32.totalorder %s19, 15
    %p253 = por %p251, %p252
    %p254 = scmp.ne.s32.totalorder %s245, %s246
    %p255 = scmp.eq.s32.totalorder %s19, 0
    %p256 = por %p254, %p255
    %p257 = scmp.ne.s32.totalorder %s245, %s246
    %p258 = scmp.eq.s32.totalorder %s20, 15
    %p259 = por %p257, %p258
    %p261 = scmp.ne.s32.totalorder %s246, %s260
    %p262 = scmp.eq.s32.totalorder %s20, 0
    %p263 = por %p261, %p262
    %s264 = ssub.s32 %s21, %s33
    %s265 = ssub.s32 %s22, %s29
    %s266 = sor.u32 %s264, %s265
    %p267 = scmp.eq.s32.totalorder %s266, 0
    %s269 = sadd.s32 %s268, 1
    %s270 = scalar_select %p267, %s268, %s269
    %p273 = pneg %p267
    %p274 = scmp.eq.s32.totalorder %s14, 15
    %p275 = por %p273, %p274
    %p276 = scmp.ne.s32.totalorder %s268, %s271
    %p277 = scmp.eq.s32.totalorder %s14, 0
    %p278 = por %p276, %p277
    %p279 = scmp.ne.s32.totalorder %s268, %s271
    %p280 = scmp.eq.s32.totalorder %s19, 15
    %p281 = por %p279, %p280
    %p282 = scmp.ne.s32.totalorder %s271, %s272
    %p283 = scmp.eq.s32.totalorder %s19, 0
    %p284 = por %p282, %p283
    %p285 = scmp.ne.s32.totalorder %s271, %s272
    %p286 = scmp.eq.s32.totalorder %s20, 15
    %p287 = por %p285, %p286
    %p289 = scmp.ne.s32.totalorder %s272, %s288
    %p290 = scmp.eq.s32.totalorder %s20, 0
    %p291 = por %p289, %p290
    %p292 = scmp.le.s32.totalorder 1, %s14
    %p293 = scmp.lt.s32.totalorder %s14, 17
    %p294 = pnand %p292, %p293
    %p295 = pneg %p294
    // Predicated region
    $region9: #{bi_propagate_forward.12} parent=5 // pred_check
      _
    $region10: #{bi_propagate_forward.12} parent=5 // pred_check_branch
      %297 = sbr.rel (%p294) target = $region12
    $region11: #{bi_propagate_forward.12} parent=5 // pred_region
      %s298 = ssub.s32 %s14, 1
      // Predicated region
      $region13: #{bi_propagate_forward.12} parent=11 // pred_check
        %p299 = pneg %p235
      $region14: #{bi_propagate_forward.12} parent=11 // pred_check_branch
        %301 = sbr.rel (%p299) target = $region16
      $region15: #{bi_propagate_forward.12} parent=11 // pred_region
        _
      $region16: #{bi_propagate_forward.12} parent=11 // pred_fallthru
        _
      // Predicated region
      $region17: #{bi_propagate_forward.12} parent=11 // pred_check
        %p302 = pneg %p256
      $region18: #{bi_propagate_forward.12} parent=11 // pred_check_branch
        %304 = sbr.rel (%p302) target = $region20
      $region19: #{bi_propagate_forward.12} parent=11 // pred_region
        _
      $region20: #{bi_propagate_forward.12} parent=11 // pred_fallthru
        _
    $region12: #{bi_propagate_forward.12} parent=5 // pred_fallthru
      _
    %p305 = scmp.lt.s32.totalorder %s14, 16
    // Predicated region
    $region21: #{bi_propagate_forward.12} parent=5 // pred_check
      %p306 = pneg %p305
    $region22: #{bi_propagate_forward.12} parent=5 // pred_check_branch
      %308 = sbr.rel (%p306) target = $region24
    $region23: #{bi_propagate_forward.12} parent=5 // pred_region
      // Predicated region
      $region25: #{bi_propagate_forward.12} parent=23 // pred_check
        %p309 = pneg %p50
      $region26: #{bi_propagate_forward.12} parent=23 // pred_check_branch
        %311 = sbr.rel (%p309) target = $region28
      $region27: #{bi_propagate_forward.12} parent=23 // pred_region
        %s312 = smul.u32 %s22, 2
        %p313 = scmp.lt.s32.totalorder %s21, 1
        %s314 = scalar_select %p313, %s21, 1
        %p315 = scmp.lt.s32.totalorder %s312, 17
        %s316 = scalar_select %p315, %s312, 17
        %s317 = smul.addr %s316, 2
        %s318 = smul.addr %s314, 36
        %s319 = sadd.s32 %s317, %s318
        %s320 = smul.addr %s319, 8
        %s321 = scalar_lea.vmem %s0, %s320
        %s322 = smul.u32 %s22, 2
      $region28: #{bi_propagate_forward.12} parent=23 // pred_fallthru
        _
      // Predicated region
      $region29: #{bi_propagate_forward.12} parent=23 // pred_check
        %p323 = pneg %p80
      $region30: #{bi_propagate_forward.12} parent=23 // pred_check_branch
        %325 = sbr.rel (%p323) target = $region32
      $region31: #{bi_propagate_forward.12} parent=23 // pred_region
        %s326 = smul.u32 %s22, 2
        %p327 = scmp.lt.s32.totalorder %s21, 1
        %s328 = scalar_select %p327, %s21, 1
        %p329 = scmp.lt.s32.totalorder %s326, 17
        %s330 = scalar_select %p329, %s326, 17
        %s331 = smul.addr %s330, 2
        %s332 = smul.addr %s328, 36
        %s333 = sadd.s32 %s331, %s332
        %s334 = smul.addr %s333, 8
        %s335 = scalar_lea.vmem %s1, %s334
        %s336 = smul.u32 %s22, 2
      $region32: #{bi_propagate_forward.12} parent=23 // pred_fallthru
        _
      // Predicated region
      $region33: #{bi_propagate_forward.12} parent=23 // pred_check
        %p337 = pneg %p112
      $region34: #{bi_propagate_forward.12} parent=23 // pred_check_branch
        %339 = sbr.rel (%p337) target = $region36
      $region35: #{bi_propagate_forward.12} parent=23 // pred_region
        %s340 = smul.u32 %s22, 2
        %s341 = sadd.s32 %s340, 1
        %p342 = scmp.lt.s32.totalorder %s21, 1
        %s343 = scalar_select %p342, %s21, 1
        %p344 = scmp.lt.s32.totalorder %s341, 17
        %s345 = scalar_select %p344, %s341, 17
        %s346 = smul.addr %s345, 2
        %s347 = smul.addr %s343, 36
        %s348 = sadd.s32 %s346, %s347
        %s349 = smul.addr %s348, 8
        %s350 = scalar_lea.vmem %s2, %s349
        %s351 = smul.u32 %s22, 2
        %s352 = sadd.s32 %s351, 1
      $region36: #{bi_propagate_forward.12} parent=23 // pred_fallthru
        _
      // Predicated region
      $region37: #{bi_propagate_forward.12} parent=23 // pred_check
        %p353 = pneg %p144
      $region38: #{bi_propagate_forward.12} parent=23 // pred_check_branch
        %355 = sbr.rel (%p353) target = $region40
      $region39: #{bi_propagate_forward.12} parent=23 // pred_region
        %s356 = smul.u32 %s22, 2
        %s357 = sadd.s32 %s356, 1
        %p358 = scmp.lt.s32.totalorder %s21, 1
        %s359 = scalar_select %p358, %s21, 1
        %p360 = scmp.lt.s32.totalorder %s357, 17
        %s361 = scalar_select %p360, %s357, 17
        %s362 = smul.addr %s361, 2
        %s363 = smul.addr %s359, 36
        %s364 = sadd.s32 %s362, %s363
        %s365 = smul.addr %s364, 8
        %s366 = scalar_lea.vmem %s3, %s365
        %s367 = smul.u32 %s22, 2
        %s368 = sadd.s32 %s367, 1
      $region40: #{bi_propagate_forward.12} parent=23 // pred_fallthru
        _
      // Predicated region
      $region41: #{bi_propagate_forward.12} parent=23 // pred_check
        %p369 = pneg %p176
      $region42: #{bi_propagate_forward.12} parent=23 // pred_check_branch
        %371 = sbr.rel (%p369) target = $region44
      $region43: #{bi_propagate_forward.12} parent=23 // pred_region
        %s372 = smul.u32 %s22, 2
        %s373 = sadd.s32 %s372, 2
        %p374 = scmp.lt.s32.totalorder %s21, 1
        %s375 = scalar_select %p374, %s21, 1
        %p376 = scmp.lt.s32.totalorder %s373, 17
        %s377 = scalar_select %p376, %s373, 17
        %s378 = smul.addr %s377, 2
        %s379 = smul.addr %s375, 36
        %s380 = sadd.s32 %s378, %s379
        %s381 = smul.addr %s380, 8
        %s382 = scalar_lea.vmem %s4, %s381
        %s383 = smul.u32 %s22, 2
        %s384 = sadd.s32 %s383, 2
      $region44: #{bi_propagate_forward.12} parent=23 // pred_fallthru
        _
      // Predicated region
      $region45: #{bi_propagate_forward.12} parent=23 // pred_check
        %p385 = pneg %p208
      $region46: #{bi_propagate_forward.12} parent=23 // pred_check_branch
        %387 = sbr.rel (%p385) target = $region48
      $region47: #{bi_propagate_forward.12} parent=23 // pred_region
        %s388 = smul.u32 %s22, 2
        %s389 = sadd.s32 %s388, 2
        %p390 = scmp.lt.s32.totalorder %s21, 1
        %s391 = scalar_select %p390, %s21, 1
        %p392 = scmp.lt.s32.totalorder %s389, 17
        %s393 = scalar_select %p392, %s389, 17
        %s394 = smul.addr %s393, 2
        %s395 = smul.addr %s391, 36
        %s396 = sadd.s32 %s394, %s395
        %s397 = smul.addr %s396, 8
        %s398 = scalar_lea.vmem %s5, %s397
        %s399 = smul.u32 %s22, 2
        %s400 = sadd.s32 %s399, 2
      $region48: #{bi_propagate_forward.12} parent=23 // pred_fallthru
        _
    $region24: #{bi_propagate_forward.12} parent=5 // pred_fallthru
      _
    %p401 = scmp.le.s32.totalorder 1, %s14
    %p402 = scmp.lt.s32.totalorder %s14, 17
    %p403 = pnand %p401, %p402
    %p404 = pneg %p403
    // Predicated region
    $region49: #{bi_propagate_forward.12} parent=5 // pred_check
      _
    $region50: #{bi_propagate_forward.12} parent=5 // pred_check_branch
      %406 = sbr.rel (%p403) target = $region52
    $region51: #{bi_propagate_forward.12} parent=5 // pred_region
      %s407 = ssub.s32 %s14, 1
      %s408 = smul.u32 %s24, 2
      %p409 = scmp.lt.s32.totalorder %s23, 1
      %s410 = scalar_select %p409, %s23, 1
      %p411 = scmp.lt.s32.totalorder %s408, 17
      %s412 = scalar_select %p411, %s408, 17
      %s413 = smul.addr %s412, 2
      %s414 = smul.addr %s410, 36
      %s415 = sadd.s32 %s413, %s414
      %s416 = smul.addr %s415, 8
      %s417 = scalar_lea.vmem %s0, %s416
      %p418 = pneg %p56
      %p419 = pneg %p53
      %s420 = smul.u32 %s24, 2
      %p421 = scmp.lt.s32.totalorder %s23, 1
      %s422 = scalar_select %p421, %s23, 1
      %p423 = scmp.lt.s32.totalorder %s420, 17
      %s424 = scalar_select %p423, %s420, 17
      %s425 = smul.addr %s424, 2
      %s426 = smul.addr %s422, 36
      %s427 = sadd.s32 %s425, %s426
      %s428 = smul.addr %s427, 8
      %s429 = scalar_lea.vmem %s1, %s428
      %p430 = pneg %p86
      %p431 = pneg %p83
      %s432 = smul.u32 %s24, 2
      %s433 = sadd.s32 %s432, 1
      %p434 = scmp.lt.s32.totalorder %s23, 1
      %s435 = scalar_select %p434, %s23, 1
      %p436 = scmp.lt.s32.totalorder %s433, 17
      %s437 = scalar_select %p436, %s433, 17
      %s438 = smul.addr %s437, 2
      %s439 = smul.addr %s435, 36
      %s440 = sadd.s32 %s438, %s439
      %s441 = smul.addr %s440, 8
      %s442 = scalar_lea.vmem %s2, %s441
      %p443 = pneg %p118
      %p444 = pneg %p115
      %s445 = smul.u32 %s24, 2
      %s446 = sadd.s32 %s445, 1
      %p447 = scmp.lt.s32.totalorder %s23, 1
      %s448 = scalar_select %p447, %s23, 1
      %p449 = scmp.lt.s32.totalorder %s446, 17
      %s450 = scalar_select %p449, %s446, 17
      %s451 = smul.addr %s450, 2
      %s452 = smul.addr %s448, 36
      %s453 = sadd.s32 %s451, %s452
      %s454 = smul.addr %s453, 8
      %s455 = scalar_lea.vmem %s3, %s454
      %p456 = pneg %p150
      %p457 = pneg %p147
      %s458 = smul.u32 %s24, 2
      %s459 = sadd.s32 %s458, 2
      %p460 = scmp.lt.s32.totalorder %s23, 1
      %s461 = scalar_select %p460, %s23, 1
      %p462 = scmp.lt.s32.totalorder %s459, 17
      %s463 = scalar_select %p462, %s459, 17
      %s464 = smul.addr %s463, 2
      %s465 = smul.addr %s461, 36
      %s466 = sadd.s32 %s464, %s465
      %s467 = smul.addr %s466, 8
      %s468 = scalar_lea.vmem %s4, %s467
      %p469 = pneg %p182
      %p470 = pneg %p179
      %s471 = smul.u32 %s24, 2
      %s472 = sadd.s32 %s471, 2
      %p473 = scmp.lt.s32.totalorder %s23, 1
      %s474 = scalar_select %p473, %s23, 1
      %p475 = scmp.lt.s32.totalorder %s472, 17
      %s476 = scalar_select %p475, %s472, 17
      %s477 = smul.addr %s476, 2
      %s478 = smul.addr %s474, 36
      %s479 = sadd.s32 %s477, %s478
      %s480 = smul.addr %s479, 8
      %s481 = scalar_lea.vmem %s5, %s480
      %p482 = pneg %p214
      %p483 = pneg %p211
      %p484 = pneg %p235
      %p485 = pneg %p232
      %p486 = pneg %p256
      %p487 = pneg %p253
      %p488 = pneg %p284
      %p489 = pneg %p281
      %p490 = scmp.lt.s32.totalorder %s23, 1
      %s491 = scalar_select %p490, %s23, 1
      %p492 = scmp.lt.s32.totalorder %s24, 7
      %s493 = scalar_select %p492, %s24, 7
      %s494 = smul.addr %s491, 8
      %s495 = sadd.s32 %s493, %s494
      %s496 = smul.addr %s495, 8
      %s497 = scalar_lea.vmem %s8, %s496
      %s498 = smul.u32 %s24, 2
      %p499 = scmp.lt.s32.totalorder %s23, 1
      %s500 = scalar_select %p499, %s23, 1
      %p501 = scmp.lt.s32.totalorder %s498, 17
      %s502 = scalar_select %p501, %s498, 17
      %s503 = smul.addr %s502, 2
      %s504 = smul.addr %s500, 36
      %s505 = sadd.s32 %s503, %s504
      %s506 = smul.addr %s505, 8
      %s507 = scalar_lea.vmem %s0, %s506
      %s508 = smul.u32 %s24, 2
      %s509 = smul.u32 %s24, 2
      %p510 = scmp.lt.s32.totalorder %s23, 1
      %s511 = scalar_select %p510, %s23, 1
      %p512 = scmp.lt.s32.totalorder %s509, 17
      %s513 = scalar_select %p512, %s509, 17
      %s514 = smul.addr %s513, 2
      %s515 = smul.addr %s511, 36
      %s516 = sadd.s32 %s514, %s515
      %s517 = smul.addr %s516, 8
      %s518 = scalar_lea.vmem %s1, %s517
      %s519 = smul.u32 %s24, 2
      %s520 = smul.u32 %s24, 2
      %s521 = sadd.s32 %s520, 1
      %p522 = scmp.lt.s32.totalorder %s23, 1
      %s523 = scalar_select %p522, %s23, 1
      %p524 = scmp.lt.s32.totalorder %s521, 17
      %s525 = scalar_select %p524, %s521, 17
      %s526 = smul.addr %s525, 2
      %s527 = smul.addr %s523, 36
      %s528 = sadd.s32 %s526, %s527
      %s529 = smul.addr %s528, 8
      %s530 = scalar_lea.vmem %s2, %s529
      %s531 = smul.u32 %s24, 2
      %s532 = sadd.s32 %s531, 1
      %s533 = smul.u32 %s24, 2
      %s534 = sadd.s32 %s533, 1
      %p535 = scmp.lt.s32.totalorder %s23, 1
      %s536 = scalar_select %p535, %s23, 1
      %p537 = scmp.lt.s32.totalorder %s534, 17
      %s538 = scalar_select %p537, %s534, 17
      %s539 = smul.addr %s538, 2
      %s540 = smul.addr %s536, 36
      %s541 = sadd.s32 %s539, %s540
      %s542 = smul.addr %s541, 8
      %s543 = scalar_lea.vmem %s3, %s542
      %s544 = smul.u32 %s24, 2
      %s545 = sadd.s32 %s544, 1
      %s546 = smul.u32 %s24, 2
      %s547 = sadd.s32 %s546, 2
      %p548 = scmp.lt.s32.totalorder %s23, 1
      %s549 = scalar_select %p548, %s23, 1
      %p550 = scmp.lt.s32.totalorder %s547, 17
      %s551 = scalar_select %p550, %s547, 17
      %s552 = smul.addr %s551, 2
      %s553 = smul.addr %s549, 36
      %s554 = sadd.s32 %s552, %s553
      %s555 = smul.addr %s554, 8
      %s556 = scalar_lea.vmem %s4, %s555
      %s557 = smul.u32 %s24, 2
      %s558 = sadd.s32 %s557, 2
      %s559 = smul.u32 %s24, 2
      %s560 = sadd.s32 %s559, 2
      %p561 = scmp.lt.s32.totalorder %s23, 1
      %s562 = scalar_select %p561, %s23, 1
      %p563 = scmp.lt.s32.totalorder %s560, 17
      %s564 = scalar_select %p563, %s560, 17
      %s565 = smul.addr %s564, 2
      %s566 = smul.addr %s562, 36
      %s567 = sadd.s32 %s565, %s566
      %s568 = smul.addr %s567, 8
      %s569 = scalar_lea.vmem %s5, %s568
      %s570 = smul.u32 %s24, 2
      %s571 = sadd.s32 %s570, 2
      %p572 = scmp.lt.s32.totalorder %s23, 1
      %s573 = scalar_select %p572, %s23, 1
      %p574 = scmp.lt.s32.totalorder %s24, 7
      %s575 = scalar_select %p574, %s24, 7
      %s576 = smul.addr %s573, 8
      %s577 = sadd.s32 %s575, %s576
      %s578 = smul.addr %s577, 8
      %s579 = scalar_lea.vmem %s8, %s578
      %v580 = vld [vmem:[%s507] sm:$0xff]
      %v581 = vpack.c.bf16 %v580, %v580
      %v582 = vld [vmem:[%s518] sm:$0xff]
      %v583 = vpack.c.bf16 %v582, %v582
      %v584 = vld [vmem:[%s507 + $0x1] sm:$0xff]
      %v585 = vpack.c.bf16 %v584, %v584
      %v586 = vld [vmem:[%s6] sm:$0xf]
      %v587 = vld [vmem:[%s6 + $0x4] sm:$0xf]
      %v588 = vld [vmem:[%s6 + $0x8] sm:$0xf]
      %v589 = vld [vmem:[%s6 + $0xc] sm:$0xf]
      %v590 = vld [vmem:[%s6 + $0x10] sm:$0xf]
      %v591 = vld [vmem:[%s6 + $0x14] sm:$0xf]
      %v592 = vld [vmem:[%s6 + $0x18] sm:$0xf]
      %v593 = vld [vmem:[%s6 + $0x1c] sm:$0xf]
      %v594 = vld [vmem:[%s6 + $0x20] sm:$0xf]
      %v595 = vld [vmem:[%s6 + $0x24] sm:$0xf]
      %v596 = vld [vmem:[%s6 + $0x28] sm:$0xf]
      %v597 = vld [vmem:[%s6 + $0x2c] sm:$0xf]
      %v598 = vld [vmem:[%s6 + $0x30] sm:$0xf]
      %v599 = vld [vmem:[%s6 + $0x34] sm:$0xf]
      %v600 = vld [vmem:[%s6 + $0x38] sm:$0xf]
      %v601 = vld [vmem:[%s6 + $0x3c] sm:$0xf]
      %s602 = scalar_lea.vmem %s6, 64
      %v603 = vld [vmem:[%s602] sm:$0xf]
      %v604 = vld [vmem:[%s602 + $0x4] sm:$0xf]
      %v605 = vld [vmem:[%s602 + $0x8] sm:$0xf]
      %v606 = vld [vmem:[%s602 + $0xc] sm:$0xf]
      %v607 = vld [vmem:[%s602 + $0x10] sm:$0xf]
      %v608 = vld [vmem:[%s602 + $0x14] sm:$0xf]
      %v609 = vld [vmem:[%s602 + $0x18] sm:$0xf]
      %v610 = vld [vmem:[%s602 + $0x1c] sm:$0xf]
      %v611 = vld [vmem:[%s602 + $0x20] sm:$0xf]
      %v612 = vld [vmem:[%s602 + $0x24] sm:$0xf]
      %v613 = vld [vmem:[%s602 + $0x28] sm:$0xf]
      %v614 = vld [vmem:[%s602 + $0x2c] sm:$0xf]
      %v615 = vld [vmem:[%s602 + $0x30] sm:$0xf]
      %v616 = vld [vmem:[%s602 + $0x34] sm:$0xf]
      %v617 = vld [vmem:[%s602 + $0x38] sm:$0xf]
      %v618 = vld [vmem:[%s602 + $0x3c] sm:$0xf]
      %v635 = vunpack.c.l.b16 %v603
      %v636 = vunpack.c.l.b16 %v604
      %v637 = vunpack.c.l.b16 %v605
      %v638 = vunpack.c.l.b16 %v606
      %v639 = vunpack.c.l.b16 %v607
      %v640 = vunpack.c.l.b16 %v608
      %v641 = vunpack.c.l.b16 %v609
      %v642 = vunpack.c.l.b16 %v610
      %v643 = vunpack.c.l.b16 %v611
      %v644 = vunpack.c.l.b16 %v612
      %v645 = vunpack.c.l.b16 %v613
      %v646 = vunpack.c.l.b16 %v614
      %v647 = vunpack.c.l.b16 %v615
      %v648 = vunpack.c.l.b16 %v616
      %v649 = vunpack.c.l.b16 %v617
      %v650 = vunpack.c.l.b16 %v618
      %v651 = vpack.c.b16 %v636, %v635
      %v652 = vpack.c.b16 %v638, %v637
      %v653 = vpack.c.b16 %v640, %v639
      %v654 = vpack.c.b16 %v642, %v641
      %v655 = vpack.c.b16 %v644, %v643
      %v656 = vpack.c.b16 %v646, %v645
      %v657 = vpack.c.b16 %v648, %v647
      %v658 = vpack.c.b16 %v650, %v649
      %667 = vmatpush.bf16.msra.mxu0 %v658
      %668 = vmatpush.bf16.msra.mxu0 %v657
      %669 = vmatpush.bf16.msra.mxu0 %v656
      %670 = vmatpush.bf16.msra.mxu0 %v655
      %671 = vmatpush.bf16.msra.mxu0 %v654
      %672 = vmatpush.bf16.msra.mxu0 %v653
      %673 = vmatpush.bf16.msra.mxu0 %v652
      %674 = vmatpush.bf16.msra.mxu0 %v651
      %675 = vmatmul.bf16.gmra.mxu0 %v583
      %v676 = vpop.f32.mrf.mxu0
      %v677 = vadd.f32 0.0, %v676
      %v678 = vpop.f32.mrf.mxu0
      %679 = vdwg.mxu0
      %v696 = vunpack.c.l.b16 %v586
      %v697 = vunpack.c.l.b16 %v587
      %v698 = vunpack.c.l.b16 %v588
      %v699 = vunpack.c.l.b16 %v589
      %v700 = vunpack.c.l.b16 %v590
      %v701 = vunpack.c.l.b16 %v591
      %v702 = vunpack.c.l.b16 %v592
      %v703 = vunpack.c.l.b16 %v593
      %v704 = vunpack.c.l.b16 %v594
      %v705 = vunpack.c.l.b16 %v595
      %v706 = vunpack.c.l.b16 %v596
      %v707 = vunpack.c.l.b16 %v597
      %v708 = vunpack.c.l.b16 %v598
      %v709 = vunpack.c.l.b16 %v599
      %v710 = vunpack.c.l.b16 %v600
      %v711 = vunpack.c.l.b16 %v601
      %v712 = vpack.c.b16 %v697, %v696
      %v713 = vpack.c.b16 %v699, %v698
      %v714 = vpack.c.b16 %v701, %v700
      %v715 = vpack.c.b16 %v703, %v702
      %v716 = vpack.c.b16 %v705, %v704
      %v717 = vpack.c.b16 %v707, %v706
      %v718 = vpack.c.b16 %v709, %v708
      %v719 = vpack.c.b16 %v711, %v710
      %728 = vmatpush.bf16.msra.mxu0 %v719
      %729 = vmatpush.bf16.msra.mxu0 %v718
      %730 = vmatpush.bf16.msra.mxu0 %v717
      %731 = vmatpush.bf16.msra.mxu0 %v716
      %732 = vmatpush.bf16.msra.mxu0 %v715
      %733 = vmatpush.bf16.msra.mxu0 %v714
      %734 = vmatpush.bf16.msra.mxu0 %v713
      %735 = vmatpush.bf16.msra.mxu0 %v712
      %736 = vmatmul.bf16.gmra.mxu0 %v581
      %v737 = vpop.f32.mrf.mxu0
      %v738 = vadd.f32 %v677, %v737
      %v739 = vpop.f32.mrf.mxu0
      %740 = vdwg.mxu0
      %s741 = scalar_lea.vmem %s6, 128
      %v742 = vld [vmem:[%s741] sm:$0xf]
      %v743 = vld [vmem:[%s741 + $0x4] sm:$0xf]
      %v744 = vld [vmem:[%s741 + $0x8] sm:$0xf]
      %v745 = vld [vmem:[%s741 + $0xc] sm:$0xf]
      %v746 = vld [vmem:[%s741 + $0x10] sm:$0xf]
      %v747 = vld [vmem:[%s741 + $0x14] sm:$0xf]
      %v748 = vld [vmem:[%s741 + $0x18] sm:$0xf]
      %v749 = vld [vmem:[%s741 + $0x1c] sm:$0xf]
      %v750 = vld [vmem:[%s741 + $0x20] sm:$0xf]
      %v751 = vld [vmem:[%s741 + $0x24] sm:$0xf]
      %v752 = vld [vmem:[%s741 + $0x28] sm:$0xf]
      %v753 = vld [vmem:[%s741 + $0x2c] sm:$0xf]
      %v754 = vld [vmem:[%s741 + $0x30] sm:$0xf]
      %v755 = vld [vmem:[%s741 + $0x34] sm:$0xf]
      %v756 = vld [vmem:[%s741 + $0x38] sm:$0xf]
      %v757 = vld [vmem:[%s741 + $0x3c] sm:$0xf]
      %v774 = vunpack.c.l.b16 %v742
      %v775 = vunpack.c.l.b16 %v743
      %v776 = vunpack.c.l.b16 %v744
      %v777 = vunpack.c.l.b16 %v745
      %v778 = vunpack.c.l.b16 %v746
      %v779 = vunpack.c.l.b16 %v747
      %v780 = vunpack.c.l.b16 %v748
      %v781 = vunpack.c.l.b16 %v749
      %v782 = vunpack.c.l.b16 %v750
      %v783 = vunpack.c.l.b16 %v751
      %v784 = vunpack.c.l.b16 %v752
      %v785 = vunpack.c.l.b16 %v753
      %v786 = vunpack.c.l.b16 %v754
      %v787 = vunpack.c.l.b16 %v755
      %v788 = vunpack.c.l.b16 %v756
      %v789 = vunpack.c.l.b16 %v757
      %v790 = vpack.c.b16 %v775, %v774
      %v791 = vpack.c.b16 %v777, %v776
      %v792 = vpack.c.b16 %v779, %v778
      %v793 = vpack.c.b16 %v781, %v780
      %v794 = vpack.c.b16 %v783, %v782
      %v795 = vpack.c.b16 %v785, %v784
      %v796 = vpack.c.b16 %v787, %v786
      %v797 = vpack.c.b16 %v789, %v788
      %806 = vmatpush.bf16.msra.mxu0 %v797
      %807 = vmatpush.bf16.msra.mxu0 %v796
      %808 = vmatpush.bf16.msra.mxu0 %v795
      %809 = vmatpush.bf16.msra.mxu0 %v794
      %810 = vmatpush.bf16.msra.mxu0 %v793
      %811 = vmatpush.bf16.msra.mxu0 %v792
      %812 = vmatpush.bf16.msra.mxu0 %v791
      %813 = vmatpush.bf16.msra.mxu0 %v790
      %814 = vmatmul.bf16.gmra.mxu0 %v585
      %v815 = vpop.f32.mrf.mxu0
      %v816 = vadd.f32 0.0, %v815
      %v817 = vpop.f32.mrf.mxu0
      %818 = vdwg.mxu0
      %v819 = vadd.f32 %v738, %v816
      %v820 = vld [vmem:[%s530] sm:$0xff]
      %v821 = vpack.c.bf16 %v820, %v820
      %v822 = vld [vmem:[%s543] sm:$0xff]
      %v823 = vpack.c.bf16 %v822, %v822
      %v824 = vld [vmem:[%s530 + $0x1] sm:$0xff]
      %v825 = vpack.c.bf16 %v824, %v824
      %s826 = scalar_lea.vmem %s6, 192
      %v827 = vld [vmem:[%s826] sm:$0xf]
      %v828 = vld [vmem:[%s826 + $0x4] sm:$0xf]
      %v829 = vld [vmem:[%s826 + $0x8] sm:$0xf]
      %v830 = vld [vmem:[%s826 + $0xc] sm:$0xf]
      %v831 = vld [vmem:[%s826 + $0x10] sm:$0xf]
      %v832 = vld [vmem:[%s826 + $0x14] sm:$0xf]
      %v833 = vld [vmem:[%s826 + $0x18] sm:$0xf]
      %v834 = vld [vmem:[%s826 + $0x1c] sm:$0xf]
      %v835 = vld [vmem:[%s826 + $0x20] sm:$0xf]
      %v836 = vld [vmem:[%s826 + $0x24] sm:$0xf]
      %v837 = vld [vmem:[%s826 + $0x28] sm:$0xf]
      %v838 = vld [vmem:[%s826 + $0x2c] sm:$0xf]
      %v839 = vld [vmem:[%s826 + $0x30] sm:$0xf]
      %v840 = vld [vmem:[%s826 + $0x34] sm:$0xf]
      %v841 = vld [vmem:[%s826 + $0x38] sm:$0xf]
      %v842 = vld [vmem:[%s826 + $0x3c] sm:$0xf]
      %v859 = vunpack.c.l.b16 %v827
      %v860 = vunpack.c.l.b16 %v828
      %v861 = vunpack.c.l.b16 %v829
      %v862 = vunpack.c.l.b16 %v830
      %v863 = vunpack.c.l.b16 %v831
      %v864 = vunpack.c.l.b16 %v832
      %v865 = vunpack.c.l.b16 %v833
      %v866 = vunpack.c.l.b16 %v834
      %v867 = vunpack.c.l.b16 %v835
      %v868 = vunpack.c.l.b16 %v836
      %v869 = vunpack.c.l.b16 %v837
      %v870 = vunpack.c.l.b16 %v838
      %v871 = vunpack.c.l.b16 %v839
      %v872 = vunpack.c.l.b16 %v840
      %v873 = vunpack.c.l.b16 %v841
      %v874 = vunpack.c.l.b16 %v842
      %v875 = vpack.c.b16 %v860, %v859
      %v876 = vpack.c.b16 %v862, %v861
      %v877 = vpack.c.b16 %v864, %v863
      %v878 = vpack.c.b16 %v866, %v865
      %v879 = vpack.c.b16 %v868, %v867
      %v880 = vpack.c.b16 %v870, %v869
      %v881 = vpack.c.b16 %v872, %v871
      %v882 = vpack.c.b16 %v874, %v873
      %891 = vmatpush.bf16.msra.mxu0 %v882
      %892 = vmatpush.bf16.msra.mxu0 %v881
      %893 = vmatpush.bf16.msra.mxu0 %v880
      %894 = vmatpush.bf16.msra.mxu0 %v879
      %895 = vmatpush.bf16.msra.mxu0 %v878
      %896 = vmatpush.bf16.msra.mxu0 %v877
      %897 = vmatpush.bf16.msra.mxu0 %v876
      %898 = vmatpush.bf16.msra.mxu0 %v875
      %899 = vmatmul.bf16.gmra.mxu0 %v821
      %v900 = vpop.f32.mrf.mxu0
      %v901 = vadd.f32 0.0, %v900
      %v902 = vpop.f32.mrf.mxu0
      %903 = vdwg.mxu0
      %v904 = vadd.f32 %v819, %v901
      %s905 = scalar_lea.vmem %s6, 256
      %v906 = vld [vmem:[%s905] sm:$0xf]
      %v907 = vld [vmem:[%s905 + $0x4] sm:$0xf]
      %v908 = vld [vmem:[%s905 + $0x8] sm:$0xf]
      %v909 = vld [vmem:[%s905 + $0xc] sm:$0xf]
      %v910 = vld [vmem:[%s905 + $0x10] sm:$0xf]
      %v911 = vld [vmem:[%s905 + $0x14] sm:$0xf]
      %v912 = vld [vmem:[%s905 + $0x18] sm:$0xf]
      %v913 = vld [vmem:[%s905 + $0x1c] sm:$0xf]
      %v914 = vld [vmem:[%s905 + $0x20] sm:$0xf]
      %v915 = vld [vmem:[%s905 + $0x24] sm:$0xf]
      %v916 = vld [vmem:[%s905 + $0x28] sm:$0xf]
      %v917 = vld [vmem:[%s905 + $0x2c] sm:$0xf]
      %v918 = vld [vmem:[%s905 + $0x30] sm:$0xf]
      %v919 = vld [vmem:[%s905 + $0x34] sm:$0xf]
      %v920 = vld [vmem:[%s905 + $0x38] sm:$0xf]
      %v921 = vld [vmem:[%s905 + $0x3c] sm:$0xf]
      %v938 = vunpack.c.l.b16 %v906
      %v939 = vunpack.c.l.b16 %v907
      %v940 = vunpack.c.l.b16 %v908
      %v941 = vunpack.c.l.b16 %v909
      %v942 = vunpack.c.l.b16 %v910
      %v943 = vunpack.c.l.b16 %v911
      %v944 = vunpack.c.l.b16 %v912
      %v945 = vunpack.c.l.b16 %v913
      %v946 = vunpack.c.l.b16 %v914
      %v947 = vunpack.c.l.b16 %v915
      %v948 = vunpack.c.l.b16 %v916
      %v949 = vunpack.c.l.b16 %v917
      %v950 = vunpack.c.l.b16 %v918
      %v951 = vunpack.c.l.b16 %v919
      %v952 = vunpack.c.l.b16 %v920
      %v953 = vunpack.c.l.b16 %v921
      %v954 = vpack.c.b16 %v939, %v938
      %v955 = vpack.c.b16 %v941, %v940
      %v956 = vpack.c.b16 %v943, %v942
      %v957 = vpack.c.b16 %v945, %v944
      %v958 = vpack.c.b16 %v947, %v946
      %v959 = vpack.c.b16 %v949, %v948
      %v960 = vpack.c.b16 %v951, %v950
      %v961 = vpack.c.b16 %v953, %v952
      %970 = vmatpush.bf16.msra.mxu0 %v961
      %971 = vmatpush.bf16.msra.mxu0 %v960
      %972 = vmatpush.bf16.msra.mxu0 %v959
      %973 = vmatpush.bf16.msra.mxu0 %v958
      %974 = vmatpush.bf16.msra.mxu0 %v957
      %975 = vmatpush.bf16.msra.mxu0 %v956
      %976 = vmatpush.bf16.msra.mxu0 %v955
      %977 = vmatpush.bf16.msra.mxu0 %v954
      %978 = vmatmul.bf16.gmra.mxu0 %v823
      %v979 = vpop.f32.mrf.mxu0
      %v980 = vadd.f32 0.0, %v979
      %v981 = vpop.f32.mrf.mxu0
      %982 = vdwg.mxu0
      %v983 = vadd.f32 %v904, %v980
      %s984 = scalar_lea.vmem %s6, 320
      %v985 = vld [vmem:[%s984] sm:$0xf]
      %v986 = vld [vmem:[%s984 + $0x4] sm:$0xf]
      %v987 = vld [vmem:[%s984 + $0x8] sm:$0xf]
      %v988 = vld [vmem:[%s984 + $0xc] sm:$0xf]
      %v989 = vld [vmem:[%s984 + $0x10] sm:$0xf]
      %v990 = vld [vmem:[%s984 + $0x14] sm:$0xf]
      %v991 = vld [vmem:[%s984 + $0x18] sm:$0xf]
      %v992 = vld [vmem:[%s984 + $0x1c] sm:$0xf]
      %v993 = vld [vmem:[%s984 + $0x20] sm:$0xf]
      %v994 = vld [vmem:[%s984 + $0x24] sm:$0xf]
      %v995 = vld [vmem:[%s984 + $0x28] sm:$0xf]
      %v996 = vld [vmem:[%s984 + $0x2c] sm:$0xf]
      %v997 = vld [vmem:[%s984 + $0x30] sm:$0xf]
      %v998 = vld [vmem:[%s984 + $0x34] sm:$0xf]
      %v999 = vld [vmem:[%s984 + $0x38] sm:$0xf]
      %v1000 = vld [vmem:[%s984 + $0x3c] sm:$0xf]
      %v1017 = vunpack.c.l.b16 %v985
      %v1018 = vunpack.c.l.b16 %v986
      %v1019 = vunpack.c.l.b16 %v987
      %v1020 = vunpack.c.l.b16 %v988
      %v1021 = vunpack.c.l.b16 %v989
      %v1022 = vunpack.c.l.b16 %v990
      %v1023 = vunpack.c.l.b16 %v991
      %v1024 = vunpack.c.l.b16 %v992
      %v1025 = vunpack.c.l.b16 %v993
      %v1026 = vunpack.c.l.b16 %v994
      %v1027 = vunpack.c.l.b16 %v995
      %v1028 = vunpack.c.l.b16 %v996
      %v1029 = vunpack.c.l.b16 %v997
      %v1030 = vunpack.c.l.b16 %v998
      %v1031 = vunpack.c.l.b16 %v999
      %v1032 = vunpack.c.l.b16 %v1000
      %v1033 = vpack.c.b16 %v1018, %v1017
      %v1034 = vpack.c.b16 %v1020, %v1019
      %v1035 = vpack.c.b16 %v1022, %v1021
      %v1036 = vpack.c.b16 %v1024, %v1023
      %v1037 = vpack.c.b16 %v1026, %v1025
      %v1038 = vpack.c.b16 %v1028, %v1027
      %v1039 = vpack.c.b16 %v1030, %v1029
      %v1040 = vpack.c.b16 %v1032, %v1031
      %1049 = vmatpush.bf16.msra.mxu0 %v1040
      %1050 = vmatpush.bf16.msra.mxu0 %v1039
      %1051 = vmatpush.bf16.msra.mxu0 %v1038
      %1052 = vmatpush.bf16.msra.mxu0 %v1037
      %1053 = vmatpush.bf16.msra.mxu0 %v1036
      %1054 = vmatpush.bf16.msra.mxu0 %v1035
      %1055 = vmatpush.bf16.msra.mxu0 %v1034
      %1056 = vmatpush.bf16.msra.mxu0 %v1033
      %1057 = vmatmul.bf16.gmra.mxu0 %v825
      %v1058 = vpop.f32.mrf.mxu0
      %v1059 = vadd.f32 0.0, %v1058
      %v1060 = vpop.f32.mrf.mxu0
      %1061 = vdwg.mxu0
      %v1062 = vadd.f32 %v983, %v1059
      %v1063 = vld [vmem:[%s556] sm:$0xff]
      %v1064 = vpack.c.bf16 %v1063, %v1063
      %v1065 = vld [vmem:[%s569] sm:$0xff]
      %v1066 = vpack.c.bf16 %v1065, %v1065
      %v1067 = vld [vmem:[%s556 + $0x1] sm:$0xff]
      %v1068 = vpack.c.bf16 %v1067, %v1067
      %s1069 = scalar_lea.vmem %s6, 384
      %v1070 = vld [vmem:[%s1069] sm:$0xf]
      %v1071 = vld [vmem:[%s1069 + $0x4] sm:$0xf]
      %v1072 = vld [vmem:[%s1069 + $0x8] sm:$0xf]
      %v1073 = vld [vmem:[%s1069 + $0xc] sm:$0xf]
      %v1074 = vld [vmem:[%s1069 + $0x10] sm:$0xf]
      %v1075 = vld [vmem:[%s1069 + $0x14] sm:$0xf]
      %v1076 = vld [vmem:[%s1069 + $0x18] sm:$0xf]
      %v1077 = vld [vmem:[%s1069 + $0x1c] sm:$0xf]
      %v1078 = vld [vmem:[%s1069 + $0x20] sm:$0xf]
      %v1079 = vld [vmem:[%s1069 + $0x24] sm:$0xf]
      %v1080 = vld [vmem:[%s1069 + $0x28] sm:$0xf]
      %v1081 = vld [vmem:[%s1069 + $0x2c] sm:$0xf]
      %v1082 = vld [vmem:[%s1069 + $0x30] sm:$0xf]
      %v1083 = vld [vmem:[%s1069 + $0x34] sm:$0xf]
      %v1084 = vld [vmem:[%s1069 + $0x38] sm:$0xf]
      %v1085 = vld [vmem:[%s1069 + $0x3c] sm:$0xf]
      %v1102 = vunpack.c.l.b16 %v1070
      %v1103 = vunpack.c.l.b16 %v1071
      %v1104 = vunpack.c.l.b16 %v1072
      %v1105 = vunpack.c.l.b16 %v1073
      %v1106 = vunpack.c.l.b16 %v1074
      %v1107 = vunpack.c.l.b16 %v1075
      %v1108 = vunpack.c.l.b16 %v1076
      %v1109 = vunpack.c.l.b16 %v1077
      %v1110 = vunpack.c.l.b16 %v1078
      %v1111 = vunpack.c.l.b16 %v1079
      %v1112 = vunpack.c.l.b16 %v1080
      %v1113 = vunpack.c.l.b16 %v1081
      %v1114 = vunpack.c.l.b16 %v1082
      %v1115 = vunpack.c.l.b16 %v1083
      %v1116 = vunpack.c.l.b16 %v1084
      %v1117 = vunpack.c.l.b16 %v1085
      %v1118 = vpack.c.b16 %v1103, %v1102
      %v1119 = vpack.c.b16 %v1105, %v1104
      %v1120 = vpack.c.b16 %v1107, %v1106
      %v1121 = vpack.c.b16 %v1109, %v1108
      %v1122 = vpack.c.b16 %v1111, %v1110
      %v1123 = vpack.c.b16 %v1113, %v1112
      %v1124 = vpack.c.b16 %v1115, %v1114
      %v1125 = vpack.c.b16 %v1117, %v1116
      %1134 = vmatpush.bf16.msra.mxu0 %v1125
      %1135 = vmatpush.bf16.msra.mxu0 %v1124
      %1136 = vmatpush.bf16.msra.mxu0 %v1123
      %1137 = vmatpush.bf16.msra.mxu0 %v1122
      %1138 = vmatpush.bf16.msra.mxu0 %v1121
      %1139 = vmatpush.bf16.msra.mxu0 %v1120
      %1140 = vmatpush.bf16.msra.mxu0 %v1119
      %1141 = vmatpush.bf16.msra.mxu0 %v1118
      %1142 = vmatmul.bf16.gmra.mxu0 %v1064
      %v1143 = vpop.f32.mrf.mxu0
      %v1144 = vadd.f32 0.0, %v1143
      %v1145 = vpop.f32.mrf.mxu0
      %1146 = vdwg.mxu0
      %v1147 = vadd.f32 %v1062, %v1144
      %s1148 = scalar_lea.vmem %s6, 448
      %v1149 = vld [vmem:[%s1148] sm:$0xf]
      %v1150 = vld [vmem:[%s1148 + $0x4] sm:$0xf]
      %v1151 = vld [vmem:[%s1148 + $0x8] sm:$0xf]
      %v1152 = vld [vmem:[%s1148 + $0xc] sm:$0xf]
      %v1153 = vld [vmem:[%s1148 + $0x10] sm:$0xf]
      %v1154 = vld [vmem:[%s1148 + $0x14] sm:$0xf]
      %v1155 = vld [vmem:[%s1148 + $0x18] sm:$0xf]
      %v1156 = vld [vmem:[%s1148 + $0x1c] sm:$0xf]
      %v1157 = vld [vmem:[%s1148 + $0x20] sm:$0xf]
      %v1158 = vld [vmem:[%s1148 + $0x24] sm:$0xf]
      %v1159 = vld [vmem:[%s1148 + $0x28] sm:$0xf]
      %v1160 = vld [vmem:[%s1148 + $0x2c] sm:$0xf]
      %v1161 = vld [vmem:[%s1148 + $0x30] sm:$0xf]
      %v1162 = vld [vmem:[%s1148 + $0x34] sm:$0xf]
      %v1163 = vld [vmem:[%s1148 + $0x38] sm:$0xf]
      %v1164 = vld [vmem:[%s1148 + $0x3c] sm:$0xf]
      %v1181 = vunpack.c.l.b16 %v1149
      %v1182 = vunpack.c.l.b16 %v1150
      %v1183 = vunpack.c.l.b16 %v1151
      %v1184 = vunpack.c.l.b16 %v1152
      %v1185 = vunpack.c.l.b16 %v1153
      %v1186 = vunpack.c.l.b16 %v1154
      %v1187 = vunpack.c.l.b16 %v1155
      %v1188 = vunpack.c.l.b16 %v1156
      %v1189 = vunpack.c.l.b16 %v1157
      %v1190 = vunpack.c.l.b16 %v1158
      %v1191 = vunpack.c.l.b16 %v1159
      %v1192 = vunpack.c.l.b16 %v1160
      %v1193 = vunpack.c.l.b16 %v1161
      %v1194 = vunpack.c.l.b16 %v1162
      %v1195 = vunpack.c.l.b16 %v1163
      %v1196 = vunpack.c.l.b16 %v1164
      %v1197 = vpack.c.b16 %v1182, %v1181
      %v1198 = vpack.c.b16 %v1184, %v1183
      %v1199 = vpack.c.b16 %v1186, %v1185
      %v1200 = vpack.c.b16 %v1188, %v1187
      %v1201 = vpack.c.b16 %v1190, %v1189
      %v1202 = vpack.c.b16 %v1192, %v1191
      %v1203 = vpack.c.b16 %v1194, %v1193
      %v1204 = vpack.c.b16 %v1196, %v1195
      %1213 = vmatpush.bf16.msra.mxu0 %v1204
      %1214 = vmatpush.bf16.msra.mxu0 %v1203
      %1215 = vmatpush.bf16.msra.mxu0 %v1202
      %1216 = vmatpush.bf16.msra.mxu0 %v1201
      %1217 = vmatpush.bf16.msra.mxu0 %v1200
      %1218 = vmatpush.bf16.msra.mxu0 %v1199
      %1219 = vmatpush.bf16.msra.mxu0 %v1198
      %1220 = vmatpush.bf16.msra.mxu0 %v1197
      %1221 = vmatmul.bf16.gmra.mxu0 %v1066
      %v1222 = vpop.f32.mrf.mxu0
      %v1223 = vadd.f32 0.0, %v1222
      %v1224 = vpop.f32.mrf.mxu0
      %1225 = vdwg.mxu0
      %v1226 = vadd.f32 %v1147, %v1223
      %s1227 = scalar_lea.vmem %s6, 512
      %v1228 = vld [vmem:[%s1227] sm:$0xf]
      %v1229 = vld [vmem:[%s1227 + $0x4] sm:$0xf]
      %v1230 = vld [vmem:[%s1227 + $0x8] sm:$0xf]
      %v1231 = vld [vmem:[%s1227 + $0xc] sm:$0xf]
      %v1232 = vld [vmem:[%s1227 + $0x10] sm:$0xf]
      %v1233 = vld [vmem:[%s1227 + $0x14] sm:$0xf]
      %v1234 = vld [vmem:[%s1227 + $0x18] sm:$0xf]
      %v1235 = vld [vmem:[%s1227 + $0x1c] sm:$0xf]
      %v1236 = vld [vmem:[%s1227 + $0x20] sm:$0xf]
      %v1237 = vld [vmem:[%s1227 + $0x24] sm:$0xf]
      %v1238 = vld [vmem:[%s1227 + $0x28] sm:$0xf]
      %v1239 = vld [vmem:[%s1227 + $0x2c] sm:$0xf]
      %v1240 = vld [vmem:[%s1227 + $0x30] sm:$0xf]
      %v1241 = vld [vmem:[%s1227 + $0x34] sm:$0xf]
      %v1242 = vld [vmem:[%s1227 + $0x38] sm:$0xf]
      %v1243 = vld [vmem:[%s1227 + $0x3c] sm:$0xf]
      %v1260 = vunpack.c.l.b16 %v1228
      %v1261 = vunpack.c.l.b16 %v1229
      %v1262 = vunpack.c.l.b16 %v1230
      %v1263 = vunpack.c.l.b16 %v1231
      %v1264 = vunpack.c.l.b16 %v1232
      %v1265 = vunpack.c.l.b16 %v1233
      %v1266 = vunpack.c.l.b16 %v1234
      %v1267 = vunpack.c.l.b16 %v1235
      %v1268 = vunpack.c.l.b16 %v1236
      %v1269 = vunpack.c.l.b16 %v1237
      %v1270 = vunpack.c.l.b16 %v1238
      %v1271 = vunpack.c.l.b16 %v1239
      %v1272 = vunpack.c.l.b16 %v1240
      %v1273 = vunpack.c.l.b16 %v1241
      %v1274 = vunpack.c.l.b16 %v1242
      %v1275 = vunpack.c.l.b16 %v1243
      %v1276 = vpack.c.b16 %v1261, %v1260
      %v1277 = vpack.c.b16 %v1263, %v1262
      %v1278 = vpack.c.b16 %v1265, %v1264
      %v1279 = vpack.c.b16 %v1267, %v1266
      %v1280 = vpack.c.b16 %v1269, %v1268
      %v1281 = vpack.c.b16 %v1271, %v1270
      %v1282 = vpack.c.b16 %v1273, %v1272
      %v1283 = vpack.c.b16 %v1275, %v1274
      %1292 = vmatpush.bf16.msra.mxu0 %v1283
      %1293 = vmatpush.bf16.msra.mxu0 %v1282
      %1294 = vmatpush.bf16.msra.mxu0 %v1281
      %1295 = vmatpush.bf16.msra.mxu0 %v1280
      %1296 = vmatpush.bf16.msra.mxu0 %v1279
      %1297 = vmatpush.bf16.msra.mxu0 %v1278
      %1298 = vmatpush.bf16.msra.mxu0 %v1277
      %1299 = vmatpush.bf16.msra.mxu0 %v1276
      %1300 = vmatmul.bf16.gmra.mxu0 %v1068
      %v1301 = vpop.f32.mrf.mxu0
      %v1302 = vadd.f32 0.0, %v1301
      %v1303 = vpop.f32.mrf.mxu0
      %1304 = vdwg.mxu0
      %v1305 = vadd.f32 %v1226, %v1302
      %v1306 = vld [vmem:[%s7] sm:$0x1]
      %v1308 = vperm.slane %v1306, 0
      %v1310 = vadd.f32 %v1305, %v1308
      %v1311 = vmax.f32 %v1310, 0.0
      %1312 = vst [vmem:[%s579] sm:$0xff] %v1311
      %p1313 = scmp.lt.s32.totalorder %s23, 1
      %s1314 = scalar_select %p1313, %s23, 1
      %p1315 = scmp.lt.s32.totalorder %s24, 7
      %s1316 = scalar_select %p1315, %s24, 7
      %s1317 = smul.addr %s1314, 8
      %s1318 = sadd.s32 %s1316, %s1317
      %s1319 = smul.addr %s1318, 8
      %s1320 = scalar_lea.vmem %s8, %s1319
      // Predicated region
      $region53: #{bi_propagate_forward.12} parent=51 // pred_check
        %p1321 = pneg %p281
      $region54: #{bi_propagate_forward.12} parent=51 // pred_check_branch
        %1323 = sbr.rel (%p1321) target = $region56
      $region55: #{bi_propagate_forward.12} parent=51 // pred_region
        _
      $region56: #{bi_propagate_forward.12} parent=51 // pred_fallthru
        _
    $region52: #{bi_propagate_forward.12} parent=5 // pred_fallthru
      _
    %p1324 = scmp.le.s32.totalorder 2, %s14
    // Predicated region
    $region57: #{bi_propagate_forward.12} parent=5 // pred_check
      %p1325 = pneg %p1324
    $region58: #{bi_propagate_forward.12} parent=5 // pred_check_branch
      %1327 = sbr.rel (%p1325) target = $region60
    $region59: #{bi_propagate_forward.12} parent=5 // pred_region
      %s1328 = ssub.s32 %s14, 2
      // Predicated region
      $region61: #{bi_propagate_forward.12} parent=59 // pred_check
        %p1329 = pneg %p287
      $region62: #{bi_propagate_forward.12} parent=59 // pred_check_branch
        %1331 = sbr.rel (%p1329) target = $region64
      $region63: #{bi_propagate_forward.12} parent=59 // pred_region
        %p1332 = scmp.lt.s32.totalorder %s25, 1
        %s1333 = scalar_select %p1332, %s25, 1
        %p1334 = scmp.lt.s32.totalorder %s26, 7
        %s1335 = scalar_select %p1334, %s26, 7
        %s1336 = smul.addr %s1333, 8
        %s1337 = sadd.s32 %s1335, %s1336
        %s1338 = smul.addr %s1337, 8
        %s1339 = scalar_lea.vmem %s8, %s1338
      $region64: #{bi_propagate_forward.12} parent=59 // pred_fallthru
        _
    $region60: #{bi_propagate_forward.12} parent=5 // pred_fallthru
      _
  $region6: #{bi_propagate_forward.12} parent=0 // loop_footer
    %s18 = sadd.s32 1, %s14
  $region7: #{bi_propagate_forward.12} parent=0 // loop_footer_branch
    %13 = sbr.rel target = $region3
  $region8: #{bi_propagate_forward.12} parent=0 // loop_exit
    _

// kernel: bi_propagate_forward.15
$region0: #{bi_propagate_forward.15}
  #allocation0 [shape = 'u32[]', space=smem, size = 0x4, offset = 0x4, fixed_abs, tag = 'smem constant byte address 0x4 - core index']
  #allocation1 [shape = 'u32[72,128]{1,0:T(1,128)}', space=vmem, size = 0x9000, scoped, tag = 'internal scratch']
  %s0 = inlined_call_operand.vmem [shape: f32[32,128], index: 0, kind: input, shape index: {}]
  %s1 = inlined_call_operand.vmem [shape: f32[32,128], index: 1, kind: input, shape index: {}]
  %s2 = inlined_call_operand.vmem [shape: bf16[128,128], index: 2, kind: input, shape index: {}]
  %s3 = inlined_call_operand.vmem [shape: bf16[128,128], index: 3, kind: input, shape index: {}]
  %s4 = inlined_call_operand.vmem [shape: f32[1,128], index: 4, kind: input, shape index: {}]
  %s5 = inlined_call_operand.vmem [shape: f32[32,128], index: 5, kind: output, shape index: {}]
  %s6 = sld [smem:[#allocation0]]
  $region53: #{bi_propagate_forward.15} parent=0
    _
  %s8 = ssub.s32 1, %s6
  %s9 = scalar_select 0, %s8, %s6
  loop: start=0, step=1, limit=4
  $region2: #{bi_propagate_forward.15} parent=0 // loop_pre_header
    _
  $region3: #{bi_propagate_forward.15} parent=0 // loop_header
    %s11 = sphi 0, %s15
    %p12 = scmp.ge.s32.totalorder %s11, 4
    %s21 = sphi 0, %s23
    %s24 = sphi 0, %s21
    %s25 = sphi 0, %s24
    %s41 = sphi 0, %s25
    %s47 = sphi 0, %s49
    %s50 = sphi 0, %s47
    %s51 = sphi 0, %s50
    %s67 = sphi 0, %s51
    %s71 = sphi 0, %s71
    %s73 = sphi 0, %s71
    %s74 = sphi 0, %s73
    %s88 = sphi 0, %s74
    %s92 = sphi 0, %s92
    %s94 = sphi 0, %s92
    %s95 = sphi 0, %s94
    %s109 = sphi 0, %s95
    %s113 = sphi 0, %s113
    %s115 = sphi 0, %s113
    %s116 = sphi 0, %s115
    %s130 = sphi 0, %s116
    %s136 = sphi 0, %s138
    %s139 = sphi 0, %s136
    %s140 = sphi 0, %s139
    %s156 = sphi 0, %s140
  $region4: #{bi_propagate_forward.15} parent=0 // loop_header_branch
    %14 = sbr.rel (%p12) target = $region8
  $region5: #{bi_propagate_forward.15} parent=0 // loop_body
    %s16 = ssub.s32 %s11, 1
    %s17 = ssub.s32 %s11, 2
    %s18 = sadd.s32 %s11, 1
    %s19 = ssub.s32 %s11, %s18
    %p20 = scmp.eq.s32.totalorder %s19, 0
    %s22 = sadd.s32 %s21, 1
    %s23 = scalar_select %p20, %s21, %s22
    %p26 = pneg %p20
    %p27 = scmp.eq.s32.totalorder %s11, 1
    %p28 = por %p26, %p27
    %p29 = scmp.ne.s32.totalorder %s21, %s24
    %p30 = scmp.eq.s32.totalorder %s11, 0
    %p31 = por %p29, %p30
    %p32 = scmp.ne.s32.totalorder %s21, %s24
    %p33 = scmp.eq.s32.totalorder %s16, 1
    %p34 = por %p32, %p33
    %p35 = scmp.ne.s32.totalorder %s24, %s25
    %p36 = scmp.eq.s32.totalorder %s16, 0
    %p37 = por %p35, %p36
    %p38 = scmp.ne.s32.totalorder %s24, %s25
    %p39 = scmp.eq.s32.totalorder %s17, 1
    %p40 = por %p38, %p39
    %p42 = scmp.ne.s32.totalorder %s25, %s41
    %p43 = scmp.eq.s32.totalorder %s17, 0
    %p44 = por %p42, %p43
    %s45 = ssub.s32 %s11, %s18
    %p46 = scmp.eq.s32.totalorder %s45, 0
    %s48 = sadd.s32 %s47, 1
    %s49 = scalar_select %p46, %s47, %s48
    %p52 = pneg %p46
    %p53 = scmp.eq.s32.totalorder %s11, 1
    %p54 = por %p52, %p53
    %p55 = scmp.ne.s32.totalorder %s47, %s50
    %p56 = scmp.eq.s32.totalorder %s11, 0
    %p57 = por %p55, %p56
    %p58 = scmp.ne.s32.totalorder %s47, %s50
    %p59 = scmp.eq.s32.totalorder %s16, 1
    %p60 = por %p58, %p59
    %p61 = scmp.ne.s32.totalorder %s50, %s51
    %p62 = scmp.eq.s32.totalorder %s16, 0
    %p63 = por %p61, %p62
    %p64 = scmp.ne.s32.totalorder %s50, %s51
    %p65 = scmp.eq.s32.totalorder %s17, 1
    %p66 = por %p64, %p65
    %p68 = scmp.ne.s32.totalorder %s51, %s67
    %p69 = scmp.eq.s32.totalorder %s17, 0
    %p70 = por %p68, %p69
    %s72 = sadd.s32 %s71, 1
    %p75 = scmp.eq.s32.totalorder %s11, 1
    %p76 = scmp.ne.s32.totalorder %s71, %s73
    %p77 = scmp.eq.s32.totalorder %s11, 0
    %p78 = por %p76, %p77
    %p79 = scmp.ne.s32.totalorder %s71, %s73
    %p80 = scmp.eq.s32.totalorder %s16, 1
    %p81 = por %p79, %p80
    %p82 = scmp.ne.s32.totalorder %s73, %s74
    %p83 = scmp.eq.s32.totalorder %s16, 0
    %p84 = por %p82, %p83
    %p85 = scmp.ne.s32.totalorder %s73, %s74
    %p86 = scmp.eq.s32.totalorder %s17, 1
    %p87 = por %p85, %p86
    %p89 = scmp.ne.s32.totalorder %s74, %s88
    %p90 = scmp.eq.s32.totalorder %s17, 0
    %p91 = por %p89, %p90
    %s93 = sadd.s32 %s92, 1
    %p96 = scmp.eq.s32.totalorder %s11, 1
    %p97 = scmp.ne.s32.totalorder %s92, %s94
    %p98 = scmp.eq.s32.totalorder %s11, 0
    %p99 = por %p97, %p98
    %p100 = scmp.ne.s32.totalorder %s92, %s94
    %p101 = scmp.eq.s32.totalorder %s16, 1
    %p102 = por %p100, %p101
    %p103 = scmp.ne.s32.totalorder %s94, %s95
    %p104 = scmp.eq.s32.totalorder %s16, 0
    %p105 = por %p103, %p104
    %p106 = scmp.ne.s32.totalorder %s94, %s95
    %p107 = scmp.eq.s32.totalorder %s17, 1
    %p108 = por %p106, %p107
    %p110 = scmp.ne.s32.totalorder %s95, %s109
    %p111 = scmp.eq.s32.totalorder %s17, 0
    %p112 = por %p110, %p111
    %s114 = sadd.s32 %s113, 1
    %p117 = scmp.eq.s32.totalorder %s11, 1
    %p118 = scmp.ne.s32.totalorder %s113, %s115
    %p119 = scmp.eq.s32.totalorder %s11, 0
    %p120 = por %p118, %p119
    %p121 = scmp.ne.s32.totalorder %s113, %s115
    %p122 = scmp.eq.s32.totalorder %s16, 1
    %p123 = por %p121, %p122
    %p124 = scmp.ne.s32.totalorder %s115, %s116
    %p125 = scmp.eq.s32.totalorder %s16, 0
    %p126 = por %p124, %p125
    %p127 = scmp.ne.s32.totalorder %s115, %s116
    %p128 = scmp.eq.s32.totalorder %s17, 1
    %p129 = por %p127, %p128
    %p131 = scmp.ne.s32.totalorder %s116, %s130
    %p132 = scmp.eq.s32.totalorder %s17, 0
    %p133 = por %p131, %p132
    %s134 = ssub.s32 %s11, %s18
    %p135 = scmp.eq.s32.totalorder %s134, 0
    %s137 = sadd.s32 %s136, 1
    %s138 = scalar_select %p135, %s136, %s137
    %p141 = pneg %p135
    %p142 = scmp.eq.s32.totalorder %s11, 1
    %p143 = por %p141, %p142
    %p144 = scmp.ne.s32.totalorder %s136, %s139
    %p145 = scmp.eq.s32.totalorder %s11, 0
    %p146 = por %p144, %p145
    %p147 = scmp.ne.s32.totalorder %s136, %s139
    %p148 = scmp.eq.s32.totalorder %s16, 1
    %p149 = por %p147, %p148
    %p150 = scmp.ne.s32.totalorder %s139, %s140
    %p151 = scmp.eq.s32.totalorder %s16, 0
    %p152 = por %p150, %p151
    %p153 = scmp.ne.s32.totalorder %s139, %s140
    %p154 = scmp.eq.s32.totalorder %s17, 1
    %p155 = por %p153, %p154
    %p157 = scmp.ne.s32.totalorder %s140, %s156
    %p158 = scmp.eq.s32.totalorder %s17, 0
    %p159 = por %p157, %p158
    %p160 = scmp.le.s32.totalorder 1, %s11
    %p161 = scmp.lt.s32.totalorder %s11, 3
    %p162 = pnand %p160, %p161
    %p163 = pneg %p162
    // Predicated region
    $region9: #{bi_propagate_forward.15} parent=5 // pred_check
      _
    $region10: #{bi_propagate_forward.15} parent=5 // pred_check_branch
      %165 = sbr.rel (%p162) target = $region12
    $region11: #{bi_propagate_forward.15} parent=5 // pred_region
      %s166 = ssub.s32 %s11, 1
      // Predicated region
      $region13: #{bi_propagate_forward.15} parent=11 // pred_check
        %p167 = pneg %p84
      $region14: #{bi_propagate_forward.15} parent=11 // pred_check_branch
        %169 = sbr.rel (%p167) target = $region16
      $region15: #{bi_propagate_forward.15} parent=11 // pred_region
        _
      $region16: #{bi_propagate_forward.15} parent=11 // pred_fallthru
        _
      // Predicated region
      $region17: #{bi_propagate_forward.15} parent=11 // pred_check
        %p170 = pneg %p105
      $region18: #{bi_propagate_forward.15} parent=11 // pred_check_branch
        %172 = sbr.rel (%p170) target = $region20
      $region19: #{bi_propagate_forward.15} parent=11 // pred_region
        _
      $region20: #{bi_propagate_forward.15} parent=11 // pred_fallthru
        _
      // Predicated region
      $region21: #{bi_propagate_forward.15} parent=11 // pred_check
        %p173 = pneg %p126
      $region22: #{bi_propagate_forward.15} parent=11 // pred_check_branch
        %175 = sbr.rel (%p173) target = $region24
      $region23: #{bi_propagate_forward.15} parent=11 // pred_region
        _
      $region24: #{bi_propagate_forward.15} parent=11 // pred_fallthru
        _
    $region12: #{bi_propagate_forward.15} parent=5 // pred_fallthru
      _
    %p176 = scmp.lt.s32.totalorder %s11, 2
    // Predicated region
    $region25: #{bi_propagate_forward.15} parent=5 // pred_check
      %p177 = pneg %p176
    $region26: #{bi_propagate_forward.15} parent=5 // pred_check_branch
      %179 = sbr.rel (%p177) target = $region28
    $region27: #{bi_propagate_forward.15} parent=5 // pred_region
      // Predicated region
      $region29: #{bi_propagate_forward.15} parent=27 // pred_check
        %p180 = pneg %p31
      $region30: #{bi_propagate_forward.15} parent=27 // pred_check_branch
        %182 = sbr.rel (%p180) target = $region32
      $region31: #{bi_propagate_forward.15} parent=27 // pred_region
        %s183 = smul.u32 2, %s11
        %p184 = scmp.lt.s32.totalorder %s183, 3
        %s185 = scalar_select %p184, %s183, 3
        %s186 = smul.addr %s185, 8
        %s187 = scalar_lea.vmem %s0, %s186
        %s188 = smul.u32 2, %s11
      $region32: #{bi_propagate_forward.15} parent=27 // pred_fallthru
        _
      // Predicated region
      $region33: #{bi_propagate_forward.15} parent=27 // pred_check
        %p189 = pneg %p57
      $region34: #{bi_propagate_forward.15} parent=27 // pred_check_branch
        %191 = sbr.rel (%p189) target = $region36
      $region35: #{bi_propagate_forward.15} parent=27 // pred_region
        %s192 = smul.u32 2, %s11
        %p193 = scmp.lt.s32.totalorder %s192, 3
        %s194 = scalar_select %p193, %s192, 3
        %s195 = smul.addr %s194, 8
        %s196 = scalar_lea.vmem %s1, %s195
        %s197 = smul.u32 2, %s11
      $region36: #{bi_propagate_forward.15} parent=27 // pred_fallthru
        _
    $region28: #{bi_propagate_forward.15} parent=5 // pred_fallthru
      _
    %p198 = scmp.le.s32.totalorder 1, %s11
    %p199 = scmp.lt.s32.totalorder %s11, 3
    %p200 = pnand %p198, %p199
    %p201 = pneg %p200
    // Predicated region
    $region37: #{bi_propagate_forward.15} parent=5 // pred_check
      _
    $region38: #{bi_propagate_forward.15} parent=5 // pred_check_branch
      %203 = sbr.rel (%p200) target = $region40
    $region39: #{bi_propagate_forward.15} parent=5 // pred_region
      %s204 = ssub.s32 %s11, 1
      %s205 = smul.u32 2, %s16
      %p206 = scmp.lt.s32.totalorder %s205, 3
      %s207 = scalar_select %p206, %s205, 3
      %s208 = smul.addr %s207, 8
      %s209 = scalar_lea.vmem %s0, %s208
      %p210 = pneg %p37
      %p211 = pneg %p34
      %s212 = smul.u32 2, %s16
      %p213 = scmp.lt.s32.totalorder %s212, 3
      %s214 = scalar_select %p213, %s212, 3
      %s215 = smul.addr %s214, 8
      %s216 = scalar_lea.vmem %s1, %s215
      %p217 = pneg %p63
      %p218 = pneg %p60
      %p219 = pneg %p84
      %p220 = pneg %p81
      %p221 = pneg %p105
      %p222 = pneg %p102
      %p223 = pneg %p126
      %p224 = pneg %p123
      %p225 = pneg %p152
      %p226 = pneg %p149
      %s227 = smul.u32 2, %s16
      %p228 = scmp.lt.s32.totalorder %s227, 3
      %s229 = scalar_select %p228, %s227, 3
      %s230 = smul.addr %s229, 8
      %s231 = scalar_lea.vmem %s5, %s230
      %s232 = smul.u32 2, %s16
      %p233 = scmp.lt.s32.totalorder %s232, 3
      %s234 = scalar_select %p233, %s232, 3
      %s235 = smul.addr %s234, 8
      %s236 = scalar_lea.vmem %s0, %s235
      %s237 = smul.u32 2, %s16
      %s238 = smul.u32 2, %s16
      %p239 = scmp.lt.s32.totalorder %s238, 3
      %s240 = scalar_select %p239, %s238, 3
      %s241 = smul.addr %s240, 8
      %s242 = scalar_lea.vmem %s1, %s241
      %s243 = smul.u32 2, %s16
      %s244 = smul.u32 2, %s16
      %p245 = scmp.lt.s32.totalorder %s244, 3
      %s246 = scalar_select %p245, %s244, 3
      %s247 = smul.addr %s246, 8
      %s248 = scalar_lea.vmem %s5, %s247
      %s249 = smul.u32 2, %s16
      %v250 = vld [vmem:[%s236] sm:$0xff]
      %v251 = vld [vmem:[%s236 + $0x8] sm:$0xff]
      %v252 = vpack.c.bf16 %v251, %v250
      %v253 = vld [vmem:[%s242] sm:$0xff]
      %v254 = vld [vmem:[%s242 + $0x8] sm:$0xff]
      %v255 = vpack.c.bf16 %v254, %v253
      %v256 = vld [vmem:[%s2] sm:$0xf]
      %v257 = vld [vmem:[%s2 + $0x4] sm:$0xf]
      %v258 = vld [vmem:[%s2 + $0x8] sm:$0xf]
      %v259 = vld [vmem:[%s2 + $0xc] sm:$0xf]
      %v260 = vld [vmem:[%s2 + $0x10] sm:$0xf]
      %v261 = vld [vmem:[%s2 + $0x14] sm:$0xf]
      %v262 = vld [vmem:[%s2 + $0x18] sm:$0xf]
      %v263 = vld [vmem:[%s2 + $0x1c] sm:$0xf]
      %v264 = vld [vmem:[%s2 + $0x20] sm:$0xf]
      %v265 = vld [vmem:[%s2 + $0x24] sm:$0xf]
      %v266 = vld [vmem:[%s2 + $0x28] sm:$0xf]
      %v267 = vld [vmem:[%s2 + $0x2c] sm:$0xf]
      %v268 = vld [vmem:[%s2 + $0x30] sm:$0xf]
      %v269 = vld [vmem:[%s2 + $0x34] sm:$0xf]
      %v270 = vld [vmem:[%s2 + $0x38] sm:$0xf]
      %v271 = vld [vmem:[%s2 + $0x3c] sm:$0xf]
      %v272 = vld [vmem:[%s3] sm:$0xf]
      %v273 = vld [vmem:[%s3 + $0x4] sm:$0xf]
      %v274 = vld [vmem:[%s3 + $0x8] sm:$0xf]
      %v275 = vld [vmem:[%s3 + $0xc] sm:$0xf]
      %v276 = vld [vmem:[%s3 + $0x10] sm:$0xf]
      %v277 = vld [vmem:[%s3 + $0x14] sm:$0xf]
      %v278 = vld [vmem:[%s3 + $0x18] sm:$0xf]
      %v279 = vld [vmem:[%s3 + $0x1c] sm:$0xf]
      %v280 = vld [vmem:[%s3 + $0x20] sm:$0xf]
      %v281 = vld [vmem:[%s3 + $0x24] sm:$0xf]
      %v282 = vld [vmem:[%s3 + $0x28] sm:$0xf]
      %v283 = vld [vmem:[%s3 + $0x2c] sm:$0xf]
      %v284 = vld [vmem:[%s3 + $0x30] sm:$0xf]
      %v285 = vld [vmem:[%s3 + $0x34] sm:$0xf]
      %v286 = vld [vmem:[%s3 + $0x38] sm:$0xf]
      %v287 = vld [vmem:[%s3 + $0x3c] sm:$0xf]
      %v304 = vunpack.c.l.b16 %v272
      %v305 = vunpack.c.l.b16 %v273
      %v306 = vunpack.c.l.b16 %v274
      %v307 = vunpack.c.l.b16 %v275
      %v308 = vunpack.c.l.b16 %v276
      %v309 = vunpack.c.l.b16 %v277
      %v310 = vunpack.c.l.b16 %v278
      %v311 = vunpack.c.l.b16 %v279
      %v312 = vunpack.c.l.b16 %v280
      %v313 = vunpack.c.l.b16 %v281
      %v314 = vunpack.c.l.b16 %v282
      %v315 = vunpack.c.l.b16 %v283
      %v316 = vunpack.c.l.b16 %v284
      %v317 = vunpack.c.l.b16 %v285
      %v318 = vunpack.c.l.b16 %v286
      %v319 = vunpack.c.l.b16 %v287
      %v320 = vpack.c.b16 %v305, %v304
      %v321 = vpack.c.b16 %v307, %v306
      %v322 = vpack.c.b16 %v309, %v308
      %v323 = vpack.c.b16 %v311, %v310
      %v324 = vpack.c.b16 %v313, %v312
      %v325 = vpack.c.b16 %v315, %v314
      %v326 = vpack.c.b16 %v317, %v316
      %v327 = vpack.c.b16 %v319, %v318
      %336 = vmatpush.bf16.msra.mxu0 %v327
      %337 = vmatpush.bf16.msra.mxu0 %v326
      %338 = vmatpush.bf16.msra.mxu0 %v325
      %339 = vmatpush.bf16.msra.mxu0 %v324
      %340 = vmatpush.bf16.msra.mxu0 %v323
      %341 = vmatpush.bf16.msra.mxu0 %v322
      %342 = vmatpush.bf16.msra.mxu0 %v321
      %343 = vmatpush.bf16.msra.mxu0 %v320
      %344 = vmatmul.bf16.gmra.mxu0 %v255
      %v345 = vpop.f32.mrf.mxu0
      %v346 = vadd.f32 0.0, %v345
      %v347 = vpop.f32.mrf.mxu0
      %v348 = vadd.f32 0.0, %v347
      %349 = vdwg.mxu0
      %v366 = vunpack.c.l.b16 %v256
      %v367 = vunpack.c.l.b16 %v257
      %v368 = vunpack.c.l.b16 %v258
      %v369 = vunpack.c.l.b16 %v259
      %v370 = vunpack.c.l.b16 %v260
      %v371 = vunpack.c.l.b16 %v261
      %v372 = vunpack.c.l.b16 %v262
      %v373 = vunpack.c.l.b16 %v263
      %v374 = vunpack.c.l.b16 %v264
      %v375 = vunpack.c.l.b16 %v265
      %v376 = vunpack.c.l.b16 %v266
      %v377 = vunpack.c.l.b16 %v267
      %v378 = vunpack.c.l.b16 %v268
      %v379 = vunpack.c.l.b16 %v269
      %v380 = vunpack.c.l.b16 %v270
      %v381 = vunpack.c.l.b16 %v271
      %v382 = vpack.c.b16 %v367, %v366
      %v383 = vpack.c.b16 %v369, %v368
      %v384 = vpack.c.b16 %v371, %v370
      %v385 = vpack.c.b16 %v373, %v372
      %v386 = vpack.c.b16 %v375, %v374
      %v387 = vpack.c.b16 %v377, %v376
      %v388 = vpack.c.b16 %v379, %v378
      %v389 = vpack.c.b16 %v381, %v380
      %398 = vmatpush.bf16.msra.mxu0 %v389
      %399 = vmatpush.bf16.msra.mxu0 %v388
      %400 = vmatpush.bf16.msra.mxu0 %v387
      %401 = vmatpush.bf16.msra.mxu0 %v386
      %402 = vmatpush.bf16.msra.mxu0 %v385
      %403 = vmatpush.bf16.msra.mxu0 %v384
      %404 = vmatpush.bf16.msra.mxu0 %v383
      %405 = vmatpush.bf16.msra.mxu0 %v382
      %406 = vmatmul.bf16.gmra.mxu0 %v252
      %v407 = vpop.f32.mrf.mxu0
      %v408 = vadd.f32 %v346, %v407
      %v409 = vpop.f32.mrf.mxu0
      %v410 = vadd.f32 %v348, %v409
      %411 = vdwg.mxu0
      %v412 = vld [vmem:[%s4] sm:$0x1]
      %v414 = vperm.slane %v412, 0
      %v416 = vadd.f32 %v408, %v414
      %v417 = vadd.f32 %v410, %v414
      %v418 = vmax.f32 %v416, 0.0
      %v419 = vmax.f32 %v417, 0.0
      %420 = vst [vmem:[%s248] sm:$0xff] %v418
      %421 = vst [vmem:[%s248 + $0x8] sm:$0xff] %v419
      %s422 = smul.u32 2, %s16
      %p423 = scmp.lt.s32.totalorder %s422, 3
      %s424 = scalar_select %p423, %s422, 3
      %s425 = smul.addr %s424, 8
      %s426 = scalar_lea.vmem %s5, %s425
      // Predicated region
      $region41: #{bi_propagate_forward.15} parent=39 // pred_check
        %p427 = pneg %p149
      $region42: #{bi_propagate_forward.15} parent=39 // pred_check_branch
        %429 = sbr.rel (%p427) target = $region44
      $region43: #{bi_propagate_forward.15} parent=39 // pred_region
        %s430 = smul.u32 2, %s16
      $region44: #{bi_propagate_forward.15} parent=39 // pred_fallthru
        _
    $region40: #{bi_propagate_forward.15} parent=5 // pred_fallthru
      _
    %p431 = scmp.le.s32.totalorder 2, %s11
    // Predicated region
    $region45: #{bi_propagate_forward.15} parent=5 // pred_check
      %p432 = pneg %p431
    $region46: #{bi_propagate_forward.15} parent=5 // pred_check_branch
      %434 = sbr.rel (%p432) target = $region48
    $region47: #{bi_propagate_forward.15} parent=5 // pred_region
      %s435 = ssub.s32 %s11, 2
      // Predicated region
      $region49: #{bi_propagate_forward.15} parent=47 // pred_check
        %p436 = pneg %p155
      $region50: #{bi_propagate_forward.15} parent=47 // pred_check_branch
        %438 = sbr.rel (%p436) target = $region52
      $region51: #{bi_propagate_forward.15} parent=47 // pred_region
        %s439 = smul.u32 2, %s17
        %p440 = scmp.lt.s32.totalorder %s439, 3
        %s441 = scalar_select %p440, %s439, 3
        %s442 = smul.addr %s441, 8
        %s443 = scalar_lea.vmem %s5, %s442
      $region52: #{bi_propagate_forward.15} parent=47 // pred_fallthru
        _
    $region48: #{bi_propagate_forward.15} parent=5 // pred_fallthru
      _
  $region6: #{bi_propagate_forward.15} parent=0 // loop_footer
    %s15 = sadd.s32 1, %s11
  $region7: #{bi_propagate_forward.15} parent=0 // loop_footer_branch
    %10 = sbr.rel target = $region3
  $region8: #{bi_propagate_forward.15} parent=0 // loop_exit
    _

// kernel: bi_propagate_forward.14
$region0: #{bi_propagate_forward.14}
  #allocation0 [shape = 'u32[]', space=smem, size = 0x4, offset = 0x4, fixed_abs, tag = 'smem constant byte address 0x4 - core index']
  #allocation1 [shape = 'u32[72,128]{1,0:T(1,128)}', space=vmem, size = 0x9000, scoped, tag = 'internal scratch']
  %s0 = inlined_call_operand.vmem [shape: f32[2,10,5,128], index: 0, kind: input, shape index: {}, may-alias: {0,2,4}]
  %s1 = inlined_call_operand.vmem [shape: f32[2,10,5,128], index: 1, kind: input, shape index: {}, may-alias: {1,3,5}]
  %s2 = inlined_call_operand.vmem [shape: f32[2,10,5,128], index: 2, kind: input, shape index: {}, may-alias: {0,2,4}]
  %s3 = inlined_call_operand.vmem [shape: f32[2,10,5,128], index: 3, kind: input, shape index: {}, may-alias: {1,3,5}]
  %s4 = inlined_call_operand.vmem [shape: f32[2,10,5,128], index: 4, kind: input, shape index: {}, may-alias: {0,2,4}]
  %s5 = inlined_call_operand.vmem [shape: f32[2,10,5,128], index: 5, kind: input, shape index: {}, may-alias: {1,3,5}]
  %s6 = inlined_call_operand.vmem [shape: bf16[9,128,128], index: 6, kind: input, shape index: {}]
  %s7 = inlined_call_operand.vmem [shape: f32[1,128], index: 7, kind: input, shape index: {}]
  %s8 = inlined_call_operand.vmem [shape: f32[2,4,4,128], index: 8, kind: output, shape index: {}]
  %s9 = sld [smem:[#allocation0]]
  $region65: #{bi_propagate_forward.14} parent=0
    _
  %s11 = ssub.s32 1, %s9
  %s12 = scalar_select 0, %s11, %s9
  loop: start=0, step=1, limit=10
  $region2: #{bi_propagate_forward.14} parent=0 // loop_pre_header
    _
  $region3: #{bi_propagate_forward.14} parent=0 // loop_header
    %s14 = sphi 0, %s18
    %p15 = scmp.ge.s32.totalorder %s14, 10
    %s21 = sphi 0, %s33
    %s22 = sphi 0, %s29
    %s23 = sphi 0, %s21
    %s24 = sphi 0, %s22
    %s25 = sphi 0, %s23
    %s26 = sphi 0, %s24
    %s40 = sphi 0, %s42
    %s43 = sphi 0, %s40
    %s44 = sphi 0, %s43
    %s60 = sphi 0, %s44
    %s70 = sphi 0, %s72
    %s73 = sphi 0, %s70
    %s74 = sphi 0, %s73
    %s90 = sphi 0, %s74
    %s102 = sphi 0, %s104
    %s105 = sphi 0, %s102
    %s106 = sphi 0, %s105
    %s122 = sphi 0, %s106
    %s134 = sphi 0, %s136
    %s137 = sphi 0, %s134
    %s138 = sphi 0, %s137
    %s154 = sphi 0, %s138
    %s166 = sphi 0, %s168
    %s169 = sphi 0, %s166
    %s170 = sphi 0, %s169
    %s186 = sphi 0, %s170
    %s198 = sphi 0, %s200
    %s201 = sphi 0, %s198
    %s202 = sphi 0, %s201
    %s218 = sphi 0, %s202
    %s222 = sphi 0, %s222
    %s224 = sphi 0, %s222
    %s225 = sphi 0, %s224
    %s239 = sphi 0, %s225
    %s243 = sphi 0, %s243
    %s245 = sphi 0, %s243
    %s246 = sphi 0, %s245
    %s260 = sphi 0, %s246
    %s268 = sphi 0, %s270
    %s271 = sphi 0, %s268
    %s272 = sphi 0, %s271
    %s288 = sphi 0, %s272
  $region4: #{bi_propagate_forward.14} parent=0 // loop_header_branch
    %17 = sbr.rel (%p15) target = $region8
  $region5: #{bi_propagate_forward.14} parent=0 // loop_body
    %s19 = ssub.s32 %s14, 1
    %s20 = ssub.s32 %s14, 2
    %s27 = sadd.s32 1, %s22
    %p28 = scmp.ge.s32.totalorder %s27, 4
    %s29 = scalar_select %p28, 0, %s27
    %s30 = sadd.s32 1, %s21
    %s31 = scalar_select %p28, %s30, %s21
    %p32 = scmp.ge.s32.totalorder %s31, 2
    %s33 = scalar_select %p32, 0, %s31
    %s34 = smul.u32 %s22, 2
    %s35 = smul.u32 %s29, 2
    %s36 = ssub.s32 %s21, %s33
    %s37 = ssub.s32 %s34, %s35
    %s38 = sor.u32 %s36, %s37
    %p39 = scmp.eq.s32.totalorder %s38, 0
    %s41 = sadd.s32 %s40, 1
    %s42 = scalar_select %p39, %s40, %s41
    %p45 = pneg %p39
    %p46 = scmp.eq.s32.totalorder %s14, 7
    %p47 = por %p45, %p46
    %p48 = scmp.ne.s32.totalorder %s40, %s43
    %p49 = scmp.eq.s32.totalorder %s14, 0
    %p50 = por %p48, %p49
    %p51 = scmp.ne.s32.totalorder %s40, %s43
    %p52 = scmp.eq.s32.totalorder %s19, 7
    %p53 = por %p51, %p52
    %p54 = scmp.ne.s32.totalorder %s43, %s44
    %p55 = scmp.eq.s32.totalorder %s19, 0
    %p56 = por %p54, %p55
    %p57 = scmp.ne.s32.totalorder %s43, %s44
    %p58 = scmp.eq.s32.totalorder %s20, 7
    %p59 = por %p57, %p58
    %p61 = scmp.ne.s32.totalorder %s44, %s60
    %p62 = scmp.eq.s32.totalorder %s20, 0
    %p63 = por %p61, %p62
    %s64 = smul.u32 %s22, 2
    %s65 = smul.u32 %s29, 2
    %s66 = ssub.s32 %s21, %s33
    %s67 = ssub.s32 %s64, %s65
    %s68 = sor.u32 %s66, %s67
    %p69 = scmp.eq.s32.totalorder %s68, 0
    %s71 = sadd.s32 %s70, 1
    %s72 = scalar_select %p69, %s70, %s71
    %p75 = pneg %p69
    %p76 = scmp.eq.s32.totalorder %s14, 7
    %p77 = por %p75, %p76
    %p78 = scmp.ne.s32.totalorder %s70, %s73
    %p79 = scmp.eq.s32.totalorder %s14, 0
    %p80 = por %p78, %p79
    %p81 = scmp.ne.s32.totalorder %s70, %s73
    %p82 = scmp.eq.s32.totalorder %s19, 7
    %p83 = por %p81, %p82
    %p84 = scmp.ne.s32.totalorder %s73, %s74
    %p85 = scmp.eq.s32.totalorder %s19, 0
    %p86 = por %p84, %p85
    %p87 = scmp.ne.s32.totalorder %s73, %s74
    %p88 = scmp.eq.s32.totalorder %s20, 7
    %p89 = por %p87, %p88
    %p91 = scmp.ne.s32.totalorder %s74, %s90
    %p92 = scmp.eq.s32.totalorder %s20, 0
    %p93 = por %p91, %p92
    %s94 = smul.u32 %s22, 2
    %s95 = sadd.s32 %s94, 1
    %s96 = smul.u32 %s29, 2
    %s97 = sadd.s32 %s96, 1
    %s98 = ssub.s32 %s21, %s33
    %s99 = ssub.s32 %s95, %s97
    %s100 = sor.u32 %s98, %s99
    %p101 = scmp.eq.s32.totalorder %s100, 0
    %s103 = sadd.s32 %s102, 1
    %s104 = scalar_select %p101, %s102, %s103
    %p107 = pneg %p101
    %p108 = scmp.eq.s32.totalorder %s14, 7
    %p109 = por %p107, %p108
    %p110 = scmp.ne.s32.totalorder %s102, %s105
    %p111 = scmp.eq.s32.totalorder %s14, 0
    %p112 = por %p110, %p111
    %p113 = scmp.ne.s32.totalorder %s102, %s105
    %p114 = scmp.eq.s32.totalorder %s19, 7
    %p115 = por %p113, %p114
    %p116 = scmp.ne.s32.totalorder %s105, %s106
    %p117 = scmp.eq.s32.totalorder %s19, 0
    %p118 = por %p116, %p117
    %p119 = scmp.ne.s32.totalorder %s105, %s106
    %p120 = scmp.eq.s32.totalorder %s20, 7
    %p121 = por %p119, %p120
    %p123 = scmp.ne.s32.totalorder %s106, %s122
    %p124 = scmp.eq.s32.totalorder %s20, 0
    %p125 = por %p123, %p124
    %s126 = smul.u32 %s22, 2
    %s127 = sadd.s32 %s126, 1
    %s128 = smul.u32 %s29, 2
    %s129 = sadd.s32 %s128, 1
    %s130 = ssub.s32 %s21, %s33
    %s131 = ssub.s32 %s127, %s129
    %s132 = sor.u32 %s130, %s131
    %p133 = scmp.eq.s32.totalorder %s132, 0
    %s135 = sadd.s32 %s134, 1
    %s136 = scalar_select %p133, %s134, %s135
    %p139 = pneg %p133
    %p140 = scmp.eq.s32.totalorder %s14, 7
    %p141 = por %p139, %p140
    %p142 = scmp.ne.s32.totalorder %s134, %s137
    %p143 = scmp.eq.s32.totalorder %s14, 0
    %p144 = por %p142, %p143
    %p145 = scmp.ne.s32.totalorder %s134, %s137
    %p146 = scmp.eq.s32.totalorder %s19, 7
    %p147 = por %p145, %p146
    %p148 = scmp.ne.s32.totalorder %s137, %s138
    %p149 = scmp.eq.s32.totalorder %s19, 0
    %p150 = por %p148, %p149
    %p151 = scmp.ne.s32.totalorder %s137, %s138
    %p152 = scmp.eq.s32.totalorder %s20, 7
    %p153 = por %p151, %p152
    %p155 = scmp.ne.s32.totalorder %s138, %s154
    %p156 = scmp.eq.s32.totalorder %s20, 0
    %p157 = por %p155, %p156
    %s158 = smul.u32 %s22, 2
    %s159 = sadd.s32 %s158, 2
    %s160 = smul.u32 %s29, 2
    %s161 = sadd.s32 %s160, 2
    %s162 = ssub.s32 %s21, %s33
    %s163 = ssub.s32 %s159, %s161
    %s164 = sor.u32 %s162, %s163
    %p165 = scmp.eq.s32.totalorder %s164, 0
    %s167 = sadd.s32 %s166, 1
    %s168 = scalar_select %p165, %s166, %s167
    %p171 = pneg %p165
    %p172 = scmp.eq.s32.totalorder %s14, 7
    %p173 = por %p171, %p172
    %p174 = scmp.ne.s32.totalorder %s166, %s169
    %p175 = scmp.eq.s32.totalorder %s14, 0
    %p176 = por %p174, %p175
    %p177 = scmp.ne.s32.totalorder %s166, %s169
    %p178 = scmp.eq.s32.totalorder %s19, 7
    %p179 = por %p177, %p178
    %p180 = scmp.ne.s32.totalorder %s169, %s170
    %p181 = scmp.eq.s32.totalorder %s19, 0
    %p182 = por %p180, %p181
    %p183 = scmp.ne.s32.totalorder %s169, %s170
    %p184 = scmp.eq.s32.totalorder %s20, 7
    %p185 = por %p183, %p184
    %p187 = scmp.ne.s32.totalorder %s170, %s186
    %p188 = scmp.eq.s32.totalorder %s20, 0
    %p189 = por %p187, %p188
    %s190 = smul.u32 %s22, 2
    %s191 = sadd.s32 %s190, 2
    %s192 = smul.u32 %s29, 2
    %s193 = sadd.s32 %s192, 2
    %s194 = ssub.s32 %s21, %s33
    %s195 = ssub.s32 %s191, %s193
    %s196 = sor.u32 %s194, %s195
    %p197 = scmp.eq.s32.totalorder %s196, 0
    %s199 = sadd.s32 %s198, 1
    %s200 = scalar_select %p197, %s198, %s199
    %p203 = pneg %p197
    %p204 = scmp.eq.s32.totalorder %s14, 7
    %p205 = por %p203, %p204
    %p206 = scmp.ne.s32.totalorder %s198, %s201
    %p207 = scmp.eq.s32.totalorder %s14, 0
    %p208 = por %p206, %p207
    %p209 = scmp.ne.s32.totalorder %s198, %s201
    %p210 = scmp.eq.s32.totalorder %s19, 7
    %p211 = por %p209, %p210
    %p212 = scmp.ne.s32.totalorder %s201, %s202
    %p213 = scmp.eq.s32.totalorder %s19, 0
    %p214 = por %p212, %p213
    %p215 = scmp.ne.s32.totalorder %s201, %s202
    %p216 = scmp.eq.s32.totalorder %s20, 7
    %p217 = por %p215, %p216
    %p219 = scmp.ne.s32.totalorder %s202, %s218
    %p220 = scmp.eq.s32.totalorder %s20, 0
    %p221 = por %p219, %p220
    %s223 = sadd.s32 %s222, 1
    %p226 = scmp.eq.s32.totalorder %s14, 7
    %p227 = scmp.ne.s32.totalorder %s222, %s224
    %p228 = scmp.eq.s32.totalorder %s14, 0
    %p229 = por %p227, %p228
    %p230 = scmp.ne.s32.totalorder %s222, %s224
    %p231 = scmp.eq.s32.totalorder %s19, 7
    %p232 = por %p230, %p231
    %p233 = scmp.ne.s32.totalorder %s224, %s225
    %p234 = scmp.eq.s32.totalorder %s19, 0
    %p235 = por %p233, %p234
    %p236 = scmp.ne.s32.totalorder %s224, %s225
    %p237 = scmp.eq.s32.totalorder %s20, 7
    %p238 = por %p236, %p237
    %p240 = scmp.ne.s32.totalorder %s225, %s239
    %p241 = scmp.eq.s32.totalorder %s20, 0
    %p242 = por %p240, %p241
    %s244 = sadd.s32 %s243, 1
    %p247 = scmp.eq.s32.totalorder %s14, 7
    %p248 = scmp.ne.s32.totalorder %s243, %s245
    %p249 = scmp.eq.s32.totalorder %s14, 0
    %p250 = por %p248, %p249
    %p251 = scmp.ne.s32.totalorder %s243, %s245
    %p252 = scmp.eq.s32.totalorder %s19, 7
    %p253 = por %p251, %p252
    %p254 = scmp.ne.s32.totalorder %s245, %s246
    %p255 = scmp.eq.s32.totalorder %s19, 0
    %p256 = por %p254, %p255
    %p257 = scmp.ne.s32.totalorder %s245, %s246
    %p258 = scmp.eq.s32.totalorder %s20, 7
    %p259 = por %p257, %p258
    %p261 = scmp.ne.s32.totalorder %s246, %s260
    %p262 = scmp.eq.s32.totalorder %s20, 0
    %p263 = por %p261, %p262
    %s264 = ssub.s32 %s21, %s33
    %s265 = ssub.s32 %s22, %s29
    %s266 = sor.u32 %s264, %s265
    %p267 = scmp.eq.s32.totalorder %s266, 0
    %s269 = sadd.s32 %s268, 1
    %s270 = scalar_select %p267, %s268, %s269
    %p273 = pneg %p267
    %p274 = scmp.eq.s32.totalorder %s14, 7
    %p275 = por %p273, %p274
    %p276 = scmp.ne.s32.totalorder %s268, %s271
    %p277 = scmp.eq.s32.totalorder %s14, 0
    %p278 = por %p276, %p277
    %p279 = scmp.ne.s32.totalorder %s268, %s271
    %p280 = scmp.eq.s32.totalorder %s19, 7
    %p281 = por %p279, %p280
    %p282 = scmp.ne.s32.totalorder %s271, %s272
    %p283 = scmp.eq.s32.totalorder %s19, 0
    %p284 = por %p282, %p283
    %p285 = scmp.ne.s32.totalorder %s271, %s272
    %p286 = scmp.eq.s32.totalorder %s20, 7
    %p287 = por %p285, %p286
    %p289 = scmp.ne.s32.totalorder %s272, %s288
    %p290 = scmp.eq.s32.totalorder %s20, 0
    %p291 = por %p289, %p290
    %p292 = scmp.le.s32.totalorder 1, %s14
    %p293 = scmp.lt.s32.totalorder %s14, 9
    %p294 = pnand %p292, %p293
    %p295 = pneg %p294
    // Predicated region
    $region9: #{bi_propagate_forward.14} parent=5 // pred_check
      _
    $region10: #{bi_propagate_forward.14} parent=5 // pred_check_branch
      %297 = sbr.rel (%p294) target = $region12
    $region11: #{bi_propagate_forward.14} parent=5 // pred_region
      %s298 = ssub.s32 %s14, 1
      // Predicated region
      $region13: #{bi_propagate_forward.14} parent=11 // pred_check
        %p299 = pneg %p235
      $region14: #{bi_propagate_forward.14} parent=11 // pred_check_branch
        %301 = sbr.rel (%p299) target = $region16
      $region15: #{bi_propagate_forward.14} parent=11 // pred_region
        _
      $region16: #{bi_propagate_forward.14} parent=11 // pred_fallthru
        _
      // Predicated region
      $region17: #{bi_propagate_forward.14} parent=11 // pred_check
        %p302 = pneg %p256
      $region18: #{bi_propagate_forward.14} parent=11 // pred_check_branch
        %304 = sbr.rel (%p302) target = $region20
      $region19: #{bi_propagate_forward.14} parent=11 // pred_region
        _
      $region20: #{bi_propagate_forward.14} parent=11 // pred_fallthru
        _
    $region12: #{bi_propagate_forward.14} parent=5 // pred_fallthru
      _
    %p305 = scmp.lt.s32.totalorder %s14, 8
    // Predicated region
    $region21: #{bi_propagate_forward.14} parent=5 // pred_check
      %p306 = pneg %p305
    $region22: #{bi_propagate_forward.14} parent=5 // pred_check_branch
      %308 = sbr.rel (%p306) target = $region24
    $region23: #{bi_propagate_forward.14} parent=5 // pred_region
      // Predicated region
      $region25: #{bi_propagate_forward.14} parent=23 // pred_check
        %p309 = pneg %p50
      $region26: #{bi_propagate_forward.14} parent=23 // pred_check_branch
        %311 = sbr.rel (%p309) target = $region28
      $region27: #{bi_propagate_forward.14} parent=23 // pred_region
        %s312 = smul.u32 %s22, 2
        %p313 = scmp.lt.s32.totalorder %s21, 1
        %s314 = scalar_select %p313, %s21, 1
        %p315 = scmp.lt.s32.totalorder %s312, 9
        %s316 = scalar_select %p315, %s312, 9
        %s317 = smul.addr %s314, 10
        %s318 = sadd.s32 %s316, %s317
        %s319 = smul.addr %s318, 8
        %s320 = scalar_lea.vmem %s0, %s319
        %s321 = smul.u32 %s22, 2
      $region28: #{bi_propagate_forward.14} parent=23 // pred_fallthru
        _
      // Predicated region
      $region29: #{bi_propagate_forward.14} parent=23 // pred_check
        %p322 = pneg %p80
      $region30: #{bi_propagate_forward.14} parent=23 // pred_check_branch
        %324 = sbr.rel (%p322) target = $region32
      $region31: #{bi_propagate_forward.14} parent=23 // pred_region
        %s325 = smul.u32 %s22, 2
        %p326 = scmp.lt.s32.totalorder %s21, 1
        %s327 = scalar_select %p326, %s21, 1
        %p328 = scmp.lt.s32.totalorder %s325, 9
        %s329 = scalar_select %p328, %s325, 9
        %s330 = smul.addr %s327, 10
        %s331 = sadd.s32 %s329, %s330
        %s332 = smul.addr %s331, 8
        %s333 = scalar_lea.vmem %s1, %s332
        %s334 = smul.u32 %s22, 2
      $region32: #{bi_propagate_forward.14} parent=23 // pred_fallthru
        _
      // Predicated region
      $region33: #{bi_propagate_forward.14} parent=23 // pred_check
        %p335 = pneg %p112
      $region34: #{bi_propagate_forward.14} parent=23 // pred_check_branch
        %337 = sbr.rel (%p335) target = $region36
      $region35: #{bi_propagate_forward.14} parent=23 // pred_region
        %s338 = smul.u32 %s22, 2
        %s339 = sadd.s32 %s338, 1
        %p340 = scmp.lt.s32.totalorder %s21, 1
        %s341 = scalar_select %p340, %s21, 1
        %p342 = scmp.lt.s32.totalorder %s339, 9
        %s343 = scalar_select %p342, %s339, 9
        %s344 = smul.addr %s341, 10
        %s345 = sadd.s32 %s343, %s344
        %s346 = smul.addr %s345, 8
        %s347 = scalar_lea.vmem %s2, %s346
        %s348 = smul.u32 %s22, 2
        %s349 = sadd.s32 %s348, 1
      $region36: #{bi_propagate_forward.14} parent=23 // pred_fallthru
        _
      // Predicated region
      $region37: #{bi_propagate_forward.14} parent=23 // pred_check
        %p350 = pneg %p144
      $region38: #{bi_propagate_forward.14} parent=23 // pred_check_branch
        %352 = sbr.rel (%p350) target = $region40
      $region39: #{bi_propagate_forward.14} parent=23 // pred_region
        %s353 = smul.u32 %s22, 2
        %s354 = sadd.s32 %s353, 1
        %p355 = scmp.lt.s32.totalorder %s21, 1
        %s356 = scalar_select %p355, %s21, 1
        %p357 = scmp.lt.s32.totalorder %s354, 9
        %s358 = scalar_select %p357, %s354, 9
        %s359 = smul.addr %s356, 10
        %s360 = sadd.s32 %s358, %s359
        %s361 = smul.addr %s360, 8
        %s362 = scalar_lea.vmem %s3, %s361
        %s363 = smul.u32 %s22, 2
        %s364 = sadd.s32 %s363, 1
      $region40: #{bi_propagate_forward.14} parent=23 // pred_fallthru
        _
      // Predicated region
      $region41: #{bi_propagate_forward.14} parent=23 // pred_check
        %p365 = pneg %p176
      $region42: #{bi_propagate_forward.14} parent=23 // pred_check_branch
        %367 = sbr.rel (%p365) target = $region44
      $region43: #{bi_propagate_forward.14} parent=23 // pred_region
        %s368 = smul.u32 %s22, 2
        %s369 = sadd.s32 %s368, 2
        %p370 = scmp.lt.s32.totalorder %s21, 1
        %s371 = scalar_select %p370, %s21, 1
        %p372 = scmp.lt.s32.totalorder %s369, 9
        %s373 = scalar_select %p372, %s369, 9
        %s374 = smul.addr %s371, 10
        %s375 = sadd.s32 %s373, %s374
        %s376 = smul.addr %s375, 8
        %s377 = scalar_lea.vmem %s4, %s376
        %s378 = smul.u32 %s22, 2
        %s379 = sadd.s32 %s378, 2
      $region44: #{bi_propagate_forward.14} parent=23 // pred_fallthru
        _
      // Predicated region
      $region45: #{bi_propagate_forward.14} parent=23 // pred_check
        %p380 = pneg %p208
      $region46: #{bi_propagate_forward.14} parent=23 // pred_check_branch
        %382 = sbr.rel (%p380) target = $region48
      $region47: #{bi_propagate_forward.14} parent=23 // pred_region
        %s383 = smul.u32 %s22, 2
        %s384 = sadd.s32 %s383, 2
        %p385 = scmp.lt.s32.totalorder %s21, 1
        %s386 = scalar_select %p385, %s21, 1
        %p387 = scmp.lt.s32.totalorder %s384, 9
        %s388 = scalar_select %p387, %s384, 9
        %s389 = smul.addr %s386, 10
        %s390 = sadd.s32 %s388, %s389
        %s391 = smul.addr %s390, 8
        %s392 = scalar_lea.vmem %s5, %s391
        %s393 = smul.u32 %s22, 2
        %s394 = sadd.s32 %s393, 2
      $region48: #{bi_propagate_forward.14} parent=23 // pred_fallthru
        _
    $region24: #{bi_propagate_forward.14} parent=5 // pred_fallthru
      _
    %p395 = scmp.le.s32.totalorder 1, %s14
    %p396 = scmp.lt.s32.totalorder %s14, 9
    %p397 = pnand %p395, %p396
    %p398 = pneg %p397
    // Predicated region
    $region49: #{bi_propagate_forward.14} parent=5 // pred_check
      _
    $region50: #{bi_propagate_forward.14} parent=5 // pred_check_branch
      %400 = sbr.rel (%p397) target = $region52
    $region51: #{bi_propagate_forward.14} parent=5 // pred_region
      %s401 = ssub.s32 %s14, 1
      %s402 = smul.u32 %s24, 2
      %p403 = scmp.lt.s32.totalorder %s23, 1
      %s404 = scalar_select %p403, %s23, 1
      %p405 = scmp.lt.s32.totalorder %s402, 9
      %s406 = scalar_select %p405, %s402, 9
      %s407 = smul.addr %s404, 10
      %s408 = sadd.s32 %s406, %s407
      %s409 = smul.addr %s408, 8
      %s410 = scalar_lea.vmem %s0, %s409
      %p411 = pneg %p56
      %p412 = pneg %p53
      %s413 = smul.u32 %s24, 2
      %p414 = scmp.lt.s32.totalorder %s23, 1
      %s415 = scalar_select %p414, %s23, 1
      %p416 = scmp.lt.s32.totalorder %s413, 9
      %s417 = scalar_select %p416, %s413, 9
      %s418 = smul.addr %s415, 10
      %s419 = sadd.s32 %s417, %s418
      %s420 = smul.addr %s419, 8
      %s421 = scalar_lea.vmem %s1, %s420
      %p422 = pneg %p86
      %p423 = pneg %p83
      %s424 = smul.u32 %s24, 2
      %s425 = sadd.s32 %s424, 1
      %p426 = scmp.lt.s32.totalorder %s23, 1
      %s427 = scalar_select %p426, %s23, 1
      %p428 = scmp.lt.s32.totalorder %s425, 9
      %s429 = scalar_select %p428, %s425, 9
      %s430 = smul.addr %s427, 10
      %s431 = sadd.s32 %s429, %s430
      %s432 = smul.addr %s431, 8
      %s433 = scalar_lea.vmem %s2, %s432
      %p434 = pneg %p118
      %p435 = pneg %p115
      %s436 = smul.u32 %s24, 2
      %s437 = sadd.s32 %s436, 1
      %p438 = scmp.lt.s32.totalorder %s23, 1
      %s439 = scalar_select %p438, %s23, 1
      %p440 = scmp.lt.s32.totalorder %s437, 9
      %s441 = scalar_select %p440, %s437, 9
      %s442 = smul.addr %s439, 10
      %s443 = sadd.s32 %s441, %s442
      %s444 = smul.addr %s443, 8
      %s445 = scalar_lea.vmem %s3, %s444
      %p446 = pneg %p150
      %p447 = pneg %p147
      %s448 = smul.u32 %s24, 2
      %s449 = sadd.s32 %s448, 2
      %p450 = scmp.lt.s32.totalorder %s23, 1
      %s451 = scalar_select %p450, %s23, 1
      %p452 = scmp.lt.s32.totalorder %s449, 9
      %s453 = scalar_select %p452, %s449, 9
      %s454 = smul.addr %s451, 10
      %s455 = sadd.s32 %s453, %s454
      %s456 = smul.addr %s455, 8
      %s457 = scalar_lea.vmem %s4, %s456
      %p458 = pneg %p182
      %p459 = pneg %p179
      %s460 = smul.u32 %s24, 2
      %s461 = sadd.s32 %s460, 2
      %p462 = scmp.lt.s32.totalorder %s23, 1
      %s463 = scalar_select %p462, %s23, 1
      %p464 = scmp.lt.s32.totalorder %s461, 9
      %s465 = scalar_select %p464, %s461, 9
      %s466 = smul.addr %s463, 10
      %s467 = sadd.s32 %s465, %s466
      %s468 = smul.addr %s467, 8
      %s469 = scalar_lea.vmem %s5, %s468
      %p470 = pneg %p214
      %p471 = pneg %p211
      %p472 = pneg %p235
      %p473 = pneg %p232
      %p474 = pneg %p256
      %p475 = pneg %p253
      %p476 = pneg %p284
      %p477 = pneg %p281
      %p478 = scmp.lt.s32.totalorder %s23, 1
      %s479 = scalar_select %p478, %s23, 1
      %p480 = scmp.lt.s32.totalorder %s24, 3
      %s481 = scalar_select %p480, %s24, 3
      %s482 = smul.addr %s479, 4
      %s483 = sadd.s32 %s481, %s482
      %s484 = smul.addr %s483, 4
      %s485 = scalar_lea.vmem %s8, %s484
      %s486 = smul.u32 %s24, 2
      %p487 = scmp.lt.s32.totalorder %s23, 1
      %s488 = scalar_select %p487, %s23, 1
      %p489 = scmp.lt.s32.totalorder %s486, 9
      %s490 = scalar_select %p489, %s486, 9
      %s491 = smul.addr %s488, 10
      %s492 = sadd.s32 %s490, %s491
      %s493 = smul.addr %s492, 8
      %s494 = scalar_lea.vmem %s0, %s493
      %s495 = smul.u32 %s24, 2
      %s496 = smul.u32 %s24, 2
      %p497 = scmp.lt.s32.totalorder %s23, 1
      %s498 = scalar_select %p497, %s23, 1
      %p499 = scmp.lt.s32.totalorder %s496, 9
      %s500 = scalar_select %p499, %s496, 9
      %s501 = smul.addr %s498, 10
      %s502 = sadd.s32 %s500, %s501
      %s503 = smul.addr %s502, 8
      %s504 = scalar_lea.vmem %s1, %s503
      %s505 = smul.u32 %s24, 2
      %s506 = smul.u32 %s24, 2
      %s507 = sadd.s32 %s506, 1
      %p508 = scmp.lt.s32.totalorder %s23, 1
      %s509 = scalar_select %p508, %s23, 1
      %p510 = scmp.lt.s32.totalorder %s507, 9
      %s511 = scalar_select %p510, %s507, 9
      %s512 = smul.addr %s509, 10
      %s513 = sadd.s32 %s511, %s512
      %s514 = smul.addr %s513, 8
      %s515 = scalar_lea.vmem %s2, %s514
      %s516 = smul.u32 %s24, 2
      %s517 = sadd.s32 %s516, 1
      %s518 = smul.u32 %s24, 2
      %s519 = sadd.s32 %s518, 1
      %p520 = scmp.lt.s32.totalorder %s23, 1
      %s521 = scalar_select %p520, %s23, 1
      %p522 = scmp.lt.s32.totalorder %s519, 9
      %s523 = scalar_select %p522, %s519, 9
      %s524 = smul.addr %s521, 10
      %s525 = sadd.s32 %s523, %s524
      %s526 = smul.addr %s525, 8
      %s527 = scalar_lea.vmem %s3, %s526
      %s528 = smul.u32 %s24, 2
      %s529 = sadd.s32 %s528, 1
      %s530 = smul.u32 %s24, 2
      %s531 = sadd.s32 %s530, 2
      %p532 = scmp.lt.s32.totalorder %s23, 1
      %s533 = scalar_select %p532, %s23, 1
      %p534 = scmp.lt.s32.totalorder %s531, 9
      %s535 = scalar_select %p534, %s531, 9
      %s536 = smul.addr %s533, 10
      %s537 = sadd.s32 %s535, %s536
      %s538 = smul.addr %s537, 8
      %s539 = scalar_lea.vmem %s4, %s538
      %s540 = smul.u32 %s24, 2
      %s541 = sadd.s32 %s540, 2
      %s542 = smul.u32 %s24, 2
      %s543 = sadd.s32 %s542, 2
      %p544 = scmp.lt.s32.totalorder %s23, 1
      %s545 = scalar_select %p544, %s23, 1
      %p546 = scmp.lt.s32.totalorder %s543, 9
      %s547 = scalar_select %p546, %s543, 9
      %s548 = smul.addr %s545, 10
      %s549 = sadd.s32 %s547, %s548
      %s550 = smul.addr %s549, 8
      %s551 = scalar_lea.vmem %s5, %s550
      %s552 = smul.u32 %s24, 2
      %s553 = sadd.s32 %s552, 2
      %p554 = scmp.lt.s32.totalorder %s23, 1
      %s555 = scalar_select %p554, %s23, 1
      %p556 = scmp.lt.s32.totalorder %s24, 3
      %s557 = scalar_select %p556, %s24, 3
      %s558 = smul.addr %s555, 4
      %s559 = sadd.s32 %s557, %s558
      %s560 = smul.addr %s559, 4
      %s561 = scalar_lea.vmem %s8, %s560
      %v562 = vld [vmem:[%s494] sm:$0xf]
      %v563 = vpack.c.bf16 %v562, %v562
      %v564 = vld [vmem:[%s504] sm:$0xf]
      %v565 = vpack.c.bf16 %v564, %v564
      %v566 = vld [vmem:[%s494 + $0x1] sm:$0xf]
      %v567 = vpack.c.bf16 %v566, %v566
      %v568 = vld [vmem:[%s6] sm:$0xf]
      %v569 = vld [vmem:[%s6 + $0x4] sm:$0xf]
      %v570 = vld [vmem:[%s6 + $0x8] sm:$0xf]
      %v571 = vld [vmem:[%s6 + $0xc] sm:$0xf]
      %v572 = vld [vmem:[%s6 + $0x10] sm:$0xf]
      %v573 = vld [vmem:[%s6 + $0x14] sm:$0xf]
      %v574 = vld [vmem:[%s6 + $0x18] sm:$0xf]
      %v575 = vld [vmem:[%s6 + $0x1c] sm:$0xf]
      %v576 = vld [vmem:[%s6 + $0x20] sm:$0xf]
      %v577 = vld [vmem:[%s6 + $0x24] sm:$0xf]
      %v578 = vld [vmem:[%s6 + $0x28] sm:$0xf]
      %v579 = vld [vmem:[%s6 + $0x2c] sm:$0xf]
      %v580 = vld [vmem:[%s6 + $0x30] sm:$0xf]
      %v581 = vld [vmem:[%s6 + $0x34] sm:$0xf]
      %v582 = vld [vmem:[%s6 + $0x38] sm:$0xf]
      %v583 = vld [vmem:[%s6 + $0x3c] sm:$0xf]
      %s584 = scalar_lea.vmem %s6, 64
      %v585 = vld [vmem:[%s584] sm:$0xf]
      %v586 = vld [vmem:[%s584 + $0x4] sm:$0xf]
      %v587 = vld [vmem:[%s584 + $0x8] sm:$0xf]
      %v588 = vld [vmem:[%s584 + $0xc] sm:$0xf]
      %v589 = vld [vmem:[%s584 + $0x10] sm:$0xf]
      %v590 = vld [vmem:[%s584 + $0x14] sm:$0xf]
      %v591 = vld [vmem:[%s584 + $0x18] sm:$0xf]
      %v592 = vld [vmem:[%s584 + $0x1c] sm:$0xf]
      %v593 = vld [vmem:[%s584 + $0x20] sm:$0xf]
      %v594 = vld [vmem:[%s584 + $0x24] sm:$0xf]
      %v595 = vld [vmem:[%s584 + $0x28] sm:$0xf]
      %v596 = vld [vmem:[%s584 + $0x2c] sm:$0xf]
      %v597 = vld [vmem:[%s584 + $0x30] sm:$0xf]
      %v598 = vld [vmem:[%s584 + $0x34] sm:$0xf]
      %v599 = vld [vmem:[%s584 + $0x38] sm:$0xf]
      %v600 = vld [vmem:[%s584 + $0x3c] sm:$0xf]
      %v617 = vunpack.c.l.b16 %v585
      %v618 = vunpack.c.l.b16 %v586
      %v619 = vunpack.c.l.b16 %v587
      %v620 = vunpack.c.l.b16 %v588
      %v621 = vunpack.c.l.b16 %v589
      %v622 = vunpack.c.l.b16 %v590
      %v623 = vunpack.c.l.b16 %v591
      %v624 = vunpack.c.l.b16 %v592
      %v625 = vunpack.c.l.b16 %v593
      %v626 = vunpack.c.l.b16 %v594
      %v627 = vunpack.c.l.b16 %v595
      %v628 = vunpack.c.l.b16 %v596
      %v629 = vunpack.c.l.b16 %v597
      %v630 = vunpack.c.l.b16 %v598
      %v631 = vunpack.c.l.b16 %v599
      %v632 = vunpack.c.l.b16 %v600
      %v633 = vpack.c.b16 %v618, %v617
      %v634 = vpack.c.b16 %v620, %v619
      %v635 = vpack.c.b16 %v622, %v621
      %v636 = vpack.c.b16 %v624, %v623
      %v637 = vpack.c.b16 %v626, %v625
      %v638 = vpack.c.b16 %v628, %v627
      %v639 = vpack.c.b16 %v630, %v629
      %v640 = vpack.c.b16 %v632, %v631
      %649 = vmatpush.bf16.msra.mxu0 %v640
      %650 = vmatpush.bf16.msra.mxu0 %v639
      %651 = vmatpush.bf16.msra.mxu0 %v638
      %652 = vmatpush.bf16.msra.mxu0 %v637
      %653 = vmatpush.bf16.msra.mxu0 %v636
      %654 = vmatpush.bf16.msra.mxu0 %v635
      %655 = vmatpush.bf16.msra.mxu0 %v634
      %656 = vmatpush.bf16.msra.mxu0 %v633
      %657 = vmatmul.bf16.gmra.mxu0 %v565
      %v658 = vpop.f32.mrf.mxu0
      %v659 = vadd.f32 0.0, %v658
      %v660 = vpop.f32.mrf.mxu0
      %661 = vdwg.mxu0
      %v678 = vunpack.c.l.b16 %v568
      %v679 = vunpack.c.l.b16 %v569
      %v680 = vunpack.c.l.b16 %v570
      %v681 = vunpack.c.l.b16 %v571
      %v682 = vunpack.c.l.b16 %v572
      %v683 = vunpack.c.l.b16 %v573
      %v684 = vunpack.c.l.b16 %v574
      %v685 = vunpack.c.l.b16 %v575
      %v686 = vunpack.c.l.b16 %v576
      %v687 = vunpack.c.l.b16 %v577
      %v688 = vunpack.c.l.b16 %v578
      %v689 = vunpack.c.l.b16 %v579
      %v690 = vunpack.c.l.b16 %v580
      %v691 = vunpack.c.l.b16 %v581
      %v692 = vunpack.c.l.b16 %v582
      %v693 = vunpack.c.l.b16 %v583
      %v694 = vpack.c.b16 %v679, %v678
      %v695 = vpack.c.b16 %v681, %v680
      %v696 = vpack.c.b16 %v683, %v682
      %v697 = vpack.c.b16 %v685, %v684
      %v698 = vpack.c.b16 %v687, %v686
      %v699 = vpack.c.b16 %v689, %v688
      %v700 = vpack.c.b16 %v691, %v690
      %v701 = vpack.c.b16 %v693, %v692
      %710 = vmatpush.bf16.msra.mxu0 %v701
      %711 = vmatpush.bf16.msra.mxu0 %v700
      %712 = vmatpush.bf16.msra.mxu0 %v699
      %713 = vmatpush.bf16.msra.mxu0 %v698
      %714 = vmatpush.bf16.msra.mxu0 %v697
      %715 = vmatpush.bf16.msra.mxu0 %v696
      %716 = vmatpush.bf16.msra.mxu0 %v695
      %717 = vmatpush.bf16.msra.mxu0 %v694
      %718 = vmatmul.bf16.gmra.mxu0 %v563
      %v719 = vpop.f32.mrf.mxu0
      %v720 = vadd.f32 %v659, %v719
      %v721 = vpop.f32.mrf.mxu0
      %722 = vdwg.mxu0
      %s723 = scalar_lea.vmem %s6, 128
      %v724 = vld [vmem:[%s723] sm:$0xf]
      %v725 = vld [vmem:[%s723 + $0x4] sm:$0xf]
      %v726 = vld [vmem:[%s723 + $0x8] sm:$0xf]
      %v727 = vld [vmem:[%s723 + $0xc] sm:$0xf]
      %v728 = vld [vmem:[%s723 + $0x10] sm:$0xf]
      %v729 = vld [vmem:[%s723 + $0x14] sm:$0xf]
      %v730 = vld [vmem:[%s723 + $0x18] sm:$0xf]
      %v731 = vld [vmem:[%s723 + $0x1c] sm:$0xf]
      %v732 = vld [vmem:[%s723 + $0x20] sm:$0xf]
      %v733 = vld [vmem:[%s723 + $0x24] sm:$0xf]
      %v734 = vld [vmem:[%s723 + $0x28] sm:$0xf]
      %v735 = vld [vmem:[%s723 + $0x2c] sm:$0xf]
      %v736 = vld [vmem:[%s723 + $0x30] sm:$0xf]
      %v737 = vld [vmem:[%s723 + $0x34] sm:$0xf]
      %v738 = vld [vmem:[%s723 + $0x38] sm:$0xf]
      %v739 = vld [vmem:[%s723 + $0x3c] sm:$0xf]
      %v756 = vunpack.c.l.b16 %v724
      %v757 = vunpack.c.l.b16 %v725
      %v758 = vunpack.c.l.b16 %v726
      %v759 = vunpack.c.l.b16 %v727
      %v760 = vunpack.c.l.b16 %v728
      %v761 = vunpack.c.l.b16 %v729
      %v762 = vunpack.c.l.b16 %v730
      %v763 = vunpack.c.l.b16 %v731
      %v764 = vunpack.c.l.b16 %v732
      %v765 = vunpack.c.l.b16 %v733
      %v766 = vunpack.c.l.b16 %v734
      %v767 = vunpack.c.l.b16 %v735
      %v768 = vunpack.c.l.b16 %v736
      %v769 = vunpack.c.l.b16 %v737
      %v770 = vunpack.c.l.b16 %v738
      %v771 = vunpack.c.l.b16 %v739
      %v772 = vpack.c.b16 %v757, %v756
      %v773 = vpack.c.b16 %v759, %v758
      %v774 = vpack.c.b16 %v761, %v760
      %v775 = vpack.c.b16 %v763, %v762
      %v776 = vpack.c.b16 %v765, %v764
      %v777 = vpack.c.b16 %v767, %v766
      %v778 = vpack.c.b16 %v769, %v768
      %v779 = vpack.c.b16 %v771, %v770
      %788 = vmatpush.bf16.msra.mxu0 %v779
      %789 = vmatpush.bf16.msra.mxu0 %v778
      %790 = vmatpush.bf16.msra.mxu0 %v777
      %791 = vmatpush.bf16.msra.mxu0 %v776
      %792 = vmatpush.bf16.msra.mxu0 %v775
      %793 = vmatpush.bf16.msra.mxu0 %v774
      %794 = vmatpush.bf16.msra.mxu0 %v773
      %795 = vmatpush.bf16.msra.mxu0 %v772
      %796 = vmatmul.bf16.gmra.mxu0 %v567
      %v797 = vpop.f32.mrf.mxu0
      %v798 = vadd.f32 0.0, %v797
      %v799 = vpop.f32.mrf.mxu0
      %800 = vdwg.mxu0
      %v801 = vadd.f32 %v720, %v798
      %v802 = vld [vmem:[%s515] sm:$0xf]
      %v803 = vpack.c.bf16 %v802, %v802
      %v804 = vld [vmem:[%s527] sm:$0xf]
      %v805 = vpack.c.bf16 %v804, %v804
      %v806 = vld [vmem:[%s515 + $0x1] sm:$0xf]
      %v807 = vpack.c.bf16 %v806, %v806
      %s808 = scalar_lea.vmem %s6, 192
      %v809 = vld [vmem:[%s808] sm:$0xf]
      %v810 = vld [vmem:[%s808 + $0x4] sm:$0xf]
      %v811 = vld [vmem:[%s808 + $0x8] sm:$0xf]
      %v812 = vld [vmem:[%s808 + $0xc] sm:$0xf]
      %v813 = vld [vmem:[%s808 + $0x10] sm:$0xf]
      %v814 = vld [vmem:[%s808 + $0x14] sm:$0xf]
      %v815 = vld [vmem:[%s808 + $0x18] sm:$0xf]
      %v816 = vld [vmem:[%s808 + $0x1c] sm:$0xf]
      %v817 = vld [vmem:[%s808 + $0x20] sm:$0xf]
      %v818 = vld [vmem:[%s808 + $0x24] sm:$0xf]
      %v819 = vld [vmem:[%s808 + $0x28] sm:$0xf]
      %v820 = vld [vmem:[%s808 + $0x2c] sm:$0xf]
      %v821 = vld [vmem:[%s808 + $0x30] sm:$0xf]
      %v822 = vld [vmem:[%s808 + $0x34] sm:$0xf]
      %v823 = vld [vmem:[%s808 + $0x38] sm:$0xf]
      %v824 = vld [vmem:[%s808 + $0x3c] sm:$0xf]
      %v841 = vunpack.c.l.b16 %v809
      %v842 = vunpack.c.l.b16 %v810
      %v843 = vunpack.c.l.b16 %v811
      %v844 = vunpack.c.l.b16 %v812
      %v845 = vunpack.c.l.b16 %v813
      %v846 = vunpack.c.l.b16 %v814
      %v847 = vunpack.c.l.b16 %v815
      %v848 = vunpack.c.l.b16 %v816
      %v849 = vunpack.c.l.b16 %v817
      %v850 = vunpack.c.l.b16 %v818
      %v851 = vunpack.c.l.b16 %v819
      %v852 = vunpack.c.l.b16 %v820
      %v853 = vunpack.c.l.b16 %v821
      %v854 = vunpack.c.l.b16 %v822
      %v855 = vunpack.c.l.b16 %v823
      %v856 = vunpack.c.l.b16 %v824
      %v857 = vpack.c.b16 %v842, %v841
      %v858 = vpack.c.b16 %v844, %v843
      %v859 = vpack.c.b16 %v846, %v845
      %v860 = vpack.c.b16 %v848, %v847
      %v861 = vpack.c.b16 %v850, %v849
      %v862 = vpack.c.b16 %v852, %v851
      %v863 = vpack.c.b16 %v854, %v853
      %v864 = vpack.c.b16 %v856, %v855
      %873 = vmatpush.bf16.msra.mxu0 %v864
      %874 = vmatpush.bf16.msra.mxu0 %v863
      %875 = vmatpush.bf16.msra.mxu0 %v862
      %876 = vmatpush.bf16.msra.mxu0 %v861
      %877 = vmatpush.bf16.msra.mxu0 %v860
      %878 = vmatpush.bf16.msra.mxu0 %v859
      %879 = vmatpush.bf16.msra.mxu0 %v858
      %880 = vmatpush.bf16.msra.mxu0 %v857
      %881 = vmatmul.bf16.gmra.mxu0 %v803
      %v882 = vpop.f32.mrf.mxu0
      %v883 = vadd.f32 0.0, %v882
      %v884 = vpop.f32.mrf.mxu0
      %885 = vdwg.mxu0
      %v886 = vadd.f32 %v801, %v883
      %s887 = scalar_lea.vmem %s6, 256
      %v888 = vld [vmem:[%s887] sm:$0xf]
      %v889 = vld [vmem:[%s887 + $0x4] sm:$0xf]
      %v890 = vld [vmem:[%s887 + $0x8] sm:$0xf]
      %v891 = vld [vmem:[%s887 + $0xc] sm:$0xf]
      %v892 = vld [vmem:[%s887 + $0x10] sm:$0xf]
      %v893 = vld [vmem:[%s887 + $0x14] sm:$0xf]
      %v894 = vld [vmem:[%s887 + $0x18] sm:$0xf]
      %v895 = vld [vmem:[%s887 + $0x1c] sm:$0xf]
      %v896 = vld [vmem:[%s887 + $0x20] sm:$0xf]
      %v897 = vld [vmem:[%s887 + $0x24] sm:$0xf]
      %v898 = vld [vmem:[%s887 + $0x28] sm:$0xf]
      %v899 = vld [vmem:[%s887 + $0x2c] sm:$0xf]
      %v900 = vld [vmem:[%s887 + $0x30] sm:$0xf]
      %v901 = vld [vmem:[%s887 + $0x34] sm:$0xf]
      %v902 = vld [vmem:[%s887 + $0x38] sm:$0xf]
      %v903 = vld [vmem:[%s887 + $0x3c] sm:$0xf]
      %v920 = vunpack.c.l.b16 %v888
      %v921 = vunpack.c.l.b16 %v889
      %v922 = vunpack.c.l.b16 %v890
      %v923 = vunpack.c.l.b16 %v891
      %v924 = vunpack.c.l.b16 %v892
      %v925 = vunpack.c.l.b16 %v893
      %v926 = vunpack.c.l.b16 %v894
      %v927 = vunpack.c.l.b16 %v895
      %v928 = vunpack.c.l.b16 %v896
      %v929 = vunpack.c.l.b16 %v897
      %v930 = vunpack.c.l.b16 %v898
      %v931 = vunpack.c.l.b16 %v899
      %v932 = vunpack.c.l.b16 %v900
      %v933 = vunpack.c.l.b16 %v901
      %v934 = vunpack.c.l.b16 %v902
      %v935 = vunpack.c.l.b16 %v903
      %v936 = vpack.c.b16 %v921, %v920
      %v937 = vpack.c.b16 %v923, %v922
      %v938 = vpack.c.b16 %v925, %v924
      %v939 = vpack.c.b16 %v927, %v926
      %v940 = vpack.c.b16 %v929, %v928
      %v941 = vpack.c.b16 %v931, %v930
      %v942 = vpack.c.b16 %v933, %v932
      %v943 = vpack.c.b16 %v935, %v934
      %952 = vmatpush.bf16.msra.mxu0 %v943
      %953 = vmatpush.bf16.msra.mxu0 %v942
      %954 = vmatpush.bf16.msra.mxu0 %v941
      %955 = vmatpush.bf16.msra.mxu0 %v940
      %956 = vmatpush.bf16.msra.mxu0 %v939
      %957 = vmatpush.bf16.msra.mxu0 %v938
      %958 = vmatpush.bf16.msra.mxu0 %v937
      %959 = vmatpush.bf16.msra.mxu0 %v936
      %960 = vmatmul.bf16.gmra.mxu0 %v805
      %v961 = vpop.f32.mrf.mxu0
      %v962 = vadd.f32 0.0, %v961
      %v963 = vpop.f32.mrf.mxu0
      %964 = vdwg.mxu0
      %v965 = vadd.f32 %v886, %v962
      %s966 = scalar_lea.vmem %s6, 320
      %v967 = vld [vmem:[%s966] sm:$0xf]
      %v968 = vld [vmem:[%s966 + $0x4] sm:$0xf]
      %v969 = vld [vmem:[%s966 + $0x8] sm:$0xf]
      %v970 = vld [vmem:[%s966 + $0xc] sm:$0xf]
      %v971 = vld [vmem:[%s966 + $0x10] sm:$0xf]
      %v972 = vld [vmem:[%s966 + $0x14] sm:$0xf]
      %v973 = vld [vmem:[%s966 + $0x18] sm:$0xf]
      %v974 = vld [vmem:[%s966 + $0x1c] sm:$0xf]
      %v975 = vld [vmem:[%s966 + $0x20] sm:$0xf]
      %v976 = vld [vmem:[%s966 + $0x24] sm:$0xf]
      %v977 = vld [vmem:[%s966 + $0x28] sm:$0xf]
      %v978 = vld [vmem:[%s966 + $0x2c] sm:$0xf]
      %v979 = vld [vmem:[%s966 + $0x30] sm:$0xf]
      %v980 = vld [vmem:[%s966 + $0x34] sm:$0xf]
      %v981 = vld [vmem:[%s966 + $0x38] sm:$0xf]
      %v982 = vld [vmem:[%s966 + $0x3c] sm:$0xf]
      %v999 = vunpack.c.l.b16 %v967
      %v1000 = vunpack.c.l.b16 %v968
      %v1001 = vunpack.c.l.b16 %v969
      %v1002 = vunpack.c.l.b16 %v970
      %v1003 = vunpack.c.l.b16 %v971
      %v1004 = vunpack.c.l.b16 %v972
      %v1005 = vunpack.c.l.b16 %v973
      %v1006 = vunpack.c.l.b16 %v974
      %v1007 = vunpack.c.l.b16 %v975
      %v1008 = vunpack.c.l.b16 %v976
      %v1009 = vunpack.c.l.b16 %v977
      %v1010 = vunpack.c.l.b16 %v978
      %v1011 = vunpack.c.l.b16 %v979
      %v1012 = vunpack.c.l.b16 %v980
      %v1013 = vunpack.c.l.b16 %v981
      %v1014 = vunpack.c.l.b16 %v982
      %v1015 = vpack.c.b16 %v1000, %v999
      %v1016 = vpack.c.b16 %v1002, %v1001
      %v1017 = vpack.c.b16 %v1004, %v1003
      %v1018 = vpack.c.b16 %v1006, %v1005
      %v1019 = vpack.c.b16 %v1008, %v1007
      %v1020 = vpack.c.b16 %v1010, %v1009
      %v1021 = vpack.c.b16 %v1012, %v1011
      %v1022 = vpack.c.b16 %v1014, %v1013
      %1031 = vmatpush.bf16.msra.mxu0 %v1022
      %1032 = vmatpush.bf16.msra.mxu0 %v1021
      %1033 = vmatpush.bf16.msra.mxu0 %v1020
      %1034 = vmatpush.bf16.msra.mxu0 %v1019
      %1035 = vmatpush.bf16.msra.mxu0 %v1018
      %1036 = vmatpush.bf16.msra.mxu0 %v1017
      %1037 = vmatpush.bf16.msra.mxu0 %v1016
      %1038 = vmatpush.bf16.msra.mxu0 %v1015
      %1039 = vmatmul.bf16.gmra.mxu0 %v807
      %v1040 = vpop.f32.mrf.mxu0
      %v1041 = vadd.f32 0.0, %v1040
      %v1042 = vpop.f32.mrf.mxu0
      %1043 = vdwg.mxu0
      %v1044 = vadd.f32 %v965, %v1041
      %v1045 = vld [vmem:[%s539] sm:$0xf]
      %v1046 = vpack.c.bf16 %v1045, %v1045
      %v1047 = vld [vmem:[%s551] sm:$0xf]
      %v1048 = vpack.c.bf16 %v1047, %v1047
      %v1049 = vld [vmem:[%s539 + $0x1] sm:$0xf]
      %v1050 = vpack.c.bf16 %v1049, %v1049
      %s1051 = scalar_lea.vmem %s6, 384
      %v1052 = vld [vmem:[%s1051] sm:$0xf]
      %v1053 = vld [vmem:[%s1051 + $0x4] sm:$0xf]
      %v1054 = vld [vmem:[%s1051 + $0x8] sm:$0xf]
      %v1055 = vld [vmem:[%s1051 + $0xc] sm:$0xf]
      %v1056 = vld [vmem:[%s1051 + $0x10] sm:$0xf]
      %v1057 = vld [vmem:[%s1051 + $0x14] sm:$0xf]
      %v1058 = vld [vmem:[%s1051 + $0x18] sm:$0xf]
      %v1059 = vld [vmem:[%s1051 + $0x1c] sm:$0xf]
      %v1060 = vld [vmem:[%s1051 + $0x20] sm:$0xf]
      %v1061 = vld [vmem:[%s1051 + $0x24] sm:$0xf]
      %v1062 = vld [vmem:[%s1051 + $0x28] sm:$0xf]
      %v1063 = vld [vmem:[%s1051 + $0x2c] sm:$0xf]
      %v1064 = vld [vmem:[%s1051 + $0x30] sm:$0xf]
      %v1065 = vld [vmem:[%s1051 + $0x34] sm:$0xf]
      %v1066 = vld [vmem:[%s1051 + $0x38] sm:$0xf]
      %v1067 = vld [vmem:[%s1051 + $0x3c] sm:$0xf]
      %v1084 = vunpack.c.l.b16 %v1052
      %v1085 = vunpack.c.l.b16 %v1053
      %v1086 = vunpack.c.l.b16 %v1054
      %v1087 = vunpack.c.l.b16 %v1055
      %v1088 = vunpack.c.l.b16 %v1056
      %v1089 = vunpack.c.l.b16 %v1057
      %v1090 = vunpack.c.l.b16 %v1058
      %v1091 = vunpack.c.l.b16 %v1059
      %v1092 = vunpack.c.l.b16 %v1060
      %v1093 = vunpack.c.l.b16 %v1061
      %v1094 = vunpack.c.l.b16 %v1062
      %v1095 = vunpack.c.l.b16 %v1063
      %v1096 = vunpack.c.l.b16 %v1064
      %v1097 = vunpack.c.l.b16 %v1065
      %v1098 = vunpack.c.l.b16 %v1066
      %v1099 = vunpack.c.l.b16 %v1067
      %v1100 = vpack.c.b16 %v1085, %v1084
      %v1101 = vpack.c.b16 %v1087, %v1086
      %v1102 = vpack.c.b16 %v1089, %v1088
      %v1103 = vpack.c.b16 %v1091, %v1090
      %v1104 = vpack.c.b16 %v1093, %v1092
      %v1105 = vpack.c.b16 %v1095, %v1094
      %v1106 = vpack.c.b16 %v1097, %v1096
      %v1107 = vpack.c.b16 %v1099, %v1098
      %1116 = vmatpush.bf16.msra.mxu0 %v1107
      %1117 = vmatpush.bf16.msra.mxu0 %v1106
      %1118 = vmatpush.bf16.msra.mxu0 %v1105
      %1119 = vmatpush.bf16.msra.mxu0 %v1104
      %1120 = vmatpush.bf16.msra.mxu0 %v1103
      %1121 = vmatpush.bf16.msra.mxu0 %v1102
      %1122 = vmatpush.bf16.msra.mxu0 %v1101
      %1123 = vmatpush.bf16.msra.mxu0 %v1100
      %1124 = vmatmul.bf16.gmra.mxu0 %v1046
      %v1125 = vpop.f32.mrf.mxu0
      %v1126 = vadd.f32 0.0, %v1125
      %v1127 = vpop.f32.mrf.mxu0
      %1128 = vdwg.mxu0
      %v1129 = vadd.f32 %v1044, %v1126
      %s1130 = scalar_lea.vmem %s6, 448
      %v1131 = vld [vmem:[%s1130] sm:$0xf]
      %v1132 = vld [vmem:[%s1130 + $0x4] sm:$0xf]
      %v1133 = vld [vmem:[%s1130 + $0x8] sm:$0xf]
      %v1134 = vld [vmem:[%s1130 + $0xc] sm:$0xf]
      %v1135 = vld [vmem:[%s1130 + $0x10] sm:$0xf]
      %v1136 = vld [vmem:[%s1130 + $0x14] sm:$0xf]
      %v1137 = vld [vmem:[%s1130 + $0x18] sm:$0xf]
      %v1138 = vld [vmem:[%s1130 + $0x1c] sm:$0xf]
      %v1139 = vld [vmem:[%s1130 + $0x20] sm:$0xf]
      %v1140 = vld [vmem:[%s1130 + $0x24] sm:$0xf]
      %v1141 = vld [vmem:[%s1130 + $0x28] sm:$0xf]
      %v1142 = vld [vmem:[%s1130 + $0x2c] sm:$0xf]
      %v1143 = vld [vmem:[%s1130 + $0x30] sm:$0xf]
      %v1144 = vld [vmem:[%s1130 + $0x34] sm:$0xf]
      %v1145 = vld [vmem:[%s1130 + $0x38] sm:$0xf]
      %v1146 = vld [vmem:[%s1130 + $0x3c] sm:$0xf]
      %v1163 = vunpack.c.l.b16 %v1131
      %v1164 = vunpack.c.l.b16 %v1132
      %v1165 = vunpack.c.l.b16 %v1133
      %v1166 = vunpack.c.l.b16 %v1134
      %v1167 = vunpack.c.l.b16 %v1135
      %v1168 = vunpack.c.l.b16 %v1136
      %v1169 = vunpack.c.l.b16 %v1137
      %v1170 = vunpack.c.l.b16 %v1138
      %v1171 = vunpack.c.l.b16 %v1139
      %v1172 = vunpack.c.l.b16 %v1140
      %v1173 = vunpack.c.l.b16 %v1141
      %v1174 = vunpack.c.l.b16 %v1142
      %v1175 = vunpack.c.l.b16 %v1143
      %v1176 = vunpack.c.l.b16 %v1144
      %v1177 = vunpack.c.l.b16 %v1145
      %v1178 = vunpack.c.l.b16 %v1146
      %v1179 = vpack.c.b16 %v1164, %v1163
      %v1180 = vpack.c.b16 %v1166, %v1165
      %v1181 = vpack.c.b16 %v1168, %v1167
      %v1182 = vpack.c.b16 %v1170, %v1169
      %v1183 = vpack.c.b16 %v1172, %v1171
      %v1184 = vpack.c.b16 %v1174, %v1173
      %v1185 = vpack.c.b16 %v1176, %v1175
      %v1186 = vpack.c.b16 %v1178, %v1177
      %1195 = vmatpush.bf16.msra.mxu0 %v1186
      %1196 = vmatpush.bf16.msra.mxu0 %v1185
      %1197 = vmatpush.bf16.msra.mxu0 %v1184
      %1198 = vmatpush.bf16.msra.mxu0 %v1183
      %1199 = vmatpush.bf16.msra.mxu0 %v1182
      %1200 = vmatpush.bf16.msra.mxu0 %v1181
      %1201 = vmatpush.bf16.msra.mxu0 %v1180
      %1202 = vmatpush.bf16.msra.mxu0 %v1179
      %1203 = vmatmul.bf16.gmra.mxu0 %v1048
      %v1204 = vpop.f32.mrf.mxu0
      %v1205 = vadd.f32 0.0, %v1204
      %v1206 = vpop.f32.mrf.mxu0
      %1207 = vdwg.mxu0
      %v1208 = vadd.f32 %v1129, %v1205
      %s1209 = scalar_lea.vmem %s6, 512
      %v1210 = vld [vmem:[%s1209] sm:$0xf]
      %v1211 = vld [vmem:[%s1209 + $0x4] sm:$0xf]
      %v1212 = vld [vmem:[%s1209 + $0x8] sm:$0xf]
      %v1213 = vld [vmem:[%s1209 + $0xc] sm:$0xf]
      %v1214 = vld [vmem:[%s1209 + $0x10] sm:$0xf]
      %v1215 = vld [vmem:[%s1209 + $0x14] sm:$0xf]
      %v1216 = vld [vmem:[%s1209 + $0x18] sm:$0xf]
      %v1217 = vld [vmem:[%s1209 + $0x1c] sm:$0xf]
      %v1218 = vld [vmem:[%s1209 + $0x20] sm:$0xf]
      %v1219 = vld [vmem:[%s1209 + $0x24] sm:$0xf]
      %v1220 = vld [vmem:[%s1209 + $0x28] sm:$0xf]
      %v1221 = vld [vmem:[%s1209 + $0x2c] sm:$0xf]
      %v1222 = vld [vmem:[%s1209 + $0x30] sm:$0xf]
      %v1223 = vld [vmem:[%s1209 + $0x34] sm:$0xf]
      %v1224 = vld [vmem:[%s1209 + $0x38] sm:$0xf]
      %v1225 = vld [vmem:[%s1209 + $0x3c] sm:$0xf]
      %v1242 = vunpack.c.l.b16 %v1210
      %v1243 = vunpack.c.l.b16 %v1211
      %v1244 = vunpack.c.l.b16 %v1212
      %v1245 = vunpack.c.l.b16 %v1213
      %v1246 = vunpack.c.l.b16 %v1214
      %v1247 = vunpack.c.l.b16 %v1215
      %v1248 = vunpack.c.l.b16 %v1216
      %v1249 = vunpack.c.l.b16 %v1217
      %v1250 = vunpack.c.l.b16 %v1218
      %v1251 = vunpack.c.l.b16 %v1219
      %v1252 = vunpack.c.l.b16 %v1220
      %v1253 = vunpack.c.l.b16 %v1221
      %v1254 = vunpack.c.l.b16 %v1222
      %v1255 = vunpack.c.l.b16 %v1223
      %v1256 = vunpack.c.l.b16 %v1224
      %v1257 = vunpack.c.l.b16 %v1225
      %v1258 = vpack.c.b16 %v1243, %v1242
      %v1259 = vpack.c.b16 %v1245, %v1244
      %v1260 = vpack.c.b16 %v1247, %v1246
      %v1261 = vpack.c.b16 %v1249, %v1248
      %v1262 = vpack.c.b16 %v1251, %v1250
      %v1263 = vpack.c.b16 %v1253, %v1252
      %v1264 = vpack.c.b16 %v1255, %v1254
      %v1265 = vpack.c.b16 %v1257, %v1256
      %1274 = vmatpush.bf16.msra.mxu0 %v1265
      %1275 = vmatpush.bf16.msra.mxu0 %v1264
      %1276 = vmatpush.bf16.msra.mxu0 %v1263
      %1277 = vmatpush.bf16.msra.mxu0 %v1262
      %1278 = vmatpush.bf16.msra.mxu0 %v1261
      %1279 = vmatpush.bf16.msra.mxu0 %v1260
      %1280 = vmatpush.bf16.msra.mxu0 %v1259
      %1281 = vmatpush.bf16.msra.mxu0 %v1258
      %1282 = vmatmul.bf16.gmra.mxu0 %v1050
      %v1283 = vpop.f32.mrf.mxu0
      %v1284 = vadd.f32 0.0, %v1283
      %v1285 = vpop.f32.mrf.mxu0
      %1286 = vdwg.mxu0
      %v1287 = vadd.f32 %v1208, %v1284
      %v1288 = vld [vmem:[%s7] sm:$0x1]
      %v1290 = vperm.slane %v1288, 0
      %v1292 = vadd.f32 %v1287, %v1290
      %v1293 = vmax.f32 %v1292, 0.0
      %1294 = vst [vmem:[%s561] sm:$0xf] %v1293
      %p1295 = scmp.lt.s32.totalorder %s23, 1
      %s1296 = scalar_select %p1295, %s23, 1
      %p1297 = scmp.lt.s32.totalorder %s24, 3
      %s1298 = scalar_select %p1297, %s24, 3
      %s1299 = smul.addr %s1296, 4
      %s1300 = sadd.s32 %s1298, %s1299
      %s1301 = smul.addr %s1300, 4
      %s1302 = scalar_lea.vmem %s8, %s1301
      // Predicated region
      $region53: #{bi_propagate_forward.14} parent=51 // pred_check
        %p1303 = pneg %p281
      $region54: #{bi_propagate_forward.14} parent=51 // pred_check_branch
        %1305 = sbr.rel (%p1303) target = $region56
      $region55: #{bi_propagate_forward.14} parent=51 // pred_region
        _
      $region56: #{bi_propagate_forward.14} parent=51 // pred_fallthru
        _
    $region52: #{bi_propagate_forward.14} parent=5 // pred_fallthru
      _
    %p1306 = scmp.le.s32.totalorder 2, %s14
    // Predicated region
    $region57: #{bi_propagate_forward.14} parent=5 // pred_check
      %p1307 = pneg %p1306
    $region58: #{bi_propagate_forward.14} parent=5 // pred_check_branch
      %1309 = sbr.rel (%p1307) target = $region60
    $region59: #{bi_propagate_forward.14} parent=5 // pred_region
      %s1310 = ssub.s32 %s14, 2
      // Predicated region
      $region61: #{bi_propagate_forward.14} parent=59 // pred_check
        %p1311 = pneg %p287
      $region62: #{bi_propagate_forward.14} parent=59 // pred_check_branch
        %1313 = sbr.rel (%p1311) target = $region64
      $region63: #{bi_propagate_forward.14} parent=59 // pred_region
        %p1314 = scmp.lt.s32.totalorder %s25, 1
        %s1315 = scalar_select %p1314, %s25, 1
        %p1316 = scmp.lt.s32.totalorder %s26, 3
        %s1317 = scalar_select %p1316, %s26, 3
        %s1318 = smul.addr %s1315, 4
        %s1319 = sadd.s32 %s1317, %s1318
        %s1320 = smul.addr %s1319, 4
        %s1321 = scalar_lea.vmem %s8, %s1320
      $region64: #{bi_propagate_forward.14} parent=59 // pred_fallthru
        _
    $region60: #{bi_propagate_forward.14} parent=5 // pred_fallthru
      _
  $region6: #{bi_propagate_forward.14} parent=0 // loop_footer
    %s18 = sadd.s32 1, %s14
  $region7: #{bi_propagate_forward.14} parent=0 // loop_footer_branch
    %13 = sbr.rel target = $region3
  $region8: #{bi_propagate_forward.14} parent=0 // loop_exit
    _

</llo_original>
